<compile_context>
chip_gen: v7x
topology: tpu7x:2x2x1
jax: 0.10.0
libtpu: 0.0.40
codegen_flags: <defaults>
</compile_context>

<pallas_src>
import jax
import jax.numpy as jnp
from jax import lax
from jax.experimental import pallas as pl
from jax.experimental.pallas import tpu as pltpu
import numpy as np

BERT_DIM = 768
SUBLANE = 8


# ----------------------------- fused Pallas kernel ---------------------------

def make_fused_kernel(T, Bp, H, num_layers):
    """Whole BGRU_BERT_cat forward in one kernel body (closure over sizes)."""
    H2, H4 = 2 * H, 4 * H

    def kernel(*refs):
        it = iter(refs)
        x_ref = next(it)                    # (T*Bp, Din) f32, time-major
        bert_ref = next(it)                 # (Bp, 768)   f32
        layers = [tuple(next(it) for _ in range(5)) for _ in range(num_layers)]
        w1_ref, b1_ref = next(it), next(it)              # (2H,256) bf16, (1,256) f32
        cw1b_ref, cw1g_ref, cb1_ref = next(it), next(it), next(it)
        cw2_ref, cb2_ref = next(it), next(it)
        cw3_ref, cb3_ref = next(it), next(it)
        out_ref = next(it)                  # (Bp, 4) f32
        fseq_ref, bseq_ref = next(it), next(it)          # VMEM scratch (T*Bp, H)

        x_bf = x_ref[...].astype(jnp.bfloat16)

        pooled = None
        for layer in range(num_layers):
            wA_ref, wB_ref, whh_ref, bias_ref, bhn_ref = layers[layer]
            whh = whh_ref[...]                                   # (2H, 6H) bf16
            bias = bias_ref[...]                                 # (1, 6H)  f32
            bhn = jnp.broadcast_to(bhn_ref[...], (Bp, H2))       # hoisted broadcast

            # Hoisted input-to-hidden projections (off the serial chain).
            # giA: fwd weights in fwd gate columns, zeros elsewhere (+ all biases)
            # giB: bwd weights in bwd gate columns, zeros elsewhere
            if layer == 0:
                giA = jnp.dot(x_bf, wA_ref[...],
                              preferred_element_type=jnp.float32) + bias
                giB = jnp.dot(x_bf, wB_ref[...],
                              preferred_element_type=jnp.float32)
            else:
                fseq = fseq_ref[...].astype(jnp.bfloat16)        # (T*Bp, H)
                bseq = bseq_ref[...].astype(jnp.bfloat16)
                wA = wA_ref[...]
                wB = wB_ref[...]
                giA = (jnp.dot(fseq, wA[:H, :], preferred_element_type=jnp.float32)
                       + jnp.dot(bseq, wA[H:, :], preferred_element_type=jnp.float32)
                       + bias)
                giB = (jnp.dot(fseq, wB[:H, :], preferred_element_type=jnp.float32)
                       + jnp.dot(bseq, wB[H:, :], preferred_element_type=jnp.float32))

            last = (layer + 1 == num_layers)
            h = jnp.zeros((Bp, H2), jnp.float32)   # combined state [h_fwd | h_bwd]

            # Fully unrolled time loop (T static). Fwd handles time i, bwd
            # handles time T-1-i; a single block-diagonal dot drives both.
            for i in range(T):
                j = T - 1 - i
                gi = giA[i * Bp:(i + 1) * Bp, :] + giB[j * Bp:(j + 1) * Bp, :]
                gh = jnp.dot(h.astype(jnp.bfloat16), whh,
                             preferred_element_type=jnp.float32)   # (Bp, 6H)
                rz = jax.nn.sigmoid(gi[:, :H4] + gh[:, :H4])       # one 128-lane sigmoid
                r = rz[:, :H2]
                z = rz[:, H2:]
                n = jnp.tanh(gi[:, H4:] + r * (gh[:, H4:] + bhn))
                h = z * (h - n) + n                                 # (1-z)*n + z*h
                if last:
                    pooled = h if i == 0 else jnp.maximum(pooled, h)
                else:
                    fseq_ref[pl.ds(i * Bp, Bp), :] = h[:, :H]
                    bseq_ref[pl.ds(j * Bp, Bp), :] = h[:, H:]

        # Head: max over time (running max above) -> tanh -> Linear(2H, 256).
        gru_feat = (jnp.dot(jnp.tanh(pooled).astype(jnp.bfloat16), w1_ref[...],
                            preferred_element_type=jnp.float32) + b1_ref[...])

        # concat([BERT, GRU]) @ W1 realized as a row-split of W1 (no in-kernel concat)
        h1 = (jnp.dot(bert_ref[...].astype(jnp.bfloat16), cw1b_ref[...],
                      preferred_element_type=jnp.float32)
              + jnp.dot(gru_feat.astype(jnp.bfloat16), cw1g_ref[...],
                        preferred_element_type=jnp.float32)
              + cb1_ref[...])
        h2 = (jnp.dot(h1.astype(jnp.bfloat16), cw2_ref[...],
                      preferred_element_type=jnp.float32) + cb2_ref[...])
        out_ref[...] = (jnp.dot(h2.astype(jnp.bfloat16), cw3_ref[...],
                                preferred_element_type=jnp.float32) + cb3_ref[...])

    return kernel


# ------------------------------ wrapper ---------------------------------------

def _full_spec(shape):
    rank = len(shape)
    return pl.BlockSpec(shape, lambda i, _r=rank: (0,) * _r)


def _prep_gru_layer(layer, H):
    """Build fused bf16 weights with column layout [r_f r_b z_f z_b n_f n_b]."""
    wf, uf, bif, bhf = layer["fwd"]    # (Din,3H), (H,3H), (1,3H), (1,3H)
    wb, ub, bib, bhb = layer["bwd"]

    def mix_f(a):   # fwd [r|z|n] into fwd gate columns, zeros in bwd columns
        z = jnp.zeros_like(a[:, :H])
        return jnp.concatenate(
            [a[:, :H], z, a[:, H:2 * H], z, a[:, 2 * H:], z], axis=1)

    def mix_b(a):   # bwd [r|z|n] into bwd gate columns, zeros in fwd columns
        z = jnp.zeros_like(a[:, :H])
        return jnp.concatenate(
            [z, a[:, :H], z, a[:, H:2 * H], z, a[:, 2 * H:]], axis=1)

    wihA = mix_f(wf).astype(jnp.bfloat16)                         # (Din, 6H)
    wihB = mix_b(wb).astype(jnp.bfloat16)                         # (Din, 6H)
    whh = jnp.concatenate([mix_f(uf), mix_b(ub)],
                          axis=0).astype(jnp.bfloat16)            # (2H, 6H) block-diag
    bias_ih = mix_f(bif) + mix_b(bib)                             # (1, 6H)
    bias_hh = mix_f(bhf) + mix_b(bhb)
    # Fold r/z parts of b_hh into b_ih; only the n-gate b_hn stays inside r*(gh_n+b_hn).
    bias = bias_ih.at[:, :4 * H].add(bias_hh[:, :4 * H])
    bhn = bias_hh[:, 4 * H:]                                      # (1, 2H)
    return [wihA, wihB, whh, bias, bhn]


def bgru_bert_cat_forward(x, bert_pooler_out, params):
    """x: (B, T, input_size) float32; bert_pooler_out: (B, 768) float32."""
    B, T, Din = x.shape
    num_layers = len(params["gru_layers"])
    H = params["gru_layers"][0]["fwd"][1].shape[0]
    Bp = max(SUBLANE, ((B + SUBLANE - 1) // SUBLANE) * SUBLANE)

    # eval-mode dropout == identity; time-major, batch padded to sublane count
    x_t = jnp.transpose(x, (1, 0, 2))                             # (T, B, Din)
    x_t = jnp.pad(x_t, ((0, 0), (0, Bp - B), (0, 0)))
    x2d = x_t.reshape(T * Bp, Din)
    bert_p = jnp.pad(bert_pooler_out, ((0, Bp - B), (0, 0)))

    flat_inputs = [x2d, bert_p]
    for layer in params["gru_layers"]:
        flat_inputs += _prep_gru_layer(layer, H)

    w1t, b1 = params["linear1"]
    flat_inputs += [w1t.astype(jnp.bfloat16), b1]

    cw1, cb1, cw2, cb2, cw3, cb3 = params["cls"]
    flat_inputs += [cw1[:BERT_DIM].astype(jnp.bfloat16),          # rows for BERT feat
                    cw1[BERT_DIM:].astype(jnp.bfloat16),          # rows for GRU feat
                    cb1,
                    cw2.astype(jnp.bfloat16), cb2,
                    cw3.astype(jnp.bfloat16), cb3]

    kernel = make_fused_kernel(T, Bp, H, num_layers)
    out = pl.pallas_call(
        kernel,
        out_shape=jax.ShapeDtypeStruct((Bp, 4), jnp.float32),
        grid=(1,),
        in_specs=[_full_spec(a.shape) for a in flat_inputs],
        out_specs=_full_spec((Bp, 4)),
        scratch_shapes=[pltpu.VMEM((T * Bp, H), jnp.float32),     # fwd sequence
                        pltpu.VMEM((T * Bp, H), jnp.float32)],    # bwd sequence
        compiler_params=pltpu.CompilerParams(
            dimension_semantics=("arbitrary",)),
    )(*flat_inputs)
    return out[:B]


# --------------------------- parameter init ---------------------------------

def init_params(key, input_size, hidden_dim, num_layers):
    keys = list(jax.random.split(key, 128))
    kit = iter(keys)

    def uni(shape, scale):
        return jax.random.uniform(next(kit), shape, jnp.float32, -scale, scale)

    params = {}
    gru_layers = []
    k = 1.0 / np.sqrt(hidden_dim)
    for layer in range(num_layers):
        din = input_size if layer == 0 else 2 * hidden_dim
        ldict = {}
        for d in ("fwd", "bwd"):
            ldict[d] = (
                uni((din, 3 * hidden_dim), k),            # W_ih^T  (gates r,z,n)
                uni((hidden_dim, 3 * hidden_dim), k),     # W_hh^T
                uni((1, 3 * hidden_dim), k),              # b_ih
                uni((1, 3 * hidden_dim), k),              # b_hh
            )
        gru_layers.append(ldict)
    params["gru_layers"] = gru_layers

    k1 = 1.0 / np.sqrt(2 * hidden_dim)
    params["linear1"] = (uni((2 * hidden_dim, 256), k1), uni((1, 256), k1))

    kc1, kc2, kc3 = 1.0 / np.sqrt(1024), 1.0 / np.sqrt(512), 1.0 / np.sqrt(256)
    params["cls"] = (
        uni((1024, 512), kc1), uni((1, 512), kc1),
        uni((512, 256), kc2), uni((1, 256), kc2),
        uni((256, 4), kc3), uni((1, 4), kc3),
    )
    return params


# --------------------------- pure-JAX reference ------------------------------

_P = lax.Precision.HIGHEST


def _ref_gru_dir(x_tbd, wih_t, whh_t, bih, bhh):
    H = whh_t.shape[0]

    def step(h, x_t):
        gi = jnp.dot(x_t, wih_t, precision=_P) + bih
        gh = jnp.dot(h, whh_t, precision=_P) + bhh
        r = jax.nn.sigmoid(gi[:, :H] + gh[:, :H])
        z = jax.nn.sigmoid(gi[:, H:2 * H] + gh[:, H:2 * H])
        n = jnp.tanh(gi[:, 2 * H:] + r * gh[:, 2 * H:])
        h_new = (1.0 - z) * n + z * h
        return h_new, h_new

    h0 = jnp.zeros((x_tbd.shape[1], H), jnp.float32)
    _, ys = lax.scan(step, h0, x_tbd)
    return ys


def reference_forward(x, bert_pooler_out, params):
    h = jnp.transpose(x, (1, 0, 2))
    for layer in params["gru_layers"]:
        fwd = _ref_gru_dir(h, *layer["fwd"])
        bwd = _ref_gru_dir(h[::-1], *layer["bwd"])[::-1]
        h = jnp.concatenate([fwd, bwd], axis=-1)
    w1t, b1 = params["linear1"]
    gru_feat = jnp.dot(jnp.tanh(jnp.max(h, axis=0)), w1t, precision=_P) + b1
    feat = jnp.concatenate([bert_pooler_out, gru_feat], axis=1)
    w1, bb1, w2, bb2, w3, bb3 = params["cls"]
    h1 = jnp.dot(feat, w1, precision=_P) + bb1
    h2 = jnp.dot(h1, w2, precision=_P) + bb2
    return jnp.dot(h2, w3, precision=_P) + bb3


# ------------------------------- main ----------------------------------------

if __name__ == "__main__":
    B = 2          # args.batch_size
    T = 8          # dialogue sequence length
    INPUT_SIZE = 32
    HIDDEN = 32    # args.hidden_layer == hidden_size
    NUM_LAYERS = 2 # args.dia_layers

    root = jax.random.PRNGKey(0)
    k_x, k_bert, k_par = jax.random.split(root, 3)

    x = jax.random.normal(k_x, (B, T, INPUT_SIZE), jnp.float32)
    # TODO(synk): pretrained BertModel pooler_output has no Pallas equivalent;
    # a deterministic synthetic (B, 768) placeholder is used instead.
    bert_pooler = jax.random.normal(k_bert, (B, BERT_DIM), jnp.float32)

    params = init_params(k_par, INPUT_SIZE, HIDDEN, NUM_LAYERS)

    out = bgru_bert_cat_forward(x, bert_pooler, params)
    out = jax.block_until_ready(out)
    assert out.shape == (B, 4) and out.dtype == jnp.float32

    ref = jax.block_until_ready(reference_forward(x, bert_pooler, params))
    np.testing.assert_allclose(np.asarray(out), np.asarray(ref),
                               rtol=2e-2, atol=2e-2)

    print("KERNEL_OK")
</pallas_src>

<mosaic_0001>
module attributes {stable_mosaic.version = 11 : i64} {
  func.func @kernel(%arg0: i32, %arg1: memref<64x32xf32, #tpu.memory_space<vmem>>, %arg2: memref<8x768xf32, #tpu.memory_space<vmem>>, %arg3: memref<32x192xbf16, #tpu.memory_space<vmem>>, %arg4: memref<32x192xbf16, #tpu.memory_space<vmem>>, %arg5: memref<64x192xbf16, #tpu.memory_space<vmem>>, %arg6: memref<1x192xf32, #tpu.memory_space<vmem>>, %arg7: memref<1x64xf32, #tpu.memory_space<vmem>>, %arg8: memref<64x192xbf16, #tpu.memory_space<vmem>>, %arg9: memref<64x192xbf16, #tpu.memory_space<vmem>>, %arg10: memref<64x192xbf16, #tpu.memory_space<vmem>>, %arg11: memref<1x192xf32, #tpu.memory_space<vmem>>, %arg12: memref<1x64xf32, #tpu.memory_space<vmem>>, %arg13: memref<64x256xbf16, #tpu.memory_space<vmem>>, %arg14: memref<1x256xf32, #tpu.memory_space<vmem>>, %arg15: memref<768x512xbf16, #tpu.memory_space<vmem>>, %arg16: memref<256x512xbf16, #tpu.memory_space<vmem>>, %arg17: memref<1x512xf32, #tpu.memory_space<vmem>>, %arg18: memref<512x256xbf16, #tpu.memory_space<vmem>>, %arg19: memref<1x256xf32, #tpu.memory_space<vmem>>, %arg20: memref<256x4xbf16, #tpu.memory_space<vmem>>, %arg21: memref<1x4xf32, #tpu.memory_space<vmem>>, %arg22: memref<8x4xf32, #tpu.memory_space<vmem>>, %arg23: memref<64x32xf32, #tpu.memory_space<vmem>>, %arg24: memref<64x32xf32, #tpu.memory_space<vmem>>) attributes {dimension_semantics = [#tpu.dimension_semantics<arbitrary>], iteration_bounds = array<i64: 1>, scalar_prefetch = 0 : i64, scratch_operands = 2 : i64, tpu.core_type = #tpu.core_type<tc>, window_params = [{pipeline_mode = #tpu.pipeline_mode<synchronous>, transform_indices = @transform_0, window_bounds = array<i64: 64, 32>}, {pipeline_mode = #tpu.pipeline_mode<synchronous>, transform_indices = @transform_1, window_bounds = array<i64: 8, 768>}, {pipeline_mode = #tpu.pipeline_mode<synchronous>, transform_indices = @transform_2, window_bounds = array<i64: 32, 192>}, {pipeline_mode = #tpu.pipeline_mode<synchronous>, transform_indices = @transform_3, window_bounds = array<i64: 32, 192>}, {pipeline_mode = #tpu.pipeline_mode<synchronous>, transform_indices = @transform_4, window_bounds = array<i64: 64, 192>}, {pipeline_mode = #tpu.pipeline_mode<synchronous>, transform_indices = @transform_5, window_bounds = array<i64: 1, 192>}, {pipeline_mode = #tpu.pipeline_mode<synchronous>, transform_indices = @transform_6, window_bounds = array<i64: 1, 64>}, {pipeline_mode = #tpu.pipeline_mode<synchronous>, transform_indices = @transform_7, window_bounds = array<i64: 64, 192>}, {pipeline_mode = #tpu.pipeline_mode<synchronous>, transform_indices = @transform_8, window_bounds = array<i64: 64, 192>}, {pipeline_mode = #tpu.pipeline_mode<synchronous>, transform_indices = @transform_9, window_bounds = array<i64: 64, 192>}, {pipeline_mode = #tpu.pipeline_mode<synchronous>, transform_indices = @transform_10, window_bounds = array<i64: 1, 192>}, {pipeline_mode = #tpu.pipeline_mode<synchronous>, transform_indices = @transform_11, window_bounds = array<i64: 1, 64>}, {pipeline_mode = #tpu.pipeline_mode<synchronous>, transform_indices = @transform_12, window_bounds = array<i64: 64, 256>}, {pipeline_mode = #tpu.pipeline_mode<synchronous>, transform_indices = @transform_13, window_bounds = array<i64: 1, 256>}, {pipeline_mode = #tpu.pipeline_mode<synchronous>, transform_indices = @transform_14, window_bounds = array<i64: 768, 512>}, {pipeline_mode = #tpu.pipeline_mode<synchronous>, transform_indices = @transform_15, window_bounds = array<i64: 256, 512>}, {pipeline_mode = #tpu.pipeline_mode<synchronous>, transform_indices = @transform_16, window_bounds = array<i64: 1, 512>}, {pipeline_mode = #tpu.pipeline_mode<synchronous>, transform_indices = @transform_17, window_bounds = array<i64: 512, 256>}, {pipeline_mode = #tpu.pipeline_mode<synchronous>, transform_indices = @transform_18, window_bounds = array<i64: 1, 256>}, {pipeline_mode = #tpu.pipeline_mode<synchronous>, transform_indices = @transform_19, window_bounds = array<i64: 256, 4>}, {pipeline_mode = #tpu.pipeline_mode<synchronous>, transform_indices = @transform_20, window_bounds = array<i64: 1, 4>}, {pipeline_mode = #tpu.pipeline_mode<synchronous>, transform_indices = @transform_21, window_bounds = array<i64: 8, 4>}]} {
    %c0 = arith.constant 0 : index
    %c0_0 = arith.constant 0 : index
    %0 = vector.load %arg1[%c0, %c0_0] : memref<64x32xf32, #tpu.memory_space<vmem>>, vector<64x32xf32>
    %1 = arith.truncf %0 : vector<64x32xf32> to vector<64x32xbf16>
    %c0_1 = arith.constant 0 : index
    %c0_2 = arith.constant 0 : index
    %2 = vector.load %arg5[%c0_1, %c0_2] : memref<64x192xbf16, #tpu.memory_space<vmem>>, vector<64x192xbf16>
    %c0_3 = arith.constant 0 : index
    %c0_4 = arith.constant 0 : index
    %3 = vector.load %arg6[%c0_3, %c0_4] : memref<1x192xf32, #tpu.memory_space<vmem>>, vector<1x192xf32>
    %c0_5 = arith.constant 0 : index
    %c0_6 = arith.constant 0 : index
    %4 = vector.load %arg7[%c0_5, %c0_6] : memref<1x64xf32, #tpu.memory_space<vmem>>, vector<1x64xf32>
    %5 = vector.shape_cast %4 : vector<1x64xf32> to vector<1x64xf32>
    %6 = vector.broadcast %5 : vector<1x64xf32> to vector<8x64xf32>
    %c0_7 = arith.constant 0 : index
    %c0_8 = arith.constant 0 : index
    %7 = vector.load %arg3[%c0_7, %c0_8] : memref<32x192xbf16, #tpu.memory_space<vmem>>, vector<32x192xbf16>
    %cst = arith.constant dense<0.000000e+00> : vector<64x192xf32>
    %8 = tpu.matmul %1, %7, %cst {dimension_numbers = #tpu.dot_dimension_numbers<[1], [0], [0], [1], [0, 0, 1, 1], [], []>} : vector<64x32xbf16>, vector<32x192xbf16>, vector<64x192xf32> -> vector<64x192xf32>
    %9 = vector.broadcast %3 : vector<1x192xf32> to vector<64x192xf32>
    %10 = arith.addf %8, %9 : vector<64x192xf32>
    %c0_9 = arith.constant 0 : index
    %c0_10 = arith.constant 0 : index
    %11 = vector.load %arg4[%c0_9, %c0_10] : memref<32x192xbf16, #tpu.memory_space<vmem>>, vector<32x192xbf16>
    %cst_11 = arith.constant dense<0.000000e+00> : vector<64x192xf32>
    %12 = tpu.matmul %1, %11, %cst_11 {dimension_numbers = #tpu.dot_dimension_numbers<[1], [0], [0], [1], [0, 0, 1, 1], [], []>} : vector<64x32xbf16>, vector<32x192xbf16>, vector<64x192xf32> -> vector<64x192xf32>
    %cst_12 = arith.constant 0.000000e+00 : f32
    %13 = vector.broadcast %cst_12 : f32 to vector<8x64xf32>
    %14 = vector.extract_strided_slice %10 {offsets = [0, 0], sizes = [8, 192], strides = [1, 1]} : vector<64x192xf32> to vector<8x192xf32>
    %15 = vector.extract_strided_slice %12 {offsets = [56, 0], sizes = [8, 192], strides = [1, 1]} : vector<64x192xf32> to vector<8x192xf32>
    %16 = arith.addf %14, %15 : vector<8x192xf32>
    %17 = arith.truncf %13 : vector<8x64xf32> to vector<8x64xbf16>
    %cst_13 = arith.constant dense<0.000000e+00> : vector<8x192xf32>
    %18 = tpu.matmul %17, %2, %cst_13 {dimension_numbers = #tpu.dot_dimension_numbers<[1], [0], [0], [1], [0, 0, 1, 1], [], []>} : vector<8x64xbf16>, vector<64x192xbf16>, vector<8x192xf32> -> vector<8x192xf32>
    %19 = vector.extract_strided_slice %16 {offsets = [0, 0], sizes = [8, 128], strides = [1, 1]} : vector<8x192xf32> to vector<8x128xf32>
    %20 = vector.extract_strided_slice %18 {offsets = [0, 0], sizes = [8, 128], strides = [1, 1]} : vector<8x192xf32> to vector<8x128xf32>
    %21 = arith.addf %19, %20 : vector<8x128xf32>
    %22 = arith.negf %21 : vector<8x128xf32>
    %23 = math.exp %22 : vector<8x128xf32>
    %cst_14 = arith.constant 1.000000e+00 : f32
    %24 = vector.broadcast %cst_14 : f32 to vector<8x128xf32>
    %25 = arith.addf %24, %23 : vector<8x128xf32>
    %26 = arith.divf %24, %25 : vector<8x128xf32>
    %27 = vector.extract_strided_slice %26 {offsets = [0, 0], sizes = [8, 64], strides = [1, 1]} : vector<8x128xf32> to vector<8x64xf32>
    %28 = vector.extract_strided_slice %26 {offsets = [0, 64], sizes = [8, 64], strides = [1, 1]} : vector<8x128xf32> to vector<8x64xf32>
    %29 = vector.extract_strided_slice %16 {offsets = [0, 128], sizes = [8, 64], strides = [1, 1]} : vector<8x192xf32> to vector<8x64xf32>
    %30 = vector.extract_strided_slice %18 {offsets = [0, 128], sizes = [8, 64], strides = [1, 1]} : vector<8x192xf32> to vector<8x64xf32>
    %31 = arith.addf %30, %6 : vector<8x64xf32>
    %32 = arith.mulf %27, %31 : vector<8x64xf32>
    %33 = arith.addf %29, %32 : vector<8x64xf32>
    %34 = math.tanh %33 : vector<8x64xf32>
    %35 = arith.subf %13, %34 : vector<8x64xf32>
    %36 = arith.mulf %28, %35 : vector<8x64xf32>
    %37 = arith.addf %36, %34 : vector<8x64xf32>
    %38 = vector.extract_strided_slice %37 {offsets = [0, 0], sizes = [8, 32], strides = [1, 1]} : vector<8x64xf32> to vector<8x32xf32>
    %c0_15 = arith.constant 0 : index
    %c0_16 = arith.constant 0 : index
    %39 = vector.load %arg23[%c0_15, %c0_16] : memref<64x32xf32, #tpu.memory_space<vmem>>, vector<8x32xf32>
    tpu.vector_store %arg23[%c0_15, %c0_16], %38 {strides = array<i32>} : memref<64x32xf32, #tpu.memory_space<vmem>>, vector<8x32xf32>,
    %40 = vector.extract_strided_slice %37 {offsets = [0, 32], sizes = [8, 32], strides = [1, 1]} : vector<8x64xf32> to vector<8x32xf32>
    %c56 = arith.constant 56 : index
    %c0_17 = arith.constant 0 : index
    %41 = vector.load %arg24[%c56, %c0_17] : memref<64x32xf32, #tpu.memory_space<vmem>>, vector<8x32xf32>
    tpu.vector_store %arg24[%c56, %c0_17], %40 {strides = array<i32>} : memref<64x32xf32, #tpu.memory_space<vmem>>, vector<8x32xf32>,
    %42 = vector.extract_strided_slice %10 {offsets = [8, 0], sizes = [8, 192], strides = [1, 1]} : vector<64x192xf32> to vector<8x192xf32>
    %43 = vector.extract_strided_slice %12 {offsets = [48, 0], sizes = [8, 192], strides = [1, 1]} : vector<64x192xf32> to vector<8x192xf32>
    %44 = arith.addf %42, %43 : vector<8x192xf32>
    %45 = arith.truncf %37 : vector<8x64xf32> to vector<8x64xbf16>
    %cst_18 = arith.constant dense<0.000000e+00> : vector<8x192xf32>
    %46 = tpu.matmul %45, %2, %cst_18 {dimension_numbers = #tpu.dot_dimension_numbers<[1], [0], [0], [1], [0, 0, 1, 1], [], []>} : vector<8x64xbf16>, vector<64x192xbf16>, vector<8x192xf32> -> vector<8x192xf32>
    %47 = vector.extract_strided_slice %44 {offsets = [0, 0], sizes = [8, 128], strides = [1, 1]} : vector<8x192xf32> to vector<8x128xf32>
    %48 = vector.extract_strided_slice %46 {offsets = [0, 0], sizes = [8, 128], strides = [1, 1]} : vector<8x192xf32> to vector<8x128xf32>
    %49 = arith.addf %47, %48 : vector<8x128xf32>
    %50 = arith.negf %49 : vector<8x128xf32>
    %51 = math.exp %50 : vector<8x128xf32>
    %cst_19 = arith.constant 1.000000e+00 : f32
    %52 = vector.broadcast %cst_19 : f32 to vector<8x128xf32>
    %53 = arith.addf %52, %51 : vector<8x128xf32>
    %54 = arith.divf %52, %53 : vector<8x128xf32>
    %55 = vector.extract_strided_slice %54 {offsets = [0, 0], sizes = [8, 64], strides = [1, 1]} : vector<8x128xf32> to vector<8x64xf32>
    %56 = vector.extract_strided_slice %54 {offsets = [0, 64], sizes = [8, 64], strides = [1, 1]} : vector<8x128xf32> to vector<8x64xf32>
    %57 = vector.extract_strided_slice %44 {offsets = [0, 128], sizes = [8, 64], strides = [1, 1]} : vector<8x192xf32> to vector<8x64xf32>
    %58 = vector.extract_strided_slice %46 {offsets = [0, 128], sizes = [8, 64], strides = [1, 1]} : vector<8x192xf32> to vector<8x64xf32>
    %59 = arith.addf %58, %6 : vector<8x64xf32>
    %60 = arith.mulf %55, %59 : vector<8x64xf32>
    %61 = arith.addf %57, %60 : vector<8x64xf32>
    %62 = math.tanh %61 : vector<8x64xf32>
    %63 = arith.subf %37, %62 : vector<8x64xf32>
    %64 = arith.mulf %56, %63 : vector<8x64xf32>
    %65 = arith.addf %64, %62 : vector<8x64xf32>
    %66 = vector.extract_strided_slice %65 {offsets = [0, 0], sizes = [8, 32], strides = [1, 1]} : vector<8x64xf32> to vector<8x32xf32>
    %c8 = arith.constant 8 : index
    %c0_20 = arith.constant 0 : index
    %67 = vector.load %arg23[%c8, %c0_20] : memref<64x32xf32, #tpu.memory_space<vmem>>, vector<8x32xf32>
    tpu.vector_store %arg23[%c8, %c0_20], %66 {strides = array<i32>} : memref<64x32xf32, #tpu.memory_space<vmem>>, vector<8x32xf32>,
    %68 = vector.extract_strided_slice %65 {offsets = [0, 32], sizes = [8, 32], strides = [1, 1]} : vector<8x64xf32> to vector<8x32xf32>
    %c48 = arith.constant 48 : index
    %c0_21 = arith.constant 0 : index
    %69 = vector.load %arg24[%c48, %c0_21] : memref<64x32xf32, #tpu.memory_space<vmem>>, vector<8x32xf32>
    tpu.vector_store %arg24[%c48, %c0_21], %68 {strides = array<i32>} : memref<64x32xf32, #tpu.memory_space<vmem>>, vector<8x32xf32>,
    %70 = vector.extract_strided_slice %10 {offsets = [16, 0], sizes = [8, 192], strides = [1, 1]} : vector<64x192xf32> to vector<8x192xf32>
    %71 = vector.extract_strided_slice %12 {offsets = [40, 0], sizes = [8, 192], strides = [1, 1]} : vector<64x192xf32> to vector<8x192xf32>
    %72 = arith.addf %70, %71 : vector<8x192xf32>
    %73 = arith.truncf %65 : vector<8x64xf32> to vector<8x64xbf16>
    %cst_22 = arith.constant dense<0.000000e+00> : vector<8x192xf32>
    %74 = tpu.matmul %73, %2, %cst_22 {dimension_numbers = #tpu.dot_dimension_numbers<[1], [0], [0], [1], [0, 0, 1, 1], [], []>} : vector<8x64xbf16>, vector<64x192xbf16>, vector<8x192xf32> -> vector<8x192xf32>
    %75 = vector.extract_strided_slice %72 {offsets = [0, 0], sizes = [8, 128], strides = [1, 1]} : vector<8x192xf32> to vector<8x128xf32>
    %76 = vector.extract_strided_slice %74 {offsets = [0, 0], sizes = [8, 128], strides = [1, 1]} : vector<8x192xf32> to vector<8x128xf32>
    %77 = arith.addf %75, %76 : vector<8x128xf32>
    %78 = arith.negf %77 : vector<8x128xf32>
    %79 = math.exp %78 : vector<8x128xf32>
    %cst_23 = arith.constant 1.000000e+00 : f32
    %80 = vector.broadcast %cst_23 : f32 to vector<8x128xf32>
    %81 = arith.addf %80, %79 : vector<8x128xf32>
    %82 = arith.divf %80, %81 : vector<8x128xf32>
    %83 = vector.extract_strided_slice %82 {offsets = [0, 0], sizes = [8, 64], strides = [1, 1]} : vector<8x128xf32> to vector<8x64xf32>
    %84 = vector.extract_strided_slice %82 {offsets = [0, 64], sizes = [8, 64], strides = [1, 1]} : vector<8x128xf32> to vector<8x64xf32>
    %85 = vector.extract_strided_slice %72 {offsets = [0, 128], sizes = [8, 64], strides = [1, 1]} : vector<8x192xf32> to vector<8x64xf32>
    %86 = vector.extract_strided_slice %74 {offsets = [0, 128], sizes = [8, 64], strides = [1, 1]} : vector<8x192xf32> to vector<8x64xf32>
    %87 = arith.addf %86, %6 : vector<8x64xf32>
    %88 = arith.mulf %83, %87 : vector<8x64xf32>
    %89 = arith.addf %85, %88 : vector<8x64xf32>
    %90 = math.tanh %89 : vector<8x64xf32>
    %91 = arith.subf %65, %90 : vector<8x64xf32>
    %92 = arith.mulf %84, %91 : vector<8x64xf32>
    %93 = arith.addf %92, %90 : vector<8x64xf32>
    %94 = vector.extract_strided_slice %93 {offsets = [0, 0], sizes = [8, 32], strides = [1, 1]} : vector<8x64xf32> to vector<8x32xf32>
    %c16 = arith.constant 16 : index
    %c0_24 = arith.constant 0 : index
    %95 = vector.load %arg23[%c16, %c0_24] : memref<64x32xf32, #tpu.memory_space<vmem>>, vector<8x32xf32>
    tpu.vector_store %arg23[%c16, %c0_24], %94 {strides = array<i32>} : memref<64x32xf32, #tpu.memory_space<vmem>>, vector<8x32xf32>,
    %96 = vector.extract_strided_slice %93 {offsets = [0, 32], sizes = [8, 32], strides = [1, 1]} : vector<8x64xf32> to vector<8x32xf32>
    %c40 = arith.constant 40 : index
    %c0_25 = arith.constant 0 : index
    %97 = vector.load %arg24[%c40, %c0_25] : memref<64x32xf32, #tpu.memory_space<vmem>>, vector<8x32xf32>
    tpu.vector_store %arg24[%c40, %c0_25], %96 {strides = array<i32>} : memref<64x32xf32, #tpu.memory_space<vmem>>, vector<8x32xf32>,
    %98 = vector.extract_strided_slice %10 {offsets = [24, 0], sizes = [8, 192], strides = [1, 1]} : vector<64x192xf32> to vector<8x192xf32>
    %99 = vector.extract_strided_slice %12 {offsets = [32, 0], sizes = [8, 192], strides = [1, 1]} : vector<64x192xf32> to vector<8x192xf32>
    %100 = arith.addf %98, %99 : vector<8x192xf32>
    %101 = arith.truncf %93 : vector<8x64xf32> to vector<8x64xbf16>
    %cst_26 = arith.constant dense<0.000000e+00> : vector<8x192xf32>
    %102 = tpu.matmul %101, %2, %cst_26 {dimension_numbers = #tpu.dot_dimension_numbers<[1], [0], [0], [1], [0, 0, 1, 1], [], []>} : vector<8x64xbf16>, vector<64x192xbf16>, vector<8x192xf32> -> vector<8x192xf32>
    %103 = vector.extract_strided_slice %100 {offsets = [0, 0], sizes = [8, 128], strides = [1, 1]} : vector<8x192xf32> to vector<8x128xf32>
    %104 = vector.extract_strided_slice %102 {offsets = [0, 0], sizes = [8, 128], strides = [1, 1]} : vector<8x192xf32> to vector<8x128xf32>
    %105 = arith.addf %103, %104 : vector<8x128xf32>
    %106 = arith.negf %105 : vector<8x128xf32>
    %107 = math.exp %106 : vector<8x128xf32>
    %cst_27 = arith.constant 1.000000e+00 : f32
    %108 = vector.broadcast %cst_27 : f32 to vector<8x128xf32>
    %109 = arith.addf %108, %107 : vector<8x128xf32>
    %110 = arith.divf %108, %109 : vector<8x128xf32>
    %111 = vector.extract_strided_slice %110 {offsets = [0, 0], sizes = [8, 64], strides = [1, 1]} : vector<8x128xf32> to vector<8x64xf32>
    %112 = vector.extract_strided_slice %110 {offsets = [0, 64], sizes = [8, 64], strides = [1, 1]} : vector<8x128xf32> to vector<8x64xf32>
    %113 = vector.extract_strided_slice %100 {offsets = [0, 128], sizes = [8, 64], strides = [1, 1]} : vector<8x192xf32> to vector<8x64xf32>
    %114 = vector.extract_strided_slice %102 {offsets = [0, 128], sizes = [8, 64], strides = [1, 1]} : vector<8x192xf32> to vector<8x64xf32>
    %115 = arith.addf %114, %6 : vector<8x64xf32>
    %116 = arith.mulf %111, %115 : vector<8x64xf32>
    %117 = arith.addf %113, %116 : vector<8x64xf32>
    %118 = math.tanh %117 : vector<8x64xf32>
    %119 = arith.subf %93, %118 : vector<8x64xf32>
    %120 = arith.mulf %112, %119 : vector<8x64xf32>
    %121 = arith.addf %120, %118 : vector<8x64xf32>
    %122 = vector.extract_strided_slice %121 {offsets = [0, 0], sizes = [8, 32], strides = [1, 1]} : vector<8x64xf32> to vector<8x32xf32>
    %c24 = arith.constant 24 : index
    %c0_28 = arith.constant 0 : index
    %123 = vector.load %arg23[%c24, %c0_28] : memref<64x32xf32, #tpu.memory_space<vmem>>, vector<8x32xf32>
    tpu.vector_store %arg23[%c24, %c0_28], %122 {strides = array<i32>} : memref<64x32xf32, #tpu.memory_space<vmem>>, vector<8x32xf32>,
    %124 = vector.extract_strided_slice %121 {offsets = [0, 32], sizes = [8, 32], strides = [1, 1]} : vector<8x64xf32> to vector<8x32xf32>
    %c32 = arith.constant 32 : index
    %c0_29 = arith.constant 0 : index
    %125 = vector.load %arg24[%c32, %c0_29] : memref<64x32xf32, #tpu.memory_space<vmem>>, vector<8x32xf32>
    tpu.vector_store %arg24[%c32, %c0_29], %124 {strides = array<i32>} : memref<64x32xf32, #tpu.memory_space<vmem>>, vector<8x32xf32>,
    %126 = vector.extract_strided_slice %10 {offsets = [32, 0], sizes = [8, 192], strides = [1, 1]} : vector<64x192xf32> to vector<8x192xf32>
    %127 = vector.extract_strided_slice %12 {offsets = [24, 0], sizes = [8, 192], strides = [1, 1]} : vector<64x192xf32> to vector<8x192xf32>
    %128 = arith.addf %126, %127 : vector<8x192xf32>
    %129 = arith.truncf %121 : vector<8x64xf32> to vector<8x64xbf16>
    %cst_30 = arith.constant dense<0.000000e+00> : vector<8x192xf32>
    %130 = tpu.matmul %129, %2, %cst_30 {dimension_numbers = #tpu.dot_dimension_numbers<[1], [0], [0], [1], [0, 0, 1, 1], [], []>} : vector<8x64xbf16>, vector<64x192xbf16>, vector<8x192xf32> -> vector<8x192xf32>
    %131 = vector.extract_strided_slice %128 {offsets = [0, 0], sizes = [8, 128], strides = [1, 1]} : vector<8x192xf32> to vector<8x128xf32>
    %132 = vector.extract_strided_slice %130 {offsets = [0, 0], sizes = [8, 128], strides = [1, 1]} : vector<8x192xf32> to vector<8x128xf32>
    %133 = arith.addf %131, %132 : vector<8x128xf32>
    %134 = arith.negf %133 : vector<8x128xf32>
    %135 = math.exp %134 : vector<8x128xf32>
    %cst_31 = arith.constant 1.000000e+00 : f32
    %136 = vector.broadcast %cst_31 : f32 to vector<8x128xf32>
    %137 = arith.addf %136, %135 : vector<8x128xf32>
    %138 = arith.divf %136, %137 : vector<8x128xf32>
    %139 = vector.extract_strided_slice %138 {offsets = [0, 0], sizes = [8, 64], strides = [1, 1]} : vector<8x128xf32> to vector<8x64xf32>
    %140 = vector.extract_strided_slice %138 {offsets = [0, 64], sizes = [8, 64], strides = [1, 1]} : vector<8x128xf32> to vector<8x64xf32>
    %141 = vector.extract_strided_slice %128 {offsets = [0, 128], sizes = [8, 64], strides = [1, 1]} : vector<8x192xf32> to vector<8x64xf32>
    %142 = vector.extract_strided_slice %130 {offsets = [0, 128], sizes = [8, 64], strides = [1, 1]} : vector<8x192xf32> to vector<8x64xf32>
    %143 = arith.addf %142, %6 : vector<8x64xf32>
    %144 = arith.mulf %139, %143 : vector<8x64xf32>
    %145 = arith.addf %141, %144 : vector<8x64xf32>
    %146 = math.tanh %145 : vector<8x64xf32>
    %147 = arith.subf %121, %146 : vector<8x64xf32>
    %148 = arith.mulf %140, %147 : vector<8x64xf32>
    %149 = arith.addf %148, %146 : vector<8x64xf32>
    %150 = vector.extract_strided_slice %149 {offsets = [0, 0], sizes = [8, 32], strides = [1, 1]} : vector<8x64xf32> to vector<8x32xf32>
    %c32_32 = arith.constant 32 : index
    %c0_33 = arith.constant 0 : index
    %151 = vector.load %arg23[%c32_32, %c0_33] : memref<64x32xf32, #tpu.memory_space<vmem>>, vector<8x32xf32>
    tpu.vector_store %arg23[%c32_32, %c0_33], %150 {strides = array<i32>} : memref<64x32xf32, #tpu.memory_space<vmem>>, vector<8x32xf32>,
    %152 = vector.extract_strided_slice %149 {offsets = [0, 32], sizes = [8, 32], strides = [1, 1]} : vector<8x64xf32> to vector<8x32xf32>
    %c24_34 = arith.constant 24 : index
    %c0_35 = arith.constant 0 : index
    %153 = vector.load %arg24[%c24_34, %c0_35] : memref<64x32xf32, #tpu.memory_space<vmem>>, vector<8x32xf32>
    tpu.vector_store %arg24[%c24_34, %c0_35], %152 {strides = array<i32>} : memref<64x32xf32, #tpu.memory_space<vmem>>, vector<8x32xf32>,
    %154 = vector.extract_strided_slice %10 {offsets = [40, 0], sizes = [8, 192], strides = [1, 1]} : vector<64x192xf32> to vector<8x192xf32>
    %155 = vector.extract_strided_slice %12 {offsets = [16, 0], sizes = [8, 192], strides = [1, 1]} : vector<64x192xf32> to vector<8x192xf32>
    %156 = arith.addf %154, %155 : vector<8x192xf32>
    %157 = arith.truncf %149 : vector<8x64xf32> to vector<8x64xbf16>
    %cst_36 = arith.constant dense<0.000000e+00> : vector<8x192xf32>
    %158 = tpu.matmul %157, %2, %cst_36 {dimension_numbers = #tpu.dot_dimension_numbers<[1], [0], [0], [1], [0, 0, 1, 1], [], []>} : vector<8x64xbf16>, vector<64x192xbf16>, vector<8x192xf32> -> vector<8x192xf32>
    %159 = vector.extract_strided_slice %156 {offsets = [0, 0], sizes = [8, 128], strides = [1, 1]} : vector<8x192xf32> to vector<8x128xf32>
    %160 = vector.extract_strided_slice %158 {offsets = [0, 0], sizes = [8, 128], strides = [1, 1]} : vector<8x192xf32> to vector<8x128xf32>
    %161 = arith.addf %159, %160 : vector<8x128xf32>
    %162 = arith.negf %161 : vector<8x128xf32>
    %163 = math.exp %162 : vector<8x128xf32>
    %cst_37 = arith.constant 1.000000e+00 : f32
    %164 = vector.broadcast %cst_37 : f32 to vector<8x128xf32>
    %165 = arith.addf %164, %163 : vector<8x128xf32>
    %166 = arith.divf %164, %165 : vector<8x128xf32>
    %167 = vector.extract_strided_slice %166 {offsets = [0, 0], sizes = [8, 64], strides = [1, 1]} : vector<8x128xf32> to vector<8x64xf32>
    %168 = vector.extract_strided_slice %166 {offsets = [0, 64], sizes = [8, 64], strides = [1, 1]} : vector<8x128xf32> to vector<8x64xf32>
    %169 = vector.extract_strided_slice %156 {offsets = [0, 128], sizes = [8, 64], strides = [1, 1]} : vector<8x192xf32> to vector<8x64xf32>
    %170 = vector.extract_strided_slice %158 {offsets = [0, 128], sizes = [8, 64], strides = [1, 1]} : vector<8x192xf32> to vector<8x64xf32>
    %171 = arith.addf %170, %6 : vector<8x64xf32>
    %172 = arith.mulf %167, %171 : vector<8x64xf32>
    %173 = arith.addf %169, %172 : vector<8x64xf32>
    %174 = math.tanh %173 : vector<8x64xf32>
    %175 = arith.subf %149, %174 : vector<8x64xf32>
    %176 = arith.mulf %168, %175 : vector<8x64xf32>
    %177 = arith.addf %176, %174 : vector<8x64xf32>
    %178 = vector.extract_strided_slice %177 {offsets = [0, 0], sizes = [8, 32], strides = [1, 1]} : vector<8x64xf32> to vector<8x32xf32>
    %c40_38 = arith.constant 40 : index
    %c0_39 = arith.constant 0 : index
    %179 = vector.load %arg23[%c40_38, %c0_39] : memref<64x32xf32, #tpu.memory_space<vmem>>, vector<8x32xf32>
    tpu.vector_store %arg23[%c40_38, %c0_39], %178 {strides = array<i32>} : memref<64x32xf32, #tpu.memory_space<vmem>>, vector<8x32xf32>,
    %180 = vector.extract_strided_slice %177 {offsets = [0, 32], sizes = [8, 32], strides = [1, 1]} : vector<8x64xf32> to vector<8x32xf32>
    %c16_40 = arith.constant 16 : index
    %c0_41 = arith.constant 0 : index
    %181 = vector.load %arg24[%c16_40, %c0_41] : memref<64x32xf32, #tpu.memory_space<vmem>>, vector<8x32xf32>
    tpu.vector_store %arg24[%c16_40, %c0_41], %180 {strides = array<i32>} : memref<64x32xf32, #tpu.memory_space<vmem>>, vector<8x32xf32>,
    %182 = vector.extract_strided_slice %10 {offsets = [48, 0], sizes = [8, 192], strides = [1, 1]} : vector<64x192xf32> to vector<8x192xf32>
    %183 = vector.extract_strided_slice %12 {offsets = [8, 0], sizes = [8, 192], strides = [1, 1]} : vector<64x192xf32> to vector<8x192xf32>
    %184 = arith.addf %182, %183 : vector<8x192xf32>
    %185 = arith.truncf %177 : vector<8x64xf32> to vector<8x64xbf16>
    %cst_42 = arith.constant dense<0.000000e+00> : vector<8x192xf32>
    %186 = tpu.matmul %185, %2, %cst_42 {dimension_numbers = #tpu.dot_dimension_numbers<[1], [0], [0], [1], [0, 0, 1, 1], [], []>} : vector<8x64xbf16>, vector<64x192xbf16>, vector<8x192xf32> -> vector<8x192xf32>
    %187 = vector.extract_strided_slice %184 {offsets = [0, 0], sizes = [8, 128], strides = [1, 1]} : vector<8x192xf32> to vector<8x128xf32>
    %188 = vector.extract_strided_slice %186 {offsets = [0, 0], sizes = [8, 128], strides = [1, 1]} : vector<8x192xf32> to vector<8x128xf32>
    %189 = arith.addf %187, %188 : vector<8x128xf32>
    %190 = arith.negf %189 : vector<8x128xf32>
    %191 = math.exp %190 : vector<8x128xf32>
    %cst_43 = arith.constant 1.000000e+00 : f32
    %192 = vector.broadcast %cst_43 : f32 to vector<8x128xf32>
    %193 = arith.addf %192, %191 : vector<8x128xf32>
    %194 = arith.divf %192, %193 : vector<8x128xf32>
    %195 = vector.extract_strided_slice %194 {offsets = [0, 0], sizes = [8, 64], strides = [1, 1]} : vector<8x128xf32> to vector<8x64xf32>
    %196 = vector.extract_strided_slice %194 {offsets = [0, 64], sizes = [8, 64], strides = [1, 1]} : vector<8x128xf32> to vector<8x64xf32>
    %197 = vector.extract_strided_slice %184 {offsets = [0, 128], sizes = [8, 64], strides = [1, 1]} : vector<8x192xf32> to vector<8x64xf32>
    %198 = vector.extract_strided_slice %186 {offsets = [0, 128], sizes = [8, 64], strides = [1, 1]} : vector<8x192xf32> to vector<8x64xf32>
    %199 = arith.addf %198, %6 : vector<8x64xf32>
    %200 = arith.mulf %195, %199 : vector<8x64xf32>
    %201 = arith.addf %197, %200 : vector<8x64xf32>
    %202 = math.tanh %201 : vector<8x64xf32>
    %203 = arith.subf %177, %202 : vector<8x64xf32>
    %204 = arith.mulf %196, %203 : vector<8x64xf32>
    %205 = arith.addf %204, %202 : vector<8x64xf32>
    %206 = vector.extract_strided_slice %205 {offsets = [0, 0], sizes = [8, 32], strides = [1, 1]} : vector<8x64xf32> to vector<8x32xf32>
    %c48_44 = arith.constant 48 : index
    %c0_45 = arith.constant 0 : index
    %207 = vector.load %arg23[%c48_44, %c0_45] : memref<64x32xf32, #tpu.memory_space<vmem>>, vector<8x32xf32>
    tpu.vector_store %arg23[%c48_44, %c0_45], %206 {strides = array<i32>} : memref<64x32xf32, #tpu.memory_space<vmem>>, vector<8x32xf32>,
    %208 = vector.extract_strided_slice %205 {offsets = [0, 32], sizes = [8, 32], strides = [1, 1]} : vector<8x64xf32> to vector<8x32xf32>
    %c8_46 = arith.constant 8 : index
    %c0_47 = arith.constant 0 : index
    %209 = vector.load %arg24[%c8_46, %c0_47] : memref<64x32xf32, #tpu.memory_space<vmem>>, vector<8x32xf32>
    tpu.vector_store %arg24[%c8_46, %c0_47], %208 {strides = array<i32>} : memref<64x32xf32, #tpu.memory_space<vmem>>, vector<8x32xf32>,
    %210 = vector.extract_strided_slice %10 {offsets = [56, 0], sizes = [8, 192], strides = [1, 1]} : vector<64x192xf32> to vector<8x192xf32>
    %211 = vector.extract_strided_slice %12 {offsets = [0, 0], sizes = [8, 192], strides = [1, 1]} : vector<64x192xf32> to vector<8x192xf32>
    %212 = arith.addf %210, %211 : vector<8x192xf32>
    %213 = arith.truncf %205 : vector<8x64xf32> to vector<8x64xbf16>
    %cst_48 = arith.constant dense<0.000000e+00> : vector<8x192xf32>
    %214 = tpu.matmul %213, %2, %cst_48 {dimension_numbers = #tpu.dot_dimension_numbers<[1], [0], [0], [1], [0, 0, 1, 1], [], []>} : vector<8x64xbf16>, vector<64x192xbf16>, vector<8x192xf32> -> vector<8x192xf32>
    %215 = vector.extract_strided_slice %212 {offsets = [0, 0], sizes = [8, 128], strides = [1, 1]} : vector<8x192xf32> to vector<8x128xf32>
    %216 = vector.extract_strided_slice %214 {offsets = [0, 0], sizes = [8, 128], strides = [1, 1]} : vector<8x192xf32> to vector<8x128xf32>
    %217 = arith.addf %215, %216 : vector<8x128xf32>
    %218 = arith.negf %217 : vector<8x128xf32>
    %219 = math.exp %218 : vector<8x128xf32>
    %cst_49 = arith.constant 1.000000e+00 : f32
    %220 = vector.broadcast %cst_49 : f32 to vector<8x128xf32>
    %221 = arith.addf %220, %219 : vector<8x128xf32>
    %222 = arith.divf %220, %221 : vector<8x128xf32>
    %223 = vector.extract_strided_slice %222 {offsets = [0, 0], sizes = [8, 64], strides = [1, 1]} : vector<8x128xf32> to vector<8x64xf32>
    %224 = vector.extract_strided_slice %222 {offsets = [0, 64], sizes = [8, 64], strides = [1, 1]} : vector<8x128xf32> to vector<8x64xf32>
    %225 = vector.extract_strided_slice %212 {offsets = [0, 128], sizes = [8, 64], strides = [1, 1]} : vector<8x192xf32> to vector<8x64xf32>
    %226 = vector.extract_strided_slice %214 {offsets = [0, 128], sizes = [8, 64], strides = [1, 1]} : vector<8x192xf32> to vector<8x64xf32>
    %227 = arith.addf %226, %6 : vector<8x64xf32>
    %228 = arith.mulf %223, %227 : vector<8x64xf32>
    %229 = arith.addf %225, %228 : vector<8x64xf32>
    %230 = math.tanh %229 : vector<8x64xf32>
    %231 = arith.subf %205, %230 : vector<8x64xf32>
    %232 = arith.mulf %224, %231 : vector<8x64xf32>
    %233 = arith.addf %232, %230 : vector<8x64xf32>
    %234 = vector.extract_strided_slice %233 {offsets = [0, 0], sizes = [8, 32], strides = [1, 1]} : vector<8x64xf32> to vector<8x32xf32>
    %c56_50 = arith.constant 56 : index
    %c0_51 = arith.constant 0 : index
    %235 = vector.load %arg23[%c56_50, %c0_51] : memref<64x32xf32, #tpu.memory_space<vmem>>, vector<8x32xf32>
    tpu.vector_store %arg23[%c56_50, %c0_51], %234 {strides = array<i32>} : memref<64x32xf32, #tpu.memory_space<vmem>>, vector<8x32xf32>,
    %236 = vector.extract_strided_slice %233 {offsets = [0, 32], sizes = [8, 32], strides = [1, 1]} : vector<8x64xf32> to vector<8x32xf32>
    %c0_52 = arith.constant 0 : index
    %c0_53 = arith.constant 0 : index
    %237 = vector.load %arg24[%c0_52, %c0_53] : memref<64x32xf32, #tpu.memory_space<vmem>>, vector<8x32xf32>
    tpu.vector_store %arg24[%c0_52, %c0_53], %236 {strides = array<i32>} : memref<64x32xf32, #tpu.memory_space<vmem>>, vector<8x32xf32>,
    %c0_54 = arith.constant 0 : index
    %c0_55 = arith.constant 0 : index
    %238 = vector.load %arg10[%c0_54, %c0_55] : memref<64x192xbf16, #tpu.memory_space<vmem>>, vector<64x192xbf16>
    %c0_56 = arith.constant 0 : index
    %c0_57 = arith.constant 0 : index
    %239 = vector.load %arg11[%c0_56, %c0_57] : memref<1x192xf32, #tpu.memory_space<vmem>>, vector<1x192xf32>
    %c0_58 = arith.constant 0 : index
    %c0_59 = arith.constant 0 : index
    %240 = vector.load %arg12[%c0_58, %c0_59] : memref<1x64xf32, #tpu.memory_space<vmem>>, vector<1x64xf32>
    %241 = vector.shape_cast %240 : vector<1x64xf32> to vector<1x64xf32>
    %242 = vector.broadcast %241 : vector<1x64xf32> to vector<8x64xf32>
    %c0_60 = arith.constant 0 : index
    %c0_61 = arith.constant 0 : index
    %243 = vector.load %arg23[%c0_60, %c0_61] : memref<64x32xf32, #tpu.memory_space<vmem>>, vector<64x32xf32>
    %244 = arith.truncf %243 : vector<64x32xf32> to vector<64x32xbf16>
    %c0_62 = arith.constant 0 : index
    %c0_63 = arith.constant 0 : index
    %245 = vector.load %arg24[%c0_62, %c0_63] : memref<64x32xf32, #tpu.memory_space<vmem>>, vector<64x32xf32>
    %246 = arith.truncf %245 : vector<64x32xf32> to vector<64x32xbf16>
    %c0_64 = arith.constant 0 : index
    %c0_65 = arith.constant 0 : index
    %247 = vector.load %arg8[%c0_64, %c0_65] : memref<64x192xbf16, #tpu.memory_space<vmem>>, vector<64x192xbf16>
    %c0_66 = arith.constant 0 : index
    %c0_67 = arith.constant 0 : index
    %248 = vector.load %arg9[%c0_66, %c0_67] : memref<64x192xbf16, #tpu.memory_space<vmem>>, vector<64x192xbf16>
    %249 = vector.extract_strided_slice %247 {offsets = [0, 0], sizes = [32, 192], strides = [1, 1]} : vector<64x192xbf16> to vector<32x192xbf16>
    %cst_68 = arith.constant dense<0.000000e+00> : vector<64x192xf32>
    %250 = tpu.matmul %244, %249, %cst_68 {dimension_numbers = #tpu.dot_dimension_numbers<[1], [0], [0], [1], [0, 0, 1, 1], [], []>} : vector<64x32xbf16>, vector<32x192xbf16>, vector<64x192xf32> -> vector<64x192xf32>
    %251 = vector.extract_strided_slice %247 {offsets = [32, 0], sizes = [32, 192], strides = [1, 1]} : vector<64x192xbf16> to vector<32x192xbf16>
    %cst_69 = arith.constant dense<0.000000e+00> : vector<64x192xf32>
    %252 = tpu.matmul %246, %251, %cst_69 {dimension_numbers = #tpu.dot_dimension_numbers<[1], [0], [0], [1], [0, 0, 1, 1], [], []>} : vector<64x32xbf16>, vector<32x192xbf16>, vector<64x192xf32> -> vector<64x192xf32>
    %253 = arith.addf %250, %252 : vector<64x192xf32>
    %254 = vector.broadcast %239 : vector<1x192xf32> to vector<64x192xf32>
    %255 = arith.addf %253, %254 : vector<64x192xf32>
    %256 = vector.extract_strided_slice %248 {offsets = [0, 0], sizes = [32, 192], strides = [1, 1]} : vector<64x192xbf16> to vector<32x192xbf16>
    %cst_70 = arith.constant dense<0.000000e+00> : vector<64x192xf32>
    %257 = tpu.matmul %244, %256, %cst_70 {dimension_numbers = #tpu.dot_dimension_numbers<[1], [0], [0], [1], [0, 0, 1, 1], [], []>} : vector<64x32xbf16>, vector<32x192xbf16>, vector<64x192xf32> -> vector<64x192xf32>
    %258 = vector.extract_strided_slice %248 {offsets = [32, 0], sizes = [32, 192], strides = [1, 1]} : vector<64x192xbf16> to vector<32x192xbf16>
    %cst_71 = arith.constant dense<0.000000e+00> : vector<64x192xf32>
    %259 = tpu.matmul %246, %258, %cst_71 {dimension_numbers = #tpu.dot_dimension_numbers<[1], [0], [0], [1], [0, 0, 1, 1], [], []>} : vector<64x32xbf16>, vector<32x192xbf16>, vector<64x192xf32> -> vector<64x192xf32>
    %260 = arith.addf %257, %259 : vector<64x192xf32>
    %cst_72 = arith.constant 0.000000e+00 : f32
    %261 = vector.broadcast %cst_72 : f32 to vector<8x64xf32>
    %262 = vector.extract_strided_slice %255 {offsets = [0, 0], sizes = [8, 192], strides = [1, 1]} : vector<64x192xf32> to vector<8x192xf32>
    %263 = vector.extract_strided_slice %260 {offsets = [56, 0], sizes = [8, 192], strides = [1, 1]} : vector<64x192xf32> to vector<8x192xf32>
    %264 = arith.addf %262, %263 : vector<8x192xf32>
    %265 = arith.truncf %261 : vector<8x64xf32> to vector<8x64xbf16>
    %cst_73 = arith.constant dense<0.000000e+00> : vector<8x192xf32>
    %266 = tpu.matmul %265, %238, %cst_73 {dimension_numbers = #tpu.dot_dimension_numbers<[1], [0], [0], [1], [0, 0, 1, 1], [], []>} : vector<8x64xbf16>, vector<64x192xbf16>, vector<8x192xf32> -> vector<8x192xf32>
    %267 = vector.extract_strided_slice %264 {offsets = [0, 0], sizes = [8, 128], strides = [1, 1]} : vector<8x192xf32> to vector<8x128xf32>
    %268 = vector.extract_strided_slice %266 {offsets = [0, 0], sizes = [8, 128], strides = [1, 1]} : vector<8x192xf32> to vector<8x128xf32>
    %269 = arith.addf %267, %268 : vector<8x128xf32>
    %270 = arith.negf %269 : vector<8x128xf32>
    %271 = math.exp %270 : vector<8x128xf32>
    %cst_74 = arith.constant 1.000000e+00 : f32
    %272 = vector.broadcast %cst_74 : f32 to vector<8x128xf32>
    %273 = arith.addf %272, %271 : vector<8x128xf32>
    %274 = arith.divf %272, %273 : vector<8x128xf32>
    %275 = vector.extract_strided_slice %274 {offsets = [0, 0], sizes = [8, 64], strides = [1, 1]} : vector<8x128xf32> to vector<8x64xf32>
    %276 = vector.extract_strided_slice %274 {offsets = [0, 64], sizes = [8, 64], strides = [1, 1]} : vector<8x128xf32> to vector<8x64xf32>
    %277 = vector.extract_strided_slice %264 {offsets = [0, 128], sizes = [8, 64], strides = [1, 1]} : vector<8x192xf32> to vector<8x64xf32>
    %278 = vector.extract_strided_slice %266 {offsets = [0, 128], sizes = [8, 64], strides = [1, 1]} : vector<8x192xf32> to vector<8x64xf32>
    %279 = arith.addf %278, %242 : vector<8x64xf32>
    %280 = arith.mulf %275, %279 : vector<8x64xf32>
    %281 = arith.addf %277, %280 : vector<8x64xf32>
    %282 = math.tanh %281 : vector<8x64xf32>
    %283 = arith.subf %261, %282 : vector<8x64xf32>
    %284 = arith.mulf %276, %283 : vector<8x64xf32>
    %285 = arith.addf %284, %282 : vector<8x64xf32>
    %286 = vector.extract_strided_slice %255 {offsets = [8, 0], sizes = [8, 192], strides = [1, 1]} : vector<64x192xf32> to vector<8x192xf32>
    %287 = vector.extract_strided_slice %260 {offsets = [48, 0], sizes = [8, 192], strides = [1, 1]} : vector<64x192xf32> to vector<8x192xf32>
    %288 = arith.addf %286, %287 : vector<8x192xf32>
    %289 = arith.truncf %285 : vector<8x64xf32> to vector<8x64xbf16>
    %cst_75 = arith.constant dense<0.000000e+00> : vector<8x192xf32>
    %290 = tpu.matmul %289, %238, %cst_75 {dimension_numbers = #tpu.dot_dimension_numbers<[1], [0], [0], [1], [0, 0, 1, 1], [], []>} : vector<8x64xbf16>, vector<64x192xbf16>, vector<8x192xf32> -> vector<8x192xf32>
    %291 = vector.extract_strided_slice %288 {offsets = [0, 0], sizes = [8, 128], strides = [1, 1]} : vector<8x192xf32> to vector<8x128xf32>
    %292 = vector.extract_strided_slice %290 {offsets = [0, 0], sizes = [8, 128], strides = [1, 1]} : vector<8x192xf32> to vector<8x128xf32>
    %293 = arith.addf %291, %292 : vector<8x128xf32>
    %294 = arith.negf %293 : vector<8x128xf32>
    %295 = math.exp %294 : vector<8x128xf32>
    %cst_76 = arith.constant 1.000000e+00 : f32
    %296 = vector.broadcast %cst_76 : f32 to vector<8x128xf32>
    %297 = arith.addf %296, %295 : vector<8x128xf32>
    %298 = arith.divf %296, %297 : vector<8x128xf32>
    %299 = vector.extract_strided_slice %298 {offsets = [0, 0], sizes = [8, 64], strides = [1, 1]} : vector<8x128xf32> to vector<8x64xf32>
    %300 = vector.extract_strided_slice %298 {offsets = [0, 64], sizes = [8, 64], strides = [1, 1]} : vector<8x128xf32> to vector<8x64xf32>
    %301 = vector.extract_strided_slice %288 {offsets = [0, 128], sizes = [8, 64], strides = [1, 1]} : vector<8x192xf32> to vector<8x64xf32>
    %302 = vector.extract_strided_slice %290 {offsets = [0, 128], sizes = [8, 64], strides = [1, 1]} : vector<8x192xf32> to vector<8x64xf32>
    %303 = arith.addf %302, %242 : vector<8x64xf32>
    %304 = arith.mulf %299, %303 : vector<8x64xf32>
    %305 = arith.addf %301, %304 : vector<8x64xf32>
    %306 = math.tanh %305 : vector<8x64xf32>
    %307 = arith.subf %285, %306 : vector<8x64xf32>
    %308 = arith.mulf %300, %307 : vector<8x64xf32>
    %309 = arith.addf %308, %306 : vector<8x64xf32>
    %310 = arith.maximumf %285, %309 : vector<8x64xf32>
    %311 = vector.extract_strided_slice %255 {offsets = [16, 0], sizes = [8, 192], strides = [1, 1]} : vector<64x192xf32> to vector<8x192xf32>
    %312 = vector.extract_strided_slice %260 {offsets = [40, 0], sizes = [8, 192], strides = [1, 1]} : vector<64x192xf32> to vector<8x192xf32>
    %313 = arith.addf %311, %312 : vector<8x192xf32>
    %314 = arith.truncf %309 : vector<8x64xf32> to vector<8x64xbf16>
    %cst_77 = arith.constant dense<0.000000e+00> : vector<8x192xf32>
    %315 = tpu.matmul %314, %238, %cst_77 {dimension_numbers = #tpu.dot_dimension_numbers<[1], [0], [0], [1], [0, 0, 1, 1], [], []>} : vector<8x64xbf16>, vector<64x192xbf16>, vector<8x192xf32> -> vector<8x192xf32>
    %316 = vector.extract_strided_slice %313 {offsets = [0, 0], sizes = [8, 128], strides = [1, 1]} : vector<8x192xf32> to vector<8x128xf32>
    %317 = vector.extract_strided_slice %315 {offsets = [0, 0], sizes = [8, 128], strides = [1, 1]} : vector<8x192xf32> to vector<8x128xf32>
    %318 = arith.addf %316, %317 : vector<8x128xf32>
    %319 = arith.negf %318 : vector<8x128xf32>
    %320 = math.exp %319 : vector<8x128xf32>
    %cst_78 = arith.constant 1.000000e+00 : f32
    %321 = vector.broadcast %cst_78 : f32 to vector<8x128xf32>
    %322 = arith.addf %321, %320 : vector<8x128xf32>
    %323 = arith.divf %321, %322 : vector<8x128xf32>
    %324 = vector.extract_strided_slice %323 {offsets = [0, 0], sizes = [8, 64], strides = [1, 1]} : vector<8x128xf32> to vector<8x64xf32>
    %325 = vector.extract_strided_slice %323 {offsets = [0, 64], sizes = [8, 64], strides = [1, 1]} : vector<8x128xf32> to vector<8x64xf32>
    %326 = vector.extract_strided_slice %313 {offsets = [0, 128], sizes = [8, 64], strides = [1, 1]} : vector<8x192xf32> to vector<8x64xf32>
    %327 = vector.extract_strided_slice %315 {offsets = [0, 128], sizes = [8, 64], strides = [1, 1]} : vector<8x192xf32> to vector<8x64xf32>
    %328 = arith.addf %327, %242 : vector<8x64xf32>
    %329 = arith.mulf %324, %328 : vector<8x64xf32>
    %330 = arith.addf %326, %329 : vector<8x64xf32>
    %331 = math.tanh %330 : vector<8x64xf32>
    %332 = arith.subf %309, %331 : vector<8x64xf32>
    %333 = arith.mulf %325, %332 : vector<8x64xf32>
    %334 = arith.addf %333, %331 : vector<8x64xf32>
    %335 = arith.maximumf %310, %334 : vector<8x64xf32>
    %336 = vector.extract_strided_slice %255 {offsets = [24, 0], sizes = [8, 192], strides = [1, 1]} : vector<64x192xf32> to vector<8x192xf32>
    %337 = vector.extract_strided_slice %260 {offsets = [32, 0], sizes = [8, 192], strides = [1, 1]} : vector<64x192xf32> to vector<8x192xf32>
    %338 = arith.addf %336, %337 : vector<8x192xf32>
    %339 = arith.truncf %334 : vector<8x64xf32> to vector<8x64xbf16>
    %cst_79 = arith.constant dense<0.000000e+00> : vector<8x192xf32>
    %340 = tpu.matmul %339, %238, %cst_79 {dimension_numbers = #tpu.dot_dimension_numbers<[1], [0], [0], [1], [0, 0, 1, 1], [], []>} : vector<8x64xbf16>, vector<64x192xbf16>, vector<8x192xf32> -> vector<8x192xf32>
    %341 = vector.extract_strided_slice %338 {offsets = [0, 0], sizes = [8, 128], strides = [1, 1]} : vector<8x192xf32> to vector<8x128xf32>
    %342 = vector.extract_strided_slice %340 {offsets = [0, 0], sizes = [8, 128], strides = [1, 1]} : vector<8x192xf32> to vector<8x128xf32>
    %343 = arith.addf %341, %342 : vector<8x128xf32>
    %344 = arith.negf %343 : vector<8x128xf32>
    %345 = math.exp %344 : vector<8x128xf32>
    %cst_80 = arith.constant 1.000000e+00 : f32
    %346 = vector.broadcast %cst_80 : f32 to vector<8x128xf32>
    %347 = arith.addf %346, %345 : vector<8x128xf32>
    %348 = arith.divf %346, %347 : vector<8x128xf32>
    %349 = vector.extract_strided_slice %348 {offsets = [0, 0], sizes = [8, 64], strides = [1, 1]} : vector<8x128xf32> to vector<8x64xf32>
    %350 = vector.extract_strided_slice %348 {offsets = [0, 64], sizes = [8, 64], strides = [1, 1]} : vector<8x128xf32> to vector<8x64xf32>
    %351 = vector.extract_strided_slice %338 {offsets = [0, 128], sizes = [8, 64], strides = [1, 1]} : vector<8x192xf32> to vector<8x64xf32>
    %352 = vector.extract_strided_slice %340 {offsets = [0, 128], sizes = [8, 64], strides = [1, 1]} : vector<8x192xf32> to vector<8x64xf32>
    %353 = arith.addf %352, %242 : vector<8x64xf32>
    %354 = arith.mulf %349, %353 : vector<8x64xf32>
    %355 = arith.addf %351, %354 : vector<8x64xf32>
    %356 = math.tanh %355 : vector<8x64xf32>
    %357 = arith.subf %334, %356 : vector<8x64xf32>
    %358 = arith.mulf %350, %357 : vector<8x64xf32>
    %359 = arith.addf %358, %356 : vector<8x64xf32>
    %360 = arith.maximumf %335, %359 : vector<8x64xf32>
    %361 = vector.extract_strided_slice %255 {offsets = [32, 0], sizes = [8, 192], strides = [1, 1]} : vector<64x192xf32> to vector<8x192xf32>
    %362 = vector.extract_strided_slice %260 {offsets = [24, 0], sizes = [8, 192], strides = [1, 1]} : vector<64x192xf32> to vector<8x192xf32>
    %363 = arith.addf %361, %362 : vector<8x192xf32>
    %364 = arith.truncf %359 : vector<8x64xf32> to vector<8x64xbf16>
    %cst_81 = arith.constant dense<0.000000e+00> : vector<8x192xf32>
    %365 = tpu.matmul %364, %238, %cst_81 {dimension_numbers = #tpu.dot_dimension_numbers<[1], [0], [0], [1], [0, 0, 1, 1], [], []>} : vector<8x64xbf16>, vector<64x192xbf16>, vector<8x192xf32> -> vector<8x192xf32>
    %366 = vector.extract_strided_slice %363 {offsets = [0, 0], sizes = [8, 128], strides = [1, 1]} : vector<8x192xf32> to vector<8x128xf32>
    %367 = vector.extract_strided_slice %365 {offsets = [0, 0], sizes = [8, 128], strides = [1, 1]} : vector<8x192xf32> to vector<8x128xf32>
    %368 = arith.addf %366, %367 : vector<8x128xf32>
    %369 = arith.negf %368 : vector<8x128xf32>
    %370 = math.exp %369 : vector<8x128xf32>
    %cst_82 = arith.constant 1.000000e+00 : f32
    %371 = vector.broadcast %cst_82 : f32 to vector<8x128xf32>
    %372 = arith.addf %371, %370 : vector<8x128xf32>
    %373 = arith.divf %371, %372 : vector<8x128xf32>
    %374 = vector.extract_strided_slice %373 {offsets = [0, 0], sizes = [8, 64], strides = [1, 1]} : vector<8x128xf32> to vector<8x64xf32>
    %375 = vector.extract_strided_slice %373 {offsets = [0, 64], sizes = [8, 64], strides = [1, 1]} : vector<8x128xf32> to vector<8x64xf32>
    %376 = vector.extract_strided_slice %363 {offsets = [0, 128], sizes = [8, 64], strides = [1, 1]} : vector<8x192xf32> to vector<8x64xf32>
    %377 = vector.extract_strided_slice %365 {offsets = [0, 128], sizes = [8, 64], strides = [1, 1]} : vector<8x192xf32> to vector<8x64xf32>
    %378 = arith.addf %377, %242 : vector<8x64xf32>
    %379 = arith.mulf %374, %378 : vector<8x64xf32>
    %380 = arith.addf %376, %379 : vector<8x64xf32>
    %381 = math.tanh %380 : vector<8x64xf32>
    %382 = arith.subf %359, %381 : vector<8x64xf32>
    %383 = arith.mulf %375, %382 : vector<8x64xf32>
    %384 = arith.addf %383, %381 : vector<8x64xf32>
    %385 = arith.maximumf %360, %384 : vector<8x64xf32>
    %386 = vector.extract_strided_slice %255 {offsets = [40, 0], sizes = [8, 192], strides = [1, 1]} : vector<64x192xf32> to vector<8x192xf32>
    %387 = vector.extract_strided_slice %260 {offsets = [16, 0], sizes = [8, 192], strides = [1, 1]} : vector<64x192xf32> to vector<8x192xf32>
    %388 = arith.addf %386, %387 : vector<8x192xf32>
    %389 = arith.truncf %384 : vector<8x64xf32> to vector<8x64xbf16>
    %cst_83 = arith.constant dense<0.000000e+00> : vector<8x192xf32>
    %390 = tpu.matmul %389, %238, %cst_83 {dimension_numbers = #tpu.dot_dimension_numbers<[1], [0], [0], [1], [0, 0, 1, 1], [], []>} : vector<8x64xbf16>, vector<64x192xbf16>, vector<8x192xf32> -> vector<8x192xf32>
    %391 = vector.extract_strided_slice %388 {offsets = [0, 0], sizes = [8, 128], strides = [1, 1]} : vector<8x192xf32> to vector<8x128xf32>
    %392 = vector.extract_strided_slice %390 {offsets = [0, 0], sizes = [8, 128], strides = [1, 1]} : vector<8x192xf32> to vector<8x128xf32>
    %393 = arith.addf %391, %392 : vector<8x128xf32>
    %394 = arith.negf %393 : vector<8x128xf32>
    %395 = math.exp %394 : vector<8x128xf32>
    %cst_84 = arith.constant 1.000000e+00 : f32
    %396 = vector.broadcast %cst_84 : f32 to vector<8x128xf32>
    %397 = arith.addf %396, %395 : vector<8x128xf32>
    %398 = arith.divf %396, %397 : vector<8x128xf32>
    %399 = vector.extract_strided_slice %398 {offsets = [0, 0], sizes = [8, 64], strides = [1, 1]} : vector<8x128xf32> to vector<8x64xf32>
    %400 = vector.extract_strided_slice %398 {offsets = [0, 64], sizes = [8, 64], strides = [1, 1]} : vector<8x128xf32> to vector<8x64xf32>
    %401 = vector.extract_strided_slice %388 {offsets = [0, 128], sizes = [8, 64], strides = [1, 1]} : vector<8x192xf32> to vector<8x64xf32>
    %402 = vector.extract_strided_slice %390 {offsets = [0, 128], sizes = [8, 64], strides = [1, 1]} : vector<8x192xf32> to vector<8x64xf32>
    %403 = arith.addf %402, %242 : vector<8x64xf32>
    %404 = arith.mulf %399, %403 : vector<8x64xf32>
    %405 = arith.addf %401, %404 : vector<8x64xf32>
    %406 = math.tanh %405 : vector<8x64xf32>
    %407 = arith.subf %384, %406 : vector<8x64xf32>
    %408 = arith.mulf %400, %407 : vector<8x64xf32>
    %409 = arith.addf %408, %406 : vector<8x64xf32>
    %410 = arith.maximumf %385, %409 : vector<8x64xf32>
    %411 = vector.extract_strided_slice %255 {offsets = [48, 0], sizes = [8, 192], strides = [1, 1]} : vector<64x192xf32> to vector<8x192xf32>
    %412 = vector.extract_strided_slice %260 {offsets = [8, 0], sizes = [8, 192], strides = [1, 1]} : vector<64x192xf32> to vector<8x192xf32>
    %413 = arith.addf %411, %412 : vector<8x192xf32>
    %414 = arith.truncf %409 : vector<8x64xf32> to vector<8x64xbf16>
    %cst_85 = arith.constant dense<0.000000e+00> : vector<8x192xf32>
    %415 = tpu.matmul %414, %238, %cst_85 {dimension_numbers = #tpu.dot_dimension_numbers<[1], [0], [0], [1], [0, 0, 1, 1], [], []>} : vector<8x64xbf16>, vector<64x192xbf16>, vector<8x192xf32> -> vector<8x192xf32>
    %416 = vector.extract_strided_slice %413 {offsets = [0, 0], sizes = [8, 128], strides = [1, 1]} : vector<8x192xf32> to vector<8x128xf32>
    %417 = vector.extract_strided_slice %415 {offsets = [0, 0], sizes = [8, 128], strides = [1, 1]} : vector<8x192xf32> to vector<8x128xf32>
    %418 = arith.addf %416, %417 : vector<8x128xf32>
    %419 = arith.negf %418 : vector<8x128xf32>
    %420 = math.exp %419 : vector<8x128xf32>
    %cst_86 = arith.constant 1.000000e+00 : f32
    %421 = vector.broadcast %cst_86 : f32 to vector<8x128xf32>
    %422 = arith.addf %421, %420 : vector<8x128xf32>
    %423 = arith.divf %421, %422 : vector<8x128xf32>
    %424 = vector.extract_strided_slice %423 {offsets = [0, 0], sizes = [8, 64], strides = [1, 1]} : vector<8x128xf32> to vector<8x64xf32>
    %425 = vector.extract_strided_slice %423 {offsets = [0, 64], sizes = [8, 64], strides = [1, 1]} : vector<8x128xf32> to vector<8x64xf32>
    %426 = vector.extract_strided_slice %413 {offsets = [0, 128], sizes = [8, 64], strides = [1, 1]} : vector<8x192xf32> to vector<8x64xf32>
    %427 = vector.extract_strided_slice %415 {offsets = [0, 128], sizes = [8, 64], strides = [1, 1]} : vector<8x192xf32> to vector<8x64xf32>
    %428 = arith.addf %427, %242 : vector<8x64xf32>
    %429 = arith.mulf %424, %428 : vector<8x64xf32>
    %430 = arith.addf %426, %429 : vector<8x64xf32>
    %431 = math.tanh %430 : vector<8x64xf32>
    %432 = arith.subf %409, %431 : vector<8x64xf32>
    %433 = arith.mulf %425, %432 : vector<8x64xf32>
    %434 = arith.addf %433, %431 : vector<8x64xf32>
    %435 = arith.maximumf %410, %434 : vector<8x64xf32>
    %436 = vector.extract_strided_slice %255 {offsets = [56, 0], sizes = [8, 192], strides = [1, 1]} : vector<64x192xf32> to vector<8x192xf32>
    %437 = vector.extract_strided_slice %260 {offsets = [0, 0], sizes = [8, 192], strides = [1, 1]} : vector<64x192xf32> to vector<8x192xf32>
    %438 = arith.addf %436, %437 : vector<8x192xf32>
    %439 = arith.truncf %434 : vector<8x64xf32> to vector<8x64xbf16>
    %cst_87 = arith.constant dense<0.000000e+00> : vector<8x192xf32>
    %440 = tpu.matmul %439, %238, %cst_87 {dimension_numbers = #tpu.dot_dimension_numbers<[1], [0], [0], [1], [0, 0, 1, 1], [], []>} : vector<8x64xbf16>, vector<64x192xbf16>, vector<8x192xf32> -> vector<8x192xf32>
    %441 = vector.extract_strided_slice %438 {offsets = [0, 0], sizes = [8, 128], strides = [1, 1]} : vector<8x192xf32> to vector<8x128xf32>
    %442 = vector.extract_strided_slice %440 {offsets = [0, 0], sizes = [8, 128], strides = [1, 1]} : vector<8x192xf32> to vector<8x128xf32>
    %443 = arith.addf %441, %442 : vector<8x128xf32>
    %444 = arith.negf %443 : vector<8x128xf32>
    %445 = math.exp %444 : vector<8x128xf32>
    %cst_88 = arith.constant 1.000000e+00 : f32
    %446 = vector.broadcast %cst_88 : f32 to vector<8x128xf32>
    %447 = arith.addf %446, %445 : vector<8x128xf32>
    %448 = arith.divf %446, %447 : vector<8x128xf32>
    %449 = vector.extract_strided_slice %448 {offsets = [0, 0], sizes = [8, 64], strides = [1, 1]} : vector<8x128xf32> to vector<8x64xf32>
    %450 = vector.extract_strided_slice %448 {offsets = [0, 64], sizes = [8, 64], strides = [1, 1]} : vector<8x128xf32> to vector<8x64xf32>
    %451 = vector.extract_strided_slice %438 {offsets = [0, 128], sizes = [8, 64], strides = [1, 1]} : vector<8x192xf32> to vector<8x64xf32>
    %452 = vector.extract_strided_slice %440 {offsets = [0, 128], sizes = [8, 64], strides = [1, 1]} : vector<8x192xf32> to vector<8x64xf32>
    %453 = arith.addf %452, %242 : vector<8x64xf32>
    %454 = arith.mulf %449, %453 : vector<8x64xf32>
    %455 = arith.addf %451, %454 : vector<8x64xf32>
    %456 = math.tanh %455 : vector<8x64xf32>
    %457 = arith.subf %434, %456 : vector<8x64xf32>
    %458 = arith.mulf %450, %457 : vector<8x64xf32>
    %459 = arith.addf %458, %456 : vector<8x64xf32>
    %460 = arith.maximumf %435, %459 : vector<8x64xf32>
    %461 = math.tanh %460 : vector<8x64xf32>
    %462 = arith.truncf %461 : vector<8x64xf32> to vector<8x64xbf16>
    %c0_89 = arith.constant 0 : index
    %c0_90 = arith.constant 0 : index
    %463 = vector.load %arg13[%c0_89, %c0_90] : memref<64x256xbf16, #tpu.memory_space<vmem>>, vector<64x256xbf16>
    %cst_91 = arith.constant dense<0.000000e+00> : vector<8x256xf32>
    %464 = tpu.matmul %462, %463, %cst_91 {dimension_numbers = #tpu.dot_dimension_numbers<[1], [0], [0], [1], [0, 0, 1, 1], [], []>} : vector<8x64xbf16>, vector<64x256xbf16>, vector<8x256xf32> -> vector<8x256xf32>
    %c0_92 = arith.constant 0 : index
    %c0_93 = arith.constant 0 : index
    %465 = vector.load %arg14[%c0_92, %c0_93] : memref<1x256xf32, #tpu.memory_space<vmem>>, vector<1x256xf32>
    %466 = vector.broadcast %465 : vector<1x256xf32> to vector<8x256xf32>
    %467 = arith.addf %464, %466 : vector<8x256xf32>
    %c0_94 = arith.constant 0 : index
    %c0_95 = arith.constant 0 : index
    %468 = vector.load %arg2[%c0_94, %c0_95] : memref<8x768xf32, #tpu.memory_space<vmem>>, vector<8x768xf32>
    %469 = arith.truncf %468 : vector<8x768xf32> to vector<8x768xbf16>
    %c0_96 = arith.constant 0 : index
    %c0_97 = arith.constant 0 : index
    %470 = vector.load %arg15[%c0_96, %c0_97] : memref<768x512xbf16, #tpu.memory_space<vmem>>, vector<768x512xbf16>
    %cst_98 = arith.constant dense<0.000000e+00> : vector<8x512xf32>
    %471 = tpu.matmul %469, %470, %cst_98 {dimension_numbers = #tpu.dot_dimension_numbers<[1], [0], [0], [1], [0, 0, 1, 1], [], []>} : vector<8x768xbf16>, vector<768x512xbf16>, vector<8x512xf32> -> vector<8x512xf32>
    %472 = arith.truncf %467 : vector<8x256xf32> to vector<8x256xbf16>
    %c0_99 = arith.constant 0 : index
    %c0_100 = arith.constant 0 : index
    %473 = vector.load %arg16[%c0_99, %c0_100] : memref<256x512xbf16, #tpu.memory_space<vmem>>, vector<256x512xbf16>
    %cst_101 = arith.constant dense<0.000000e+00> : vector<8x512xf32>
    %474 = tpu.matmul %472, %473, %cst_101 {dimension_numbers = #tpu.dot_dimension_numbers<[1], [0], [0], [1], [0, 0, 1, 1], [], []>} : vector<8x256xbf16>, vector<256x512xbf16>, vector<8x512xf32> -> vector<8x512xf32>
    %475 = arith.addf %471, %474 : vector<8x512xf32>
    %c0_102 = arith.constant 0 : index
    %c0_103 = arith.constant 0 : index
    %476 = vector.load %arg17[%c0_102, %c0_103] : memref<1x512xf32, #tpu.memory_space<vmem>>, vector<1x512xf32>
    %477 = vector.broadcast %476 : vector<1x512xf32> to vector<8x512xf32>
    %478 = arith.addf %475, %477 : vector<8x512xf32>
    %479 = arith.truncf %478 : vector<8x512xf32> to vector<8x512xbf16>
    %c0_104 = arith.constant 0 : index
    %c0_105 = arith.constant 0 : index
    %480 = vector.load %arg18[%c0_104, %c0_105] : memref<512x256xbf16, #tpu.memory_space<vmem>>, vector<512x256xbf16>
    %cst_106 = arith.constant dense<0.000000e+00> : vector<8x256xf32>
    %481 = tpu.matmul %479, %480, %cst_106 {dimension_numbers = #tpu.dot_dimension_numbers<[1], [0], [0], [1], [0, 0, 1, 1], [], []>} : vector<8x512xbf16>, vector<512x256xbf16>, vector<8x256xf32> -> vector<8x256xf32>
    %c0_107 = arith.constant 0 : index
    %c0_108 = arith.constant 0 : index
    %482 = vector.load %arg19[%c0_107, %c0_108] : memref<1x256xf32, #tpu.memory_space<vmem>>, vector<1x256xf32>
    %483 = vector.broadcast %482 : vector<1x256xf32> to vector<8x256xf32>
    %484 = arith.addf %481, %483 : vector<8x256xf32>
    %485 = arith.truncf %484 : vector<8x256xf32> to vector<8x256xbf16>
    %c0_109 = arith.constant 0 : index
    %c0_110 = arith.constant 0 : index
    %486 = vector.load %arg20[%c0_109, %c0_110] : memref<256x4xbf16, #tpu.memory_space<vmem>>, vector<256x4xbf16>
    %cst_111 = arith.constant dense<0.000000e+00> : vector<8x4xf32>
    %487 = tpu.matmul %485, %486, %cst_111 {dimension_numbers = #tpu.dot_dimension_numbers<[1], [0], [0], [1], [0, 0, 1, 1], [], []>} : vector<8x256xbf16>, vector<256x4xbf16>, vector<8x4xf32> -> vector<8x4xf32>
    %c0_112 = arith.constant 0 : index
    %c0_113 = arith.constant 0 : index
    %488 = vector.load %arg21[%c0_112, %c0_113] : memref<1x4xf32, #tpu.memory_space<vmem>>, vector<1x4xf32>
    %489 = vector.broadcast %488 : vector<1x4xf32> to vector<8x4xf32>
    %490 = arith.addf %487, %489 : vector<8x4xf32>
    %c0_114 = arith.constant 0 : index
    %c0_115 = arith.constant 0 : index
    %491 = vector.load %arg22[%c0_114, %c0_115] : memref<8x4xf32, #tpu.memory_space<vmem>>, vector<8x4xf32>
    tpu.vector_store %arg22[%c0_114, %c0_115], %490 {strides = array<i32>} : memref<8x4xf32, #tpu.memory_space<vmem>>, vector<8x4xf32>,
    return
  }
  func.func @transform_0(%arg0: i32) -> (i32, i32) {
    %c0_i32 = arith.constant 0 : i32
    %c0_i32_0 = arith.constant 0 : i32
    %c0_i32_1 = arith.constant 0 : i32
    return %c0_i32, %c0_i32_0 : i32, i32
  }
  func.func @transform_1(%arg0: i32) -> (i32, i32) {
    %c0_i32 = arith.constant 0 : i32
    %c0_i32_0 = arith.constant 0 : i32
    %c0_i32_1 = arith.constant 0 : i32
    return %c0_i32, %c0_i32_0 : i32, i32
  }
  func.func @transform_2(%arg0: i32) -> (i32, i32) {
    %c0_i32 = arith.constant 0 : i32
    %c0_i32_0 = arith.constant 0 : i32
    %c0_i32_1 = arith.constant 0 : i32
    return %c0_i32, %c0_i32_0 : i32, i32
  }
  func.func @transform_3(%arg0: i32) -> (i32, i32) {
    %c0_i32 = arith.constant 0 : i32
    %c0_i32_0 = arith.constant 0 : i32
    %c0_i32_1 = arith.constant 0 : i32
    return %c0_i32, %c0_i32_0 : i32, i32
  }
  func.func @transform_4(%arg0: i32) -> (i32, i32) {
    %c0_i32 = arith.constant 0 : i32
    %c0_i32_0 = arith.constant 0 : i32
    %c0_i32_1 = arith.constant 0 : i32
    return %c0_i32, %c0_i32_0 : i32, i32
  }
  func.func @transform_5(%arg0: i32) -> (i32, i32) {
    %c0_i32 = arith.constant 0 : i32
    %c0_i32_0 = arith.constant 0 : i32
    %c0_i32_1 = arith.constant 0 : i32
    return %c0_i32, %c0_i32_0 : i32, i32
  }
  func.func @transform_6(%arg0: i32) -> (i32, i32) {
    %c0_i32 = arith.constant 0 : i32
    %c0_i32_0 = arith.constant 0 : i32
    %c0_i32_1 = arith.constant 0 : i32
    return %c0_i32, %c0_i32_0 : i32, i32
  }
  func.func @transform_7(%arg0: i32) -> (i32, i32) {
    %c0_i32 = arith.constant 0 : i32
    %c0_i32_0 = arith.constant 0 : i32
    %c0_i32_1 = arith.constant 0 : i32
    return %c0_i32, %c0_i32_0 : i32, i32
  }
  func.func @transform_8(%arg0: i32) -> (i32, i32) {
    %c0_i32 = arith.constant 0 : i32
    %c0_i32_0 = arith.constant 0 : i32
    %c0_i32_1 = arith.constant 0 : i32
    return %c0_i32, %c0_i32_0 : i32, i32
  }
  func.func @transform_9(%arg0: i32) -> (i32, i32) {
    %c0_i32 = arith.constant 0 : i32
    %c0_i32_0 = arith.constant 0 : i32
    %c0_i32_1 = arith.constant 0 : i32
    return %c0_i32, %c0_i32_0 : i32, i32
  }
  func.func @transform_10(%arg0: i32) -> (i32, i32) {
    %c0_i32 = arith.constant 0 : i32
    %c0_i32_0 = arith.constant 0 : i32
    %c0_i32_1 = arith.constant 0 : i32
    return %c0_i32, %c0_i32_0 : i32, i32
  }
  func.func @transform_11(%arg0: i32) -> (i32, i32) {
    %c0_i32 = arith.constant 0 : i32
    %c0_i32_0 = arith.constant 0 : i32
    %c0_i32_1 = arith.constant 0 : i32
    return %c0_i32, %c0_i32_0 : i32, i32
  }
  func.func @transform_12(%arg0: i32) -> (i32, i32) {
    %c0_i32 = arith.constant 0 : i32
    %c0_i32_0 = arith.constant 0 : i32
    %c0_i32_1 = arith.constant 0 : i32
    return %c0_i32, %c0_i32_0 : i32, i32
  }
  func.func @transform_13(%arg0: i32) -> (i32, i32) {
    %c0_i32 = arith.constant 0 : i32
    %c0_i32_0 = arith.constant 0 : i32
    %c0_i32_1 = arith.constant 0 : i32
    return %c0_i32, %c0_i32_0 : i32, i32
  }
  func.func @transform_14(%arg0: i32) -> (i32, i32) {
    %c0_i32 = arith.constant 0 : i32
    %c0_i32_0 = arith.constant 0 : i32
    %c0_i32_1 = arith.constant 0 : i32
    return %c0_i32, %c0_i32_0 : i32, i32
  }
  func.func @transform_15(%arg0: i32) -> (i32, i32) {
    %c0_i32 = arith.constant 0 : i32
    %c0_i32_0 = arith.constant 0 : i32
    %c0_i32_1 = arith.constant 0 : i32
    return %c0_i32, %c0_i32_0 : i32, i32
  }
  func.func @transform_16(%arg0: i32) -> (i32, i32) {
    %c0_i32 = arith.constant 0 : i32
    %c0_i32_0 = arith.constant 0 : i32
    %c0_i32_1 = arith.constant 0 : i32
    return %c0_i32, %c0_i32_0 : i32, i32
  }
  func.func @transform_17(%arg0: i32) -> (i32, i32) {
    %c0_i32 = arith.constant 0 : i32
    %c0_i32_0 = arith.constant 0 : i32
    %c0_i32_1 = arith.constant 0 : i32
    return %c0_i32, %c0_i32_0 : i32, i32
  }
  func.func @transform_18(%arg0: i32) -> (i32, i32) {
    %c0_i32 = arith.constant 0 : i32
    %c0_i32_0 = arith.constant 0 : i32
    %c0_i32_1 = arith.constant 0 : i32
    return %c0_i32, %c0_i32_0 : i32, i32
  }
  func.func @transform_19(%arg0: i32) -> (i32, i32) {
    %c0_i32 = arith.constant 0 : i32
    %c0_i32_0 = arith.constant 0 : i32
    %c0_i32_1 = arith.constant 0 : i32
    return %c0_i32, %c0_i32_0 : i32, i32
  }
  func.func @transform_20(%arg0: i32) -> (i32, i32) {
    %c0_i32 = arith.constant 0 : i32
    %c0_i32_0 = arith.constant 0 : i32
    %c0_i32_1 = arith.constant 0 : i32
    return %c0_i32, %c0_i32_0 : i32, i32
  }
  func.func @transform_21(%arg0: i32) -> (i32, i32) {
    %c0_i32 = arith.constant 0 : i32
    %c0_i32_0 = arith.constant 0 : i32
    %c0_i32_1 = arith.constant 0 : i32
    return %c0_i32, %c0_i32_0 : i32, i32
  }
}

</mosaic_0001>

<llo_original>
// kernel: tpu_custom_call.1
$region0: #{tpu_custom_call.1}
  #allocation0 [shape = 'u32[]', space=smem, size = 0x4, offset = 0x4, fixed_abs, tag = 'smem constant byte address 0x4 - core index']
  #allocation1 [shape = 'u32[144,128]{1,0:T(1,128)}', space=vmem, size = 0x12000, scoped, tag = 'internal scratch']
  #allocation2 [shape = 'f32[64,32]{1,0:T(8,128)}', space=vmem, size = 0x8000, scoped, tag = 'scratch operand']
  #allocation3 [shape = 'f32[64,32]{1,0:T(8,128)}', space=vmem, size = 0x8000, scoped, tag = 'scratch operand']
  %s0 = inlined_call_operand.vmem [shape: f32[64,32], index: 0, kind: input, shape index: {}]
  %s1 = inlined_call_operand.hbm [shape: f32[8,768], index: 1, kind: input, shape index: {}]
  %s2 = inlined_call_operand.hbm [shape: bf16[32,192], index: 2, kind: input, shape index: {}]
  %s3 = inlined_call_operand.hbm [shape: bf16[32,192], index: 3, kind: input, shape index: {}]
  %s4 = inlined_call_operand.vmem [shape: bf16[64,192], index: 4, kind: input, shape index: {}]
  %s5 = inlined_call_operand.hbm [shape: f32[1,192], index: 5, kind: input, shape index: {}]
  %s6 = inlined_call_operand.vmem [shape: f32[1,64], index: 6, kind: input, shape index: {}]
  %s7 = inlined_call_operand.vmem [shape: bf16[64,192], index: 7, kind: input, shape index: {}]
  %s8 = inlined_call_operand.vmem [shape: bf16[64,192], index: 8, kind: input, shape index: {}]
  %s9 = inlined_call_operand.vmem [shape: bf16[64,192], index: 9, kind: input, shape index: {}]
  %s10 = inlined_call_operand.hbm [shape: f32[1,192], index: 10, kind: input, shape index: {}]
  %s11 = inlined_call_operand.hbm [shape: f32[1,64], index: 11, kind: input, shape index: {}]
  %s12 = inlined_call_operand.hbm [shape: bf16[64,256], index: 12, kind: input, shape index: {}]
  %s13 = inlined_call_operand.vmem [shape: f32[1,256], index: 13, kind: input, shape index: {}]
  %s14 = inlined_call_operand.hbm [shape: bf16[768,512], index: 14, kind: input, shape index: {}]
  %s15 = inlined_call_operand.hbm [shape: bf16[256,512], index: 15, kind: input, shape index: {}]
  %s16 = inlined_call_operand.vmem [shape: f32[1,512], index: 16, kind: input, shape index: {}]
  %s17 = inlined_call_operand.hbm [shape: bf16[512,256], index: 17, kind: input, shape index: {}]
  %s18 = inlined_call_operand.vmem [shape: f32[1,256], index: 18, kind: input, shape index: {}]
  %s19 = inlined_call_operand.vmem [shape: bf16[256,4], index: 19, kind: input, shape index: {}]
  %s20 = inlined_call_operand.vmem [shape: f32[1,4], index: 20, kind: input, shape index: {}]
  %s21 = inlined_call_operand.vmem [shape: f32[8,4], index: 21, kind: output, shape index: {}]
  %s22 = sld [smem:[#allocation0]]
  $region134: #{tpu_custom_call.1} parent=0
    _
  %s24 = ssub.s32 1, %s22
  %s25 = scalar_select 0, %s24, %s22
  $region1: #{tpu_custom_call.1} parent=0
    #allocation4 [shape = 'u8[24576]{0}', space=vmem, size = 0x6000, scoped, tag = 'input window, operand 1, single buffered']
    #allocation5 [shape = 's32[1]{0}', space=sflag, size = 0x4, scoped, tag = 'scoped memory for tpu_custom_call.1']
    #allocation6 [shape = 'u8[16384]{0}', space=vmem, size = 0x4000, scoped, tag = 'input window, operand 2, single buffered']
    #allocation7 [shape = 's32[1]{0}', space=sflag, size = 0x4, scoped, tag = 'scoped memory for tpu_custom_call.1']
    #allocation8 [shape = 'u8[16384]{0}', space=vmem, size = 0x4000, scoped, tag = 'input window, operand 3, single buffered']
    #allocation9 [shape = 'u8[1024]{0}', space=vmem, size = 0x400, scoped, tag = 'input window, operand 5, single buffered']
    #allocation10 [shape = 's32[1]{0}', space=sflag, size = 0x4, scoped, tag = 'scoped memory for tpu_custom_call.1']
    #allocation11 [shape = 'u8[1024]{0}', space=vmem, size = 0x400, scoped, tag = 'input window, operand 10, single buffered']
    #allocation12 [shape = 'u8[512]{0}', space=vmem, size = 0x400, scoped, tag = 'input window, operand 11, single buffered']
    #allocation13 [shape = 's32[1]{0}', space=sflag, size = 0x4, scoped, tag = 'scoped memory for tpu_custom_call.1']
    #allocation14 [shape = 'u8[32768]{0}', space=vmem, size = 0x8000, scoped, tag = 'input window, operand 12, single buffered']
    #allocation15 [shape = 'u8[786432]{0}', space=vmem, size = 0xc0000, scoped, tag = 'input window, operand 14, single buffered']
    #allocation16 [shape = 's32[1]{0}', space=sflag, size = 0x4, scoped, tag = 'scoped memory for tpu_custom_call.1']
    #allocation17 [shape = 'u8[262144]{0}', space=vmem, size = 0x40000, scoped, tag = 'input window, operand 15, single buffered']
    #allocation18 [shape = 'u8[262144]{0}', space=vmem, size = 0x40000, scoped, tag = 'input window, operand 17, single buffered']
    #allocation19 [shape = 's32[1]{0}', space=sflag, size = 0x4, scoped, tag = 'scoped memory for tpu_custom_call.1']
    %26 = vsyncpa [#allocation5], 0
    %27 = vsyncpa [#allocation7], 0
    %28 = vsyncpa [#allocation10], 0
    %29 = vsyncpa [#allocation13], 0
    %30 = vsyncpa [#allocation16], 0
    %31 = vsyncpa [#allocation19], 0
    // Predicated region
    $region2: #{tpu_custom_call.1} parent=1 // pred_check
      _
    $region3: #{tpu_custom_call.1} parent=1 // pred_check_branch
      %33 = sbr.rel (0) target = $region5
    $region4: #{tpu_custom_call.1} parent=1 // pred_region
      _
    $region5: #{tpu_custom_call.1} parent=1 // pred_fallthru
      _
    // Predicated region
    $region6: #{tpu_custom_call.1} parent=1 // pred_check
      _
    $region7: #{tpu_custom_call.1} parent=1 // pred_check_branch
      %35 = sbr.rel (0) target = $region9
    $region8: #{tpu_custom_call.1} parent=1 // pred_region
      %s37 = ssub.s32 768, 768
      %38 = vsyncadd [#allocation5], %s37
      %s40 = sshll.u32 [#allocation4], 4
      %s41 = int_to_ptr.vmem [resolvable:$true] %s40
      %43 = dma.hbm_to_vmem [thread:$0]  %s1, 768, %s41, [#allocation5]
    $region9: #{tpu_custom_call.1} parent=1 // pred_fallthru
      _
    // Predicated region
    $region10: #{tpu_custom_call.1} parent=1 // pred_check
      _
    $region11: #{tpu_custom_call.1} parent=1 // pred_check_branch
      %45 = sbr.rel (0) target = $region13
    $region12: #{tpu_custom_call.1} parent=1 // pred_region
      %s47 = ssub.s32 512, 512
      %48 = vsyncadd [#allocation7], %s47
      %s49 = sshll.u32 [#allocation6], 4
      %s50 = int_to_ptr.vmem [resolvable:$true] %s49
      %55 = dma.hbm_to_vmem [thread:$0]  %s2, 512, %s50, [#allocation7], 128, 128, 8
    $region13: #{tpu_custom_call.1} parent=1 // pred_fallthru
      _
    // Predicated region
    $region14: #{tpu_custom_call.1} parent=1 // pred_check
      _
    $region15: #{tpu_custom_call.1} parent=1 // pred_check_branch
      %57 = sbr.rel (0) target = $region17
    $region16: #{tpu_custom_call.1} parent=1 // pred_region
      %s59 = ssub.s32 512, 512
      %60 = vsyncadd [#allocation7], %s59
      %s61 = sshll.u32 [#allocation8], 4
      %s62 = int_to_ptr.vmem [resolvable:$true] %s61
      %67 = dma.hbm_to_vmem [thread:$0]  %s3, 512, %s62, [#allocation7], 128, 128, 8
    $region17: #{tpu_custom_call.1} parent=1 // pred_fallthru
      _
    // Predicated region
    $region18: #{tpu_custom_call.1} parent=1 // pred_check
      _
    $region19: #{tpu_custom_call.1} parent=1 // pred_check_branch
      %69 = sbr.rel (0) target = $region21
    $region20: #{tpu_custom_call.1} parent=1 // pred_region
      _
    $region21: #{tpu_custom_call.1} parent=1 // pred_fallthru
      _
    // Predicated region
    $region22: #{tpu_custom_call.1} parent=1 // pred_check
      _
    $region23: #{tpu_custom_call.1} parent=1 // pred_check_branch
      %71 = sbr.rel (0) target = $region25
    $region24: #{tpu_custom_call.1} parent=1 // pred_region
      %s73 = ssub.s32 32, 32
      %74 = vsyncadd [#allocation10], %s73
      %s76 = sshll.u32 [#allocation9], 4
      %s77 = int_to_ptr.vmem [resolvable:$true] %s76
      %79 = dma.hbm_to_vmem [thread:$0]  %s5, 32, %s77, [#allocation10]
    $region25: #{tpu_custom_call.1} parent=1 // pred_fallthru
      _
    // Predicated region
    $region26: #{tpu_custom_call.1} parent=1 // pred_check
      _
    $region27: #{tpu_custom_call.1} parent=1 // pred_check_branch
      %81 = sbr.rel (0) target = $region29
    $region28: #{tpu_custom_call.1} parent=1 // pred_region
      _
    $region29: #{tpu_custom_call.1} parent=1 // pred_fallthru
      _
    // Predicated region
    $region30: #{tpu_custom_call.1} parent=1 // pred_check
      _
    $region31: #{tpu_custom_call.1} parent=1 // pred_check_branch
      %83 = sbr.rel (0) target = $region33
    $region32: #{tpu_custom_call.1} parent=1 // pred_region
      _
    $region33: #{tpu_custom_call.1} parent=1 // pred_fallthru
      _
    // Predicated region
    $region34: #{tpu_custom_call.1} parent=1 // pred_check
      _
    $region35: #{tpu_custom_call.1} parent=1 // pred_check_branch
      %85 = sbr.rel (0) target = $region37
    $region36: #{tpu_custom_call.1} parent=1 // pred_region
      _
    $region37: #{tpu_custom_call.1} parent=1 // pred_fallthru
      _
    // Predicated region
    $region38: #{tpu_custom_call.1} parent=1 // pred_check
      _
    $region39: #{tpu_custom_call.1} parent=1 // pred_check_branch
      %87 = sbr.rel (0) target = $region41
    $region40: #{tpu_custom_call.1} parent=1 // pred_region
      _
    $region41: #{tpu_custom_call.1} parent=1 // pred_fallthru
      _
    // Predicated region
    $region42: #{tpu_custom_call.1} parent=1 // pred_check
      _
    $region43: #{tpu_custom_call.1} parent=1 // pred_check_branch
      %89 = sbr.rel (0) target = $region45
    $region44: #{tpu_custom_call.1} parent=1 // pred_region
      %s91 = ssub.s32 32, 32
      %92 = vsyncadd [#allocation10], %s91
      %s94 = sshll.u32 [#allocation11], 4
      %s95 = int_to_ptr.vmem [resolvable:$true] %s94
      %97 = dma.hbm_to_vmem [thread:$0]  %s10, 32, %s95, [#allocation10]
    $region45: #{tpu_custom_call.1} parent=1 // pred_fallthru
      _
    // Predicated region
    $region46: #{tpu_custom_call.1} parent=1 // pred_check
      _
    $region47: #{tpu_custom_call.1} parent=1 // pred_check_branch
      %99 = sbr.rel (0) target = $region49
    $region48: #{tpu_custom_call.1} parent=1 // pred_region
      %s101 = ssub.s32 16, 16
      %102 = vsyncadd [#allocation13], %s101
      %s104 = sshll.u32 [#allocation12], 4
      %s105 = int_to_ptr.vmem [resolvable:$true] %s104
      %107 = dma.hbm_to_vmem [thread:$0]  %s11, 16, %s105, [#allocation13]
    $region49: #{tpu_custom_call.1} parent=1 // pred_fallthru
      _
    // Predicated region
    $region50: #{tpu_custom_call.1} parent=1 // pred_check
      _
    $region51: #{tpu_custom_call.1} parent=1 // pred_check_branch
      %109 = sbr.rel (0) target = $region53
    $region52: #{tpu_custom_call.1} parent=1 // pred_region
      %s111 = ssub.s32 1024, 1024
      %112 = vsyncadd [#allocation13], %s111
      %s113 = sshll.u32 [#allocation14], 4
      %s114 = int_to_ptr.vmem [resolvable:$true] %s113
      %119 = dma.hbm_to_vmem [thread:$0]  %s12, 1024, %s114, [#allocation13], 128, 128, 8
    $region53: #{tpu_custom_call.1} parent=1 // pred_fallthru
      _
    // Predicated region
    $region54: #{tpu_custom_call.1} parent=1 // pred_check
      _
    $region55: #{tpu_custom_call.1} parent=1 // pred_check_branch
      %121 = sbr.rel (0) target = $region57
    $region56: #{tpu_custom_call.1} parent=1 // pred_region
      _
    $region57: #{tpu_custom_call.1} parent=1 // pred_fallthru
      _
    // Predicated region
    $region58: #{tpu_custom_call.1} parent=1 // pred_check
      _
    $region59: #{tpu_custom_call.1} parent=1 // pred_check_branch
      %123 = sbr.rel (0) target = $region61
    $region60: #{tpu_custom_call.1} parent=1 // pred_region
      %s125 = ssub.s32 24576, 24576
      %126 = vsyncadd [#allocation16], %s125
      %s127 = sshll.u32 [#allocation15], 4
      %s128 = int_to_ptr.vmem [resolvable:$true] %s127
      %133 = dma.hbm_to_vmem [thread:$0]  %s14, 24576, %s128, [#allocation16], 256, 256, 16
    $region61: #{tpu_custom_call.1} parent=1 // pred_fallthru
      _
    // Predicated region
    $region62: #{tpu_custom_call.1} parent=1 // pred_check
      _
    $region63: #{tpu_custom_call.1} parent=1 // pred_check_branch
      %135 = sbr.rel (0) target = $region65
    $region64: #{tpu_custom_call.1} parent=1 // pred_region
      %s137 = ssub.s32 8192, 8192
      %138 = vsyncadd [#allocation16], %s137
      %s139 = sshll.u32 [#allocation17], 4
      %s140 = int_to_ptr.vmem [resolvable:$true] %s139
      %145 = dma.hbm_to_vmem [thread:$0]  %s15, 8192, %s140, [#allocation16], 256, 256, 16
    $region65: #{tpu_custom_call.1} parent=1 // pred_fallthru
      _
    // Predicated region
    $region66: #{tpu_custom_call.1} parent=1 // pred_check
      _
    $region67: #{tpu_custom_call.1} parent=1 // pred_check_branch
      %147 = sbr.rel (0) target = $region69
    $region68: #{tpu_custom_call.1} parent=1 // pred_region
      _
    $region69: #{tpu_custom_call.1} parent=1 // pred_fallthru
      _
    // Predicated region
    $region70: #{tpu_custom_call.1} parent=1 // pred_check
      _
    $region71: #{tpu_custom_call.1} parent=1 // pred_check_branch
      %149 = sbr.rel (0) target = $region73
    $region72: #{tpu_custom_call.1} parent=1 // pred_region
      %s151 = ssub.s32 8192, 8192
      %152 = vsyncadd [#allocation19], %s151
      %s153 = sshll.u32 [#allocation18], 4
      %s154 = int_to_ptr.vmem [resolvable:$true] %s153
      %159 = dma.hbm_to_vmem [thread:$0]  %s17, 8192, %s154, [#allocation19], 128, 128, 8
    $region73: #{tpu_custom_call.1} parent=1 // pred_fallthru
      _
    // Predicated region
    $region74: #{tpu_custom_call.1} parent=1 // pred_check
      _
    $region75: #{tpu_custom_call.1} parent=1 // pred_check_branch
      %161 = sbr.rel (0) target = $region77
    $region76: #{tpu_custom_call.1} parent=1 // pred_region
      _
    $region77: #{tpu_custom_call.1} parent=1 // pred_fallthru
      _
    // Predicated region
    $region78: #{tpu_custom_call.1} parent=1 // pred_check
      _
    $region79: #{tpu_custom_call.1} parent=1 // pred_check_branch
      %163 = sbr.rel (0) target = $region81
    $region80: #{tpu_custom_call.1} parent=1 // pred_region
      _
    $region81: #{tpu_custom_call.1} parent=1 // pred_fallthru
      _
    // Predicated region
    $region82: #{tpu_custom_call.1} parent=1 // pred_check
      _
    $region83: #{tpu_custom_call.1} parent=1 // pred_check_branch
      %165 = sbr.rel (0) target = $region85
    $region84: #{tpu_custom_call.1} parent=1 // pred_region
      _
    $region85: #{tpu_custom_call.1} parent=1 // pred_fallthru
      _
    // Predicated region
    $region86: #{tpu_custom_call.1} parent=1 // pred_check
      _
    $region87: #{tpu_custom_call.1} parent=1 // pred_check_branch
      %167 = sbr.rel (0) target = $region89
    $region88: #{tpu_custom_call.1} parent=1 // pred_region
      %168 = dma.done [#allocation5], 768
    $region89: #{tpu_custom_call.1} parent=1 // pred_fallthru
      _
    // Predicated region
    $region90: #{tpu_custom_call.1} parent=1 // pred_check
      _
    $region91: #{tpu_custom_call.1} parent=1 // pred_check_branch
      %170 = sbr.rel (0) target = $region93
    $region92: #{tpu_custom_call.1} parent=1 // pred_region
      %171 = dma.done [#allocation7], 512
    $region93: #{tpu_custom_call.1} parent=1 // pred_fallthru
      _
    // Predicated region
    $region94: #{tpu_custom_call.1} parent=1 // pred_check
      _
    $region95: #{tpu_custom_call.1} parent=1 // pred_check_branch
      %173 = sbr.rel (0) target = $region97
    $region96: #{tpu_custom_call.1} parent=1 // pred_region
      %174 = dma.done [#allocation7], 512
    $region97: #{tpu_custom_call.1} parent=1 // pred_fallthru
      _
    // Predicated region
    $region98: #{tpu_custom_call.1} parent=1 // pred_check
      _
    $region99: #{tpu_custom_call.1} parent=1 // pred_check_branch
      %176 = sbr.rel (0) target = $region101
    $region100: #{tpu_custom_call.1} parent=1 // pred_region
      %177 = dma.done [#allocation10], 32
    $region101: #{tpu_custom_call.1} parent=1 // pred_fallthru
      _
    // Predicated region
    $region102: #{tpu_custom_call.1} parent=1 // pred_check
      _
    $region103: #{tpu_custom_call.1} parent=1 // pred_check_branch
      %179 = sbr.rel (0) target = $region105
    $region104: #{tpu_custom_call.1} parent=1 // pred_region
      %180 = dma.done [#allocation10], 32
    $region105: #{tpu_custom_call.1} parent=1 // pred_fallthru
      _
    // Predicated region
    $region106: #{tpu_custom_call.1} parent=1 // pred_check
      _
    $region107: #{tpu_custom_call.1} parent=1 // pred_check_branch
      %182 = sbr.rel (0) target = $region109
    $region108: #{tpu_custom_call.1} parent=1 // pred_region
      %183 = dma.done [#allocation13], 16
    $region109: #{tpu_custom_call.1} parent=1 // pred_fallthru
      _
    // Predicated region
    $region110: #{tpu_custom_call.1} parent=1 // pred_check
      _
    $region111: #{tpu_custom_call.1} parent=1 // pred_check_branch
      %185 = sbr.rel (0) target = $region113
    $region112: #{tpu_custom_call.1} parent=1 // pred_region
      %186 = dma.done [#allocation13], 1024
    $region113: #{tpu_custom_call.1} parent=1 // pred_fallthru
      _
    // Predicated region
    $region114: #{tpu_custom_call.1} parent=1 // pred_check
      _
    $region115: #{tpu_custom_call.1} parent=1 // pred_check_branch
      %188 = sbr.rel (0) target = $region117
    $region116: #{tpu_custom_call.1} parent=1 // pred_region
      %189 = dma.done [#allocation16], 24576
    $region117: #{tpu_custom_call.1} parent=1 // pred_fallthru
      _
    // Predicated region
    $region118: #{tpu_custom_call.1} parent=1 // pred_check
      _
    $region119: #{tpu_custom_call.1} parent=1 // pred_check_branch
      %191 = sbr.rel (0) target = $region121
    $region120: #{tpu_custom_call.1} parent=1 // pred_region
      %192 = dma.done [#allocation16], 8192
    $region121: #{tpu_custom_call.1} parent=1 // pred_fallthru
      _
    // Predicated region
    $region122: #{tpu_custom_call.1} parent=1 // pred_check
      _
    $region123: #{tpu_custom_call.1} parent=1 // pred_check_branch
      %194 = sbr.rel (0) target = $region125
    $region124: #{tpu_custom_call.1} parent=1 // pred_region
      %195 = dma.done [#allocation19], 8192
    $region125: #{tpu_custom_call.1} parent=1 // pred_fallthru
      _
    %v197 = vld [vmem:[%s0] sm:$0xff]
    %v198 = vld [vmem:[%s0 + $0x8] sm:$0xff]
    %v199 = vld [vmem:[%s0 + $0x10] sm:$0xff]
    %v200 = vld [vmem:[%s0 + $0x18] sm:$0xff]
    %v201 = vld [vmem:[%s0 + $0x20] sm:$0xff]
    %v202 = vld [vmem:[%s0 + $0x28] sm:$0xff]
    %v203 = vld [vmem:[%s0 + $0x30] sm:$0xff]
    %v204 = vld [vmem:[%s0 + $0x38] sm:$0xff]
    %v205 = vpack.c.bf16 %v198, %v197
    %v206 = vpack.c.bf16 %v200, %v199
    %v207 = vpack.c.bf16 %v202, %v201
    %v208 = vpack.c.bf16 %v204, %v203
    %v209 = vld [vmem:[%s4] sm:$0xff]
    %v210 = vld [vmem:[%s4 + $0x8] sm:$0xff]
    %v211 = vld [vmem:[%s4 + $0x10] sm:$0xff]
    %v212 = vld [vmem:[%s4 + $0x18] sm:$0xff]
    %v213 = vld [vmem:[%s4 + $0x20] sm:$0xff]
    %v214 = vld [vmem:[%s4 + $0x28] sm:$0xff]
    %v215 = vld [vmem:[%s4 + $0x30] sm:$0xff]
    %v216 = vld [vmem:[%s4 + $0x38] sm:$0xff]
    %v217 = vld [vmem:[#allocation9] sm:$0x3]
    %v218 = vld [vmem:[%s6] sm:$0x1]
    %v220 = vlaneseq
    %v221 = vshrl.u32 %v220, 7
    %v222 = vsub.s32 0, %v221
    %v223 = vrot.slane %v218, %v222
    %v225 = vld [vmem:[#allocation6] sm:$0xff]
    %v226 = vld [vmem:[#allocation6 + $0x8] sm:$0xff]
    %v227 = vld [vmem:[#allocation6 + $0x10] sm:$0xff]
    %v228 = vld [vmem:[#allocation6 + $0x18] sm:$0xff]
    %v230 = vlaneseq
    %v231 = vshrl.u32 %v230, 7
    %v232 = vsub.s32 0, %v231
    %v233 = vrot.slane %v217, %v232
    %v234 = vlaneseq
    %v235 = vshrl.u32 %v234, 7
    %v236 = vsub.s32 1, %v235
    %v237 = vrot.slane %v217, %v236
    %v244 = vunpack.c.l.b16 %v225
    %v245 = vunpack.c.h.b16 %v225
    %v246 = vunpack.c.l.b16 %v226
    %v247 = vunpack.c.h.b16 %v226
    %v248 = vunpack.c.l.b16 %v227
    %v249 = vunpack.c.h.b16 %v227
    %v250 = vunpack.c.l.b16 %v228
    %v251 = vunpack.c.h.b16 %v228
    %v252 = vpack.c.b16 %v246, %v244
    %v253 = vpack.c.b16 %v247, %v245
    %v254 = vpack.c.b16 %v250, %v248
    %v255 = vpack.c.b16 %v251, %v249
    %vm260 = vcmask 261120
    %v262 = vsel %vm260, %v205, 0
    %v265 = vsel %vm260, %v206, 0
    %v268 = vsel %vm260, %v207, 0
    %v271 = vsel %vm260, %v208, 0
    %273 = vmatprep.subr.bf16.mxu0 %v253
    %274 = vmatpush1.bf16.msra.mxu0 %v252
    %275 = vmatprep.subr.bf16.mxu0 %v255
    %276 = vmatpush1.bf16.msra.mxu0 %v254
    %277 = vmatprep.subr.bf16.mxu0 0
    %278 = vmatpush1.bf16.msra.mxu0 0
    %279 = vmatprep.subr.bf16.mxu0 0
    %280 = vmatpush1.bf16.msra.mxu0 0
    %281 = vmatprep.subr.bf16.mxu0 0
    %282 = vmatpush1.bf16.msra.mxu0 0
    %283 = vmatprep.subr.bf16.mxu0 0
    %284 = vmatpush1.bf16.msra.mxu0 0
    %285 = vmatprep.subr.bf16.mxu0 0
    %286 = vmatpush1.bf16.msra.mxu0 0
    %287 = vmatprep.subr.bf16.mxu0 0
    %288 = vmatpush1.bf16.msra.mxu0 0
    %289 = vmatprep.subr.bf16.mxu0 0
    %290 = vmatpush1.bf16.msra.mxu0 0
    %291 = vmatprep.subr.bf16.mxu0 0
    %292 = vmatpush1.bf16.msra.mxu0 0
    %293 = vmatprep.subr.bf16.mxu0 0
    %294 = vmatpush1.bf16.msra.mxu0 0
    %295 = vmatprep.subr.bf16.mxu0 0
    %296 = vmatpush1.bf16.msra.mxu0 0
    %297 = vmatprep.subr.bf16.mxu0 0
    %298 = vmatpush1.bf16.msra.mxu0 0
    %299 = vmatprep.subr.bf16.mxu0 0
    %300 = vmatpush1.bf16.msra.mxu0 0
    %301 = vmatprep.subr.bf16.mxu0 0
    %302 = vmatpush1.bf16.msra.mxu0 0
    %303 = vmatprep.subr.bf16.mxu0 0
    %304 = vmatpush1.bf16.msra.mxu0 0
    %305 = vmatprep.mubr.bf16.mxu0 0
    %306 = vmatmul.mubr.bf16.gmra.mrb[0].mxu0 %v262
    %v307 = vpop.f32.mrb[0].mxu0
    %v308 = vadd.f32 %v233, %v307
    %v309 = vpop.f32.mrb[0].mxu0
    %v310 = vadd.f32 %v237, %v309
    %v311 = vpop.f32.mrb[0].mxu0
    %v312 = vadd.f32 %v233, %v311
    %v313 = vpop.f32.mrb[0].mxu0
    %v314 = vadd.f32 %v237, %v313
    %315 = vmatprep.mubr.bf16.mxu0 0
    %316 = vmatmul.mubr.bf16.gmra.mrb[0].mxu0 %v265
    %v317 = vpop.f32.mrb[0].mxu0
    %v318 = vadd.f32 %v233, %v317
    %v319 = vpop.f32.mrb[0].mxu0
    %v320 = vadd.f32 %v237, %v319
    %v321 = vpop.f32.mrb[0].mxu0
    %v322 = vadd.f32 %v233, %v321
    %v323 = vpop.f32.mrb[0].mxu0
    %v324 = vadd.f32 %v237, %v323
    %325 = vmatprep.mubr.bf16.mxu0 0
    %326 = vmatmul.mubr.bf16.gmra.mrb[0].mxu0 %v268
    %v327 = vpop.f32.mrb[0].mxu0
    %v328 = vadd.f32 %v233, %v327
    %v329 = vpop.f32.mrb[0].mxu0
    %v330 = vadd.f32 %v237, %v329
    %v331 = vpop.f32.mrb[0].mxu0
    %v332 = vadd.f32 %v233, %v331
    %v333 = vpop.f32.mrb[0].mxu0
    %v334 = vadd.f32 %v237, %v333
    %335 = vmatprep.mubr.bf16.mxu0 0
    %336 = vmatmul.mubr.bf16.gmra.mrb[0].mxu0 %v271
    %v337 = vpop.f32.mrb[0].mxu0
    %v338 = vadd.f32 %v233, %v337
    %v339 = vpop.f32.mrb[0].mxu0
    %v340 = vadd.f32 %v237, %v339
    %v341 = vpop.f32.mrb[0].mxu0
    %v342 = vadd.f32 %v233, %v341
    %v343 = vpop.f32.mrb[0].mxu0
    %v344 = vadd.f32 %v237, %v343
    %345 = vdwg.mxu0
    %v346 = vld [vmem:[#allocation8] sm:$0xff]
    %v347 = vld [vmem:[#allocation8 + $0x8] sm:$0xff]
    %v348 = vld [vmem:[#allocation8 + $0x10] sm:$0xff]
    %v349 = vld [vmem:[#allocation8 + $0x18] sm:$0xff]
    %v354 = vunpack.c.l.b16 %v346
    %v355 = vunpack.c.h.b16 %v346
    %v356 = vunpack.c.l.b16 %v347
    %v357 = vunpack.c.h.b16 %v347
    %v358 = vunpack.c.l.b16 %v348
    %v359 = vunpack.c.h.b16 %v348
    %v360 = vunpack.c.l.b16 %v349
    %v361 = vunpack.c.h.b16 %v349
    %v362 = vpack.c.b16 %v356, %v354
    %v363 = vpack.c.b16 %v357, %v355
    %v364 = vpack.c.b16 %v360, %v358
    %v365 = vpack.c.b16 %v361, %v359
    %370 = vmatprep.subr.bf16.mxu0 %v363
    %371 = vmatpush1.bf16.msra.mxu0 %v362
    %372 = vmatprep.subr.bf16.mxu0 %v365
    %373 = vmatpush1.bf16.msra.mxu0 %v364
    %374 = vmatprep.subr.bf16.mxu0 0
    %375 = vmatpush1.bf16.msra.mxu0 0
    %376 = vmatprep.subr.bf16.mxu0 0
    %377 = vmatpush1.bf16.msra.mxu0 0
    %378 = vmatprep.subr.bf16.mxu0 0
    %379 = vmatpush1.bf16.msra.mxu0 0
    %380 = vmatprep.subr.bf16.mxu0 0
    %381 = vmatpush1.bf16.msra.mxu0 0
    %382 = vmatprep.subr.bf16.mxu0 0
    %383 = vmatpush1.bf16.msra.mxu0 0
    %384 = vmatprep.subr.bf16.mxu0 0
    %385 = vmatpush1.bf16.msra.mxu0 0
    %386 = vmatprep.subr.bf16.mxu0 0
    %387 = vmatpush1.bf16.msra.mxu0 0
    %388 = vmatprep.subr.bf16.mxu0 0
    %389 = vmatpush1.bf16.msra.mxu0 0
    %390 = vmatprep.subr.bf16.mxu0 0
    %391 = vmatpush1.bf16.msra.mxu0 0
    %392 = vmatprep.subr.bf16.mxu0 0
    %393 = vmatpush1.bf16.msra.mxu0 0
    %394 = vmatprep.subr.bf16.mxu0 0
    %395 = vmatpush1.bf16.msra.mxu0 0
    %396 = vmatprep.subr.bf16.mxu0 0
    %397 = vmatpush1.bf16.msra.mxu0 0
    %398 = vmatprep.subr.bf16.mxu0 0
    %399 = vmatpush1.bf16.msra.mxu0 0
    %400 = vmatprep.subr.bf16.mxu0 0
    %401 = vmatpush1.bf16.msra.mxu0 0
    %402 = vmatprep.mubr.bf16.mxu0 0
    %403 = vmatmul.mubr.bf16.gmra.mrb[0].mxu0 %v262
    %v404 = vpop.f32.mrb[0].mxu0
    %v405 = vadd.f32 0.0, %v404
    %v406 = vpop.f32.mrb[0].mxu0
    %v407 = vadd.f32 0.0, %v406
    %v408 = vpop.f32.mrb[0].mxu0
    %v409 = vadd.f32 0.0, %v408
    %v410 = vpop.f32.mrb[0].mxu0
    %v411 = vadd.f32 0.0, %v410
    %412 = vmatprep.mubr.bf16.mxu0 0
    %413 = vmatmul.mubr.bf16.gmra.mrb[0].mxu0 %v265
    %v414 = vpop.f32.mrb[0].mxu0
    %v415 = vadd.f32 0.0, %v414
    %v416 = vpop.f32.mrb[0].mxu0
    %v417 = vadd.f32 0.0, %v416
    %v418 = vpop.f32.mrb[0].mxu0
    %v419 = vadd.f32 0.0, %v418
    %v420 = vpop.f32.mrb[0].mxu0
    %v421 = vadd.f32 0.0, %v420
    %422 = vmatprep.mubr.bf16.mxu0 0
    %423 = vmatmul.mubr.bf16.gmra.mrb[0].mxu0 %v268
    %v424 = vpop.f32.mrb[0].mxu0
    %v425 = vadd.f32 0.0, %v424
    %v426 = vpop.f32.mrb[0].mxu0
    %v427 = vadd.f32 0.0, %v426
    %v428 = vpop.f32.mrb[0].mxu0
    %v429 = vadd.f32 0.0, %v428
    %v430 = vpop.f32.mrb[0].mxu0
    %v431 = vadd.f32 0.0, %v430
    %432 = vmatprep.mubr.bf16.mxu0 0
    %433 = vmatmul.mubr.bf16.gmra.mrb[0].mxu0 %v271
    %v434 = vpop.f32.mrb[0].mxu0
    %v435 = vadd.f32 0.0, %v434
    %v436 = vpop.f32.mrb[0].mxu0
    %v437 = vadd.f32 0.0, %v436
    %v438 = vpop.f32.mrb[0].mxu0
    %v439 = vadd.f32 0.0, %v438
    %v440 = vpop.f32.mrb[0].mxu0
    %v441 = vadd.f32 0.0, %v440
    %442 = vdwg.mxu0
    %v443 = vadd.f32 %v308, %v439
    %v444 = vadd.f32 %v310, %v441
    %v453 = vunpack.c.l.b16 %v209
    %v454 = vunpack.c.h.b16 %v209
    %v455 = vunpack.c.l.b16 %v210
    %v456 = vunpack.c.h.b16 %v210
    %v457 = vunpack.c.l.b16 %v211
    %v458 = vunpack.c.h.b16 %v211
    %v459 = vunpack.c.l.b16 %v212
    %v460 = vunpack.c.h.b16 %v212
    %v461 = vunpack.c.l.b16 %v213
    %v462 = vunpack.c.h.b16 %v213
    %v463 = vunpack.c.l.b16 %v214
    %v464 = vunpack.c.h.b16 %v214
    %v465 = vunpack.c.l.b16 %v215
    %v466 = vunpack.c.h.b16 %v215
    %v467 = vunpack.c.l.b16 %v216
    %v468 = vunpack.c.h.b16 %v216
    %v469 = vpack.c.b16 %v455, %v453
    %v470 = vpack.c.b16 %v456, %v454
    %v471 = vpack.c.b16 %v459, %v457
    %v472 = vpack.c.b16 %v460, %v458
    %v473 = vpack.c.b16 %v463, %v461
    %v474 = vpack.c.b16 %v464, %v462
    %v475 = vpack.c.b16 %v467, %v465
    %v476 = vpack.c.b16 %v468, %v466
    %vm485 = vcmask 523264
    %v487 = vsel %vm485, 0, 0
    %489 = vmatprep.subr.bf16.mxu0 %v470
    %490 = vmatpush1.bf16.msra.mxu0 %v469
    %491 = vmatprep.subr.bf16.mxu0 %v472
    %492 = vmatpush1.bf16.msra.mxu0 %v471
    %493 = vmatprep.subr.bf16.mxu0 %v474
    %494 = vmatpush1.bf16.msra.mxu0 %v473
    %495 = vmatprep.subr.bf16.mxu0 %v476
    %496 = vmatpush1.bf16.msra.mxu0 %v475
    %497 = vmatprep.subr.bf16.mxu0 0
    %498 = vmatpush1.bf16.msra.mxu0 0
    %499 = vmatprep.subr.bf16.mxu0 0
    %500 = vmatpush1.bf16.msra.mxu0 0
    %501 = vmatprep.subr.bf16.mxu0 0
    %502 = vmatpush1.bf16.msra.mxu0 0
    %503 = vmatprep.subr.bf16.mxu0 0
    %504 = vmatpush1.bf16.msra.mxu0 0
    %505 = vmatprep.subr.bf16.mxu0 0
    %506 = vmatpush1.bf16.msra.mxu0 0
    %507 = vmatprep.subr.bf16.mxu0 0
    %508 = vmatpush1.bf16.msra.mxu0 0
    %509 = vmatprep.subr.bf16.mxu0 0
    %510 = vmatpush1.bf16.msra.mxu0 0
    %511 = vmatprep.subr.bf16.mxu0 0
    %512 = vmatpush1.bf16.msra.mxu0 0
    %513 = vmatprep.subr.bf16.mxu0 0
    %514 = vmatpush1.bf16.msra.mxu0 0
    %515 = vmatprep.subr.bf16.mxu0 0
    %516 = vmatpush1.bf16.msra.mxu0 0
    %517 = vmatprep.subr.bf16.mxu0 0
    %518 = vmatpush1.bf16.msra.mxu0 0
    %519 = vmatprep.subr.bf16.mxu0 0
    %520 = vmatpush1.bf16.msra.mxu0 0
    %521 = vmatprep.mubr.bf16.mxu0 0
    %522 = vmatmul.mubr.bf16.gmra.mrb[0].mxu0 %v487
    %v523 = vpop.f32.mrb[0].mxu0
    %v524 = vadd.f32 0.0, %v523
    %v525 = vpop.f32.mrb[0].mxu0
    %v526 = vadd.f32 0.0, %v525
    %v527 = vpop.f32.mrb[0].mxu0
    %v528 = vpop.f32.mrb[0].mxu0
    %529 = vdwg.mxu0
    %v530 = vadd.f32 %v443, %v524
    %v531 = vxor.u32 %v530, 2147483648
    %v532 = vmul.f32 %v531, 1.442695
    %v533 = vpow.pop %v532
    %v534 = vadd.f32 %v533, 1.0
    %v535 = vrcp.pop %v534
    %v536 = vmul.f32 1.0, %v535
    %v537 = vadd.f32 %v526, %v223
    %v538 = vmul.f32 %v536, %v537
    %v539 = vadd.f32 %v444, %v538
    %v540 = vtanh.pop %v539
    %v541 = vsub.f32 0.0, %v540
    %543 = vrot.lane.b32.xlu0 %v541, 64
    %v544 = vpop.permute.xlu0 %543
    %v546 = vmul.f32 %v536, %v544
    %548 = vrot.lane.b32.xlu0 %v540, 64
    %v549 = vpop.permute.xlu0 %548
    %v551 = vadd.f32 %v546, %v549
    %553 = vrot.lane.b32.xlu0 %v551, 64
    %v554 = vpop.permute.xlu0 %553
    %556 = vst.msk [vmem:[#allocation2] sm:$0xff] %vm260, %v554
    %557 = vrot.lane.b32.xlu0 %v551, 32
    %v558 = vpop.permute.xlu0 %557
    %560 = vst.msk [vmem:[#allocation3 + $0x38] sm:$0xff] %vm260, %v558
    %v561 = vadd.f32 %v312, %v435
    %v562 = vadd.f32 %v314, %v437
    %v563 = vpack.c.bf16 %v551, %v551
    %565 = vrot.lane.b32.xlu0 %v563, 64
    %v566 = vpop.permute.xlu0 %565
    %v568 = vsel %vm485, %v566, 0
    %570 = vmatprep.subr.bf16.mxu0 %v470
    %571 = vmatpush1.bf16.msra.mxu0 %v469
    %572 = vmatprep.subr.bf16.mxu0 %v472
    %573 = vmatpush1.bf16.msra.mxu0 %v471
    %574 = vmatprep.subr.bf16.mxu0 %v474
    %575 = vmatpush1.bf16.msra.mxu0 %v473
    %576 = vmatprep.subr.bf16.mxu0 %v476
    %577 = vmatpush1.bf16.msra.mxu0 %v475
    %578 = vmatprep.subr.bf16.mxu0 0
    %579 = vmatpush1.bf16.msra.mxu0 0
    %580 = vmatprep.subr.bf16.mxu0 0
    %581 = vmatpush1.bf16.msra.mxu0 0
    %582 = vmatprep.subr.bf16.mxu0 0
    %583 = vmatpush1.bf16.msra.mxu0 0
    %584 = vmatprep.subr.bf16.mxu0 0
    %585 = vmatpush1.bf16.msra.mxu0 0
    %586 = vmatprep.subr.bf16.mxu0 0
    %587 = vmatpush1.bf16.msra.mxu0 0
    %588 = vmatprep.subr.bf16.mxu0 0
    %589 = vmatpush1.bf16.msra.mxu0 0
    %590 = vmatprep.subr.bf16.mxu0 0
    %591 = vmatpush1.bf16.msra.mxu0 0
    %592 = vmatprep.subr.bf16.mxu0 0
    %593 = vmatpush1.bf16.msra.mxu0 0
    %594 = vmatprep.subr.bf16.mxu0 0
    %595 = vmatpush1.bf16.msra.mxu0 0
    %596 = vmatprep.subr.bf16.mxu0 0
    %597 = vmatpush1.bf16.msra.mxu0 0
    %598 = vmatprep.subr.bf16.mxu0 0
    %599 = vmatpush1.bf16.msra.mxu0 0
    %600 = vmatprep.subr.bf16.mxu0 0
    %601 = vmatpush1.bf16.msra.mxu0 0
    %602 = vmatprep.mubr.bf16.mxu0 0
    %603 = vmatmul.mubr.bf16.gmra.mrb[0].mxu0 %v568
    %v604 = vpop.f32.mrb[0].mxu0
    %v605 = vadd.f32 0.0, %v604
    %v606 = vpop.f32.mrb[0].mxu0
    %v607 = vadd.f32 0.0, %v606
    %v608 = vpop.f32.mrb[0].mxu0
    %v609 = vpop.f32.mrb[0].mxu0
    %610 = vdwg.mxu0
    %v611 = vadd.f32 %v561, %v605
    %v612 = vxor.u32 %v611, 2147483648
    %v613 = vmul.f32 %v612, 1.442695
    %v614 = vpow.pop %v613
    %v615 = vadd.f32 %v614, 1.0
    %v616 = vrcp.pop %v615
    %v617 = vmul.f32 1.0, %v616
    %v618 = vadd.f32 %v607, %v223
    %v619 = vmul.f32 %v617, %v618
    %v620 = vadd.f32 %v562, %v619
    %v621 = vtanh.pop %v620
    %623 = vrot.lane.b32.xlu0 %v621, 64
    %v624 = vpop.permute.xlu0 %623
    %v626 = vsub.f32 %v551, %v624
    %v627 = vmul.f32 %v617, %v626
    %v628 = vadd.f32 %v627, %v624
    %630 = vrot.lane.b32.xlu0 %v628, 64
    %v631 = vpop.permute.xlu0 %630
    %633 = vst.msk [vmem:[#allocation2 + $0x8] sm:$0xff] %vm260, %v631
    %634 = vrot.lane.b32.xlu0 %v628, 32
    %v635 = vpop.permute.xlu0 %634
    %637 = vst.msk [vmem:[#allocation3 + $0x30] sm:$0xff] %vm260, %v635
    %v638 = vadd.f32 %v318, %v429
    %v639 = vadd.f32 %v320, %v431
    %v640 = vpack.c.bf16 %v628, %v628
    %642 = vrot.lane.b32.xlu0 %v640, 64
    %v643 = vpop.permute.xlu0 %642
    %v645 = vsel %vm485, %v643, 0
    %647 = vmatprep.subr.bf16.mxu0 %v470
    %648 = vmatpush1.bf16.msra.mxu0 %v469
    %649 = vmatprep.subr.bf16.mxu0 %v472
    %650 = vmatpush1.bf16.msra.mxu0 %v471
    %651 = vmatprep.subr.bf16.mxu0 %v474
    %652 = vmatpush1.bf16.msra.mxu0 %v473
    %653 = vmatprep.subr.bf16.mxu0 %v476
    %654 = vmatpush1.bf16.msra.mxu0 %v475
    %655 = vmatprep.subr.bf16.mxu0 0
    %656 = vmatpush1.bf16.msra.mxu0 0
    %657 = vmatprep.subr.bf16.mxu0 0
    %658 = vmatpush1.bf16.msra.mxu0 0
    %659 = vmatprep.subr.bf16.mxu0 0
    %660 = vmatpush1.bf16.msra.mxu0 0
    %661 = vmatprep.subr.bf16.mxu0 0
    %662 = vmatpush1.bf16.msra.mxu0 0
    %663 = vmatprep.subr.bf16.mxu0 0
    %664 = vmatpush1.bf16.msra.mxu0 0
    %665 = vmatprep.subr.bf16.mxu0 0
    %666 = vmatpush1.bf16.msra.mxu0 0
    %667 = vmatprep.subr.bf16.mxu0 0
    %668 = vmatpush1.bf16.msra.mxu0 0
    %669 = vmatprep.subr.bf16.mxu0 0
    %670 = vmatpush1.bf16.msra.mxu0 0
    %671 = vmatprep.subr.bf16.mxu0 0
    %672 = vmatpush1.bf16.msra.mxu0 0
    %673 = vmatprep.subr.bf16.mxu0 0
    %674 = vmatpush1.bf16.msra.mxu0 0
    %675 = vmatprep.subr.bf16.mxu0 0
    %676 = vmatpush1.bf16.msra.mxu0 0
    %677 = vmatprep.subr.bf16.mxu0 0
    %678 = vmatpush1.bf16.msra.mxu0 0
    %679 = vmatprep.mubr.bf16.mxu0 0
    %680 = vmatmul.mubr.bf16.gmra.mrb[0].mxu0 %v645
    %v681 = vpop.f32.mrb[0].mxu0
    %v682 = vadd.f32 0.0, %v681
    %v683 = vpop.f32.mrb[0].mxu0
    %v684 = vadd.f32 0.0, %v683
    %v685 = vpop.f32.mrb[0].mxu0
    %v686 = vpop.f32.mrb[0].mxu0
    %687 = vdwg.mxu0
    %v688 = vadd.f32 %v638, %v682
    %v689 = vxor.u32 %v688, 2147483648
    %v690 = vmul.f32 %v689, 1.442695
    %v691 = vpow.pop %v690
    %v692 = vadd.f32 %v691, 1.0
    %v693 = vrcp.pop %v692
    %v694 = vmul.f32 1.0, %v693
    %v695 = vadd.f32 %v684, %v223
    %v696 = vmul.f32 %v694, %v695
    %v697 = vadd.f32 %v639, %v696
    %v698 = vtanh.pop %v697
    %700 = vrot.lane.b32.xlu0 %v698, 64
    %v701 = vpop.permute.xlu0 %700
    %v703 = vsub.f32 %v628, %v701
    %v704 = vmul.f32 %v694, %v703
    %v705 = vadd.f32 %v704, %v701
    %707 = vrot.lane.b32.xlu0 %v705, 64
    %v708 = vpop.permute.xlu0 %707
    %710 = vst.msk [vmem:[#allocation2 + $0x10] sm:$0xff] %vm260, %v708
    %711 = vrot.lane.b32.xlu0 %v705, 32
    %v712 = vpop.permute.xlu0 %711
    %714 = vst.msk [vmem:[#allocation3 + $0x28] sm:$0xff] %vm260, %v712
    %v715 = vadd.f32 %v322, %v425
    %v716 = vadd.f32 %v324, %v427
    %v717 = vpack.c.bf16 %v705, %v705
    %719 = vrot.lane.b32.xlu0 %v717, 64
    %v720 = vpop.permute.xlu0 %719
    %v722 = vsel %vm485, %v720, 0
    %724 = vmatprep.subr.bf16.mxu0 %v470
    %725 = vmatpush1.bf16.msra.mxu0 %v469
    %726 = vmatprep.subr.bf16.mxu0 %v472
    %727 = vmatpush1.bf16.msra.mxu0 %v471
    %728 = vmatprep.subr.bf16.mxu0 %v474
    %729 = vmatpush1.bf16.msra.mxu0 %v473
    %730 = vmatprep.subr.bf16.mxu0 %v476
    %731 = vmatpush1.bf16.msra.mxu0 %v475
    %732 = vmatprep.subr.bf16.mxu0 0
    %733 = vmatpush1.bf16.msra.mxu0 0
    %734 = vmatprep.subr.bf16.mxu0 0
    %735 = vmatpush1.bf16.msra.mxu0 0
    %736 = vmatprep.subr.bf16.mxu0 0
    %737 = vmatpush1.bf16.msra.mxu0 0
    %738 = vmatprep.subr.bf16.mxu0 0
    %739 = vmatpush1.bf16.msra.mxu0 0
    %740 = vmatprep.subr.bf16.mxu0 0
    %741 = vmatpush1.bf16.msra.mxu0 0
    %742 = vmatprep.subr.bf16.mxu0 0
    %743 = vmatpush1.bf16.msra.mxu0 0
    %744 = vmatprep.subr.bf16.mxu0 0
    %745 = vmatpush1.bf16.msra.mxu0 0
    %746 = vmatprep.subr.bf16.mxu0 0
    %747 = vmatpush1.bf16.msra.mxu0 0
    %748 = vmatprep.subr.bf16.mxu0 0
    %749 = vmatpush1.bf16.msra.mxu0 0
    %750 = vmatprep.subr.bf16.mxu0 0
    %751 = vmatpush1.bf16.msra.mxu0 0
    %752 = vmatprep.subr.bf16.mxu0 0
    %753 = vmatpush1.bf16.msra.mxu0 0
    %754 = vmatprep.subr.bf16.mxu0 0
    %755 = vmatpush1.bf16.msra.mxu0 0
    %756 = vmatprep.mubr.bf16.mxu0 0
    %757 = vmatmul.mubr.bf16.gmra.mrb[0].mxu0 %v722
    %v758 = vpop.f32.mrb[0].mxu0
    %v759 = vadd.f32 0.0, %v758
    %v760 = vpop.f32.mrb[0].mxu0
    %v761 = vadd.f32 0.0, %v760
    %v762 = vpop.f32.mrb[0].mxu0
    %v763 = vpop.f32.mrb[0].mxu0
    %764 = vdwg.mxu0
    %v765 = vadd.f32 %v715, %v759
    %v766 = vxor.u32 %v765, 2147483648
    %v767 = vmul.f32 %v766, 1.442695
    %v768 = vpow.pop %v767
    %v769 = vadd.f32 %v768, 1.0
    %v770 = vrcp.pop %v769
    %v771 = vmul.f32 1.0, %v770
    %v772 = vadd.f32 %v761, %v223
    %v773 = vmul.f32 %v771, %v772
    %v774 = vadd.f32 %v716, %v773
    %v775 = vtanh.pop %v774
    %777 = vrot.lane.b32.xlu0 %v775, 64
    %v778 = vpop.permute.xlu0 %777
    %v780 = vsub.f32 %v705, %v778
    %v781 = vmul.f32 %v771, %v780
    %v782 = vadd.f32 %v781, %v778
    %784 = vrot.lane.b32.xlu0 %v782, 64
    %v785 = vpop.permute.xlu0 %784
    %787 = vst.msk [vmem:[#allocation2 + $0x18] sm:$0xff] %vm260, %v785
    %788 = vrot.lane.b32.xlu0 %v782, 32
    %v789 = vpop.permute.xlu0 %788
    %791 = vst.msk [vmem:[#allocation3 + $0x20] sm:$0xff] %vm260, %v789
    %v792 = vadd.f32 %v328, %v419
    %v793 = vadd.f32 %v330, %v421
    %v794 = vpack.c.bf16 %v782, %v782
    %796 = vrot.lane.b32.xlu0 %v794, 64
    %v797 = vpop.permute.xlu0 %796
    %v799 = vsel %vm485, %v797, 0
    %801 = vmatprep.subr.bf16.mxu0 %v470
    %802 = vmatpush1.bf16.msra.mxu0 %v469
    %803 = vmatprep.subr.bf16.mxu0 %v472
    %804 = vmatpush1.bf16.msra.mxu0 %v471
    %805 = vmatprep.subr.bf16.mxu0 %v474
    %806 = vmatpush1.bf16.msra.mxu0 %v473
    %807 = vmatprep.subr.bf16.mxu0 %v476
    %808 = vmatpush1.bf16.msra.mxu0 %v475
    %809 = vmatprep.subr.bf16.mxu0 0
    %810 = vmatpush1.bf16.msra.mxu0 0
    %811 = vmatprep.subr.bf16.mxu0 0
    %812 = vmatpush1.bf16.msra.mxu0 0
    %813 = vmatprep.subr.bf16.mxu0 0
    %814 = vmatpush1.bf16.msra.mxu0 0
    %815 = vmatprep.subr.bf16.mxu0 0
    %816 = vmatpush1.bf16.msra.mxu0 0
    %817 = vmatprep.subr.bf16.mxu0 0
    %818 = vmatpush1.bf16.msra.mxu0 0
    %819 = vmatprep.subr.bf16.mxu0 0
    %820 = vmatpush1.bf16.msra.mxu0 0
    %821 = vmatprep.subr.bf16.mxu0 0
    %822 = vmatpush1.bf16.msra.mxu0 0
    %823 = vmatprep.subr.bf16.mxu0 0
    %824 = vmatpush1.bf16.msra.mxu0 0
    %825 = vmatprep.subr.bf16.mxu0 0
    %826 = vmatpush1.bf16.msra.mxu0 0
    %827 = vmatprep.subr.bf16.mxu0 0
    %828 = vmatpush1.bf16.msra.mxu0 0
    %829 = vmatprep.subr.bf16.mxu0 0
    %830 = vmatpush1.bf16.msra.mxu0 0
    %831 = vmatprep.subr.bf16.mxu0 0
    %832 = vmatpush1.bf16.msra.mxu0 0
    %833 = vmatprep.mubr.bf16.mxu0 0
    %834 = vmatmul.mubr.bf16.gmra.mrb[0].mxu0 %v799
    %v835 = vpop.f32.mrb[0].mxu0
    %v836 = vadd.f32 0.0, %v835
    %v837 = vpop.f32.mrb[0].mxu0
    %v838 = vadd.f32 0.0, %v837
    %v839 = vpop.f32.mrb[0].mxu0
    %v840 = vpop.f32.mrb[0].mxu0
    %841 = vdwg.mxu0
    %v842 = vadd.f32 %v792, %v836
    %v843 = vxor.u32 %v842, 2147483648
    %v844 = vmul.f32 %v843, 1.442695
    %v845 = vpow.pop %v844
    %v846 = vadd.f32 %v845, 1.0
    %v847 = vrcp.pop %v846
    %v848 = vmul.f32 1.0, %v847
    %v849 = vadd.f32 %v838, %v223
    %v850 = vmul.f32 %v848, %v849
    %v851 = vadd.f32 %v793, %v850
    %v852 = vtanh.pop %v851
    %854 = vrot.lane.b32.xlu0 %v852, 64
    %v855 = vpop.permute.xlu0 %854
    %v857 = vsub.f32 %v782, %v855
    %v858 = vmul.f32 %v848, %v857
    %v859 = vadd.f32 %v858, %v855
    %861 = vrot.lane.b32.xlu0 %v859, 64
    %v862 = vpop.permute.xlu0 %861
    %864 = vst.msk [vmem:[#allocation2 + $0x20] sm:$0xff] %vm260, %v862
    %865 = vrot.lane.b32.xlu0 %v859, 32
    %v866 = vpop.permute.xlu0 %865
    %868 = vst.msk [vmem:[#allocation3 + $0x18] sm:$0xff] %vm260, %v866
    %v869 = vadd.f32 %v332, %v415
    %v870 = vadd.f32 %v334, %v417
    %v871 = vpack.c.bf16 %v859, %v859
    %873 = vrot.lane.b32.xlu0 %v871, 64
    %v874 = vpop.permute.xlu0 %873
    %v876 = vsel %vm485, %v874, 0
    %878 = vmatprep.subr.bf16.mxu0 %v470
    %879 = vmatpush1.bf16.msra.mxu0 %v469
    %880 = vmatprep.subr.bf16.mxu0 %v472
    %881 = vmatpush1.bf16.msra.mxu0 %v471
    %882 = vmatprep.subr.bf16.mxu0 %v474
    %883 = vmatpush1.bf16.msra.mxu0 %v473
    %884 = vmatprep.subr.bf16.mxu0 %v476
    %885 = vmatpush1.bf16.msra.mxu0 %v475
    %886 = vmatprep.subr.bf16.mxu0 0
    %887 = vmatpush1.bf16.msra.mxu0 0
    %888 = vmatprep.subr.bf16.mxu0 0
    %889 = vmatpush1.bf16.msra.mxu0 0
    %890 = vmatprep.subr.bf16.mxu0 0
    %891 = vmatpush1.bf16.msra.mxu0 0
    %892 = vmatprep.subr.bf16.mxu0 0
    %893 = vmatpush1.bf16.msra.mxu0 0
    %894 = vmatprep.subr.bf16.mxu0 0
    %895 = vmatpush1.bf16.msra.mxu0 0
    %896 = vmatprep.subr.bf16.mxu0 0
    %897 = vmatpush1.bf16.msra.mxu0 0
    %898 = vmatprep.subr.bf16.mxu0 0
    %899 = vmatpush1.bf16.msra.mxu0 0
    %900 = vmatprep.subr.bf16.mxu0 0
    %901 = vmatpush1.bf16.msra.mxu0 0
    %902 = vmatprep.subr.bf16.mxu0 0
    %903 = vmatpush1.bf16.msra.mxu0 0
    %904 = vmatprep.subr.bf16.mxu0 0
    %905 = vmatpush1.bf16.msra.mxu0 0
    %906 = vmatprep.subr.bf16.mxu0 0
    %907 = vmatpush1.bf16.msra.mxu0 0
    %908 = vmatprep.subr.bf16.mxu0 0
    %909 = vmatpush1.bf16.msra.mxu0 0
    %910 = vmatprep.mubr.bf16.mxu0 0
    %911 = vmatmul.mubr.bf16.gmra.mrb[0].mxu0 %v876
    %v912 = vpop.f32.mrb[0].mxu0
    %v913 = vadd.f32 0.0, %v912
    %v914 = vpop.f32.mrb[0].mxu0
    %v915 = vadd.f32 0.0, %v914
    %v916 = vpop.f32.mrb[0].mxu0
    %v917 = vpop.f32.mrb[0].mxu0
    %918 = vdwg.mxu0
    %v919 = vadd.f32 %v869, %v913
    %v920 = vxor.u32 %v919, 2147483648
    %v921 = vmul.f32 %v920, 1.442695
    %v922 = vpow.pop %v921
    %v923 = vadd.f32 %v922, 1.0
    %v924 = vrcp.pop %v923
    %v925 = vmul.f32 1.0, %v924
    %v926 = vadd.f32 %v915, %v223
    %v927 = vmul.f32 %v925, %v926
    %v928 = vadd.f32 %v870, %v927
    %v929 = vtanh.pop %v928
    %931 = vrot.lane.b32.xlu0 %v929, 64
    %v932 = vpop.permute.xlu0 %931
    %v934 = vsub.f32 %v859, %v932
    %v935 = vmul.f32 %v925, %v934
    %v936 = vadd.f32 %v935, %v932
    %938 = vrot.lane.b32.xlu0 %v936, 64
    %v939 = vpop.permute.xlu0 %938
    %941 = vst.msk [vmem:[#allocation2 + $0x28] sm:$0xff] %vm260, %v939
    %942 = vrot.lane.b32.xlu0 %v936, 32
    %v943 = vpop.permute.xlu0 %942
    %945 = vst.msk [vmem:[#allocation3 + $0x10] sm:$0xff] %vm260, %v943
    %v946 = vadd.f32 %v338, %v409
    %v947 = vadd.f32 %v340, %v411
    %v948 = vpack.c.bf16 %v936, %v936
    %950 = vrot.lane.b32.xlu0 %v948, 64
    %v951 = vpop.permute.xlu0 %950
    %v953 = vsel %vm485, %v951, 0
    %955 = vmatprep.subr.bf16.mxu0 %v470
    %956 = vmatpush1.bf16.msra.mxu0 %v469
    %957 = vmatprep.subr.bf16.mxu0 %v472
    %958 = vmatpush1.bf16.msra.mxu0 %v471
    %959 = vmatprep.subr.bf16.mxu0 %v474
    %960 = vmatpush1.bf16.msra.mxu0 %v473
    %961 = vmatprep.subr.bf16.mxu0 %v476
    %962 = vmatpush1.bf16.msra.mxu0 %v475
    %963 = vmatprep.subr.bf16.mxu0 0
    %964 = vmatpush1.bf16.msra.mxu0 0
    %965 = vmatprep.subr.bf16.mxu0 0
    %966 = vmatpush1.bf16.msra.mxu0 0
    %967 = vmatprep.subr.bf16.mxu0 0
    %968 = vmatpush1.bf16.msra.mxu0 0
    %969 = vmatprep.subr.bf16.mxu0 0
    %970 = vmatpush1.bf16.msra.mxu0 0
    %971 = vmatprep.subr.bf16.mxu0 0
    %972 = vmatpush1.bf16.msra.mxu0 0
    %973 = vmatprep.subr.bf16.mxu0 0
    %974 = vmatpush1.bf16.msra.mxu0 0
    %975 = vmatprep.subr.bf16.mxu0 0
    %976 = vmatpush1.bf16.msra.mxu0 0
    %977 = vmatprep.subr.bf16.mxu0 0
    %978 = vmatpush1.bf16.msra.mxu0 0
    %979 = vmatprep.subr.bf16.mxu0 0
    %980 = vmatpush1.bf16.msra.mxu0 0
    %981 = vmatprep.subr.bf16.mxu0 0
    %982 = vmatpush1.bf16.msra.mxu0 0
    %983 = vmatprep.subr.bf16.mxu0 0
    %984 = vmatpush1.bf16.msra.mxu0 0
    %985 = vmatprep.subr.bf16.mxu0 0
    %986 = vmatpush1.bf16.msra.mxu0 0
    %987 = vmatprep.mubr.bf16.mxu0 0
    %988 = vmatmul.mubr.bf16.gmra.mrb[0].mxu0 %v953
    %v989 = vpop.f32.mrb[0].mxu0
    %v990 = vadd.f32 0.0, %v989
    %v991 = vpop.f32.mrb[0].mxu0
    %v992 = vadd.f32 0.0, %v991
    %v993 = vpop.f32.mrb[0].mxu0
    %v994 = vpop.f32.mrb[0].mxu0
    %995 = vdwg.mxu0
    %v996 = vadd.f32 %v946, %v990
    %v997 = vxor.u32 %v996, 2147483648
    %v998 = vmul.f32 %v997, 1.442695
    %v999 = vpow.pop %v998
    %v1000 = vadd.f32 %v999, 1.0
    %v1001 = vrcp.pop %v1000
    %v1002 = vmul.f32 1.0, %v1001
    %v1003 = vadd.f32 %v992, %v223
    %v1004 = vmul.f32 %v1002, %v1003
    %v1005 = vadd.f32 %v947, %v1004
    %v1006 = vtanh.pop %v1005
    %1008 = vrot.lane.b32.xlu0 %v1006, 64
    %v1009 = vpop.permute.xlu0 %1008
    %v1011 = vsub.f32 %v936, %v1009
    %v1012 = vmul.f32 %v1002, %v1011
    %v1013 = vadd.f32 %v1012, %v1009
    %1015 = vrot.lane.b32.xlu0 %v1013, 64
    %v1016 = vpop.permute.xlu0 %1015
    %1018 = vst.msk [vmem:[#allocation2 + $0x30] sm:$0xff] %vm260, %v1016
    %1019 = vrot.lane.b32.xlu0 %v1013, 32
    %v1020 = vpop.permute.xlu0 %1019
    %1022 = vst.msk [vmem:[#allocation3 + $0x8] sm:$0xff] %vm260, %v1020
    %v1023 = vadd.f32 %v342, %v405
    %v1024 = vadd.f32 %v344, %v407
    %v1025 = vpack.c.bf16 %v1013, %v1013
    %1027 = vrot.lane.b32.xlu0 %v1025, 64
    %v1028 = vpop.permute.xlu0 %1027
    %v1030 = vsel %vm485, %v1028, 0
    %1032 = vmatprep.subr.bf16.mxu0 %v470
    %1033 = vmatpush1.bf16.msra.mxu0 %v469
    %1034 = vmatprep.subr.bf16.mxu0 %v472
    %1035 = vmatpush1.bf16.msra.mxu0 %v471
    %1036 = vmatprep.subr.bf16.mxu0 %v474
    %1037 = vmatpush1.bf16.msra.mxu0 %v473
    %1038 = vmatprep.subr.bf16.mxu0 %v476
    %1039 = vmatpush1.bf16.msra.mxu0 %v475
    %1040 = vmatprep.subr.bf16.mxu0 0
    %1041 = vmatpush1.bf16.msra.mxu0 0
    %1042 = vmatprep.subr.bf16.mxu0 0
    %1043 = vmatpush1.bf16.msra.mxu0 0
    %1044 = vmatprep.subr.bf16.mxu0 0
    %1045 = vmatpush1.bf16.msra.mxu0 0
    %1046 = vmatprep.subr.bf16.mxu0 0
    %1047 = vmatpush1.bf16.msra.mxu0 0
    %1048 = vmatprep.subr.bf16.mxu0 0
    %1049 = vmatpush1.bf16.msra.mxu0 0
    %1050 = vmatprep.subr.bf16.mxu0 0
    %1051 = vmatpush1.bf16.msra.mxu0 0
    %1052 = vmatprep.subr.bf16.mxu0 0
    %1053 = vmatpush1.bf16.msra.mxu0 0
    %1054 = vmatprep.subr.bf16.mxu0 0
    %1055 = vmatpush1.bf16.msra.mxu0 0
    %1056 = vmatprep.subr.bf16.mxu0 0
    %1057 = vmatpush1.bf16.msra.mxu0 0
    %1058 = vmatprep.subr.bf16.mxu0 0
    %1059 = vmatpush1.bf16.msra.mxu0 0
    %1060 = vmatprep.subr.bf16.mxu0 0
    %1061 = vmatpush1.bf16.msra.mxu0 0
    %1062 = vmatprep.subr.bf16.mxu0 0
    %1063 = vmatpush1.bf16.msra.mxu0 0
    %1064 = vmatprep.mubr.bf16.mxu0 0
    %1065 = vmatmul.mubr.bf16.gmra.mrb[0].mxu0 %v1030
    %v1066 = vpop.f32.mrb[0].mxu0
    %v1067 = vadd.f32 0.0, %v1066
    %v1068 = vpop.f32.mrb[0].mxu0
    %v1069 = vadd.f32 0.0, %v1068
    %v1070 = vpop.f32.mrb[0].mxu0
    %v1071 = vpop.f32.mrb[0].mxu0
    %1072 = vdwg.mxu0
    %v1073 = vadd.f32 %v1023, %v1067
    %v1074 = vxor.u32 %v1073, 2147483648
    %v1075 = vmul.f32 %v1074, 1.442695
    %v1076 = vpow.pop %v1075
    %v1077 = vadd.f32 %v1076, 1.0
    %v1078 = vrcp.pop %v1077
    %v1079 = vmul.f32 1.0, %v1078
    %v1080 = vadd.f32 %v1069, %v223
    %v1081 = vmul.f32 %v1079, %v1080
    %v1082 = vadd.f32 %v1024, %v1081
    %v1083 = vtanh.pop %v1082
    %1085 = vrot.lane.b32.xlu0 %v1083, 64
    %v1086 = vpop.permute.xlu0 %1085
    %v1088 = vsub.f32 %v1013, %v1086
    %v1089 = vmul.f32 %v1079, %v1088
    %v1090 = vadd.f32 %v1089, %v1086
    %1092 = vrot.lane.b32.xlu0 %v1090, 64
    %v1093 = vpop.permute.xlu0 %1092
    %1095 = vst.msk [vmem:[#allocation2 + $0x38] sm:$0xff] %vm260, %v1093
    %1096 = vrot.lane.b32.xlu0 %v1090, 32
    %v1097 = vpop.permute.xlu0 %1096
    %1099 = vst.msk [vmem:[#allocation3] sm:$0xff] %vm260, %v1097
    %v1100 = vld [vmem:[%s9] sm:$0xff]
    %v1101 = vld [vmem:[%s9 + $0x8] sm:$0xff]
    %v1102 = vld [vmem:[%s9 + $0x10] sm:$0xff]
    %v1103 = vld [vmem:[%s9 + $0x18] sm:$0xff]
    %v1104 = vld [vmem:[%s9 + $0x20] sm:$0xff]
    %v1105 = vld [vmem:[%s9 + $0x28] sm:$0xff]
    %v1106 = vld [vmem:[%s9 + $0x30] sm:$0xff]
    %v1107 = vld [vmem:[%s9 + $0x38] sm:$0xff]
    %v1108 = vld [vmem:[#allocation11] sm:$0x3]
    %v1109 = vld [vmem:[#allocation12] sm:$0x1]
    %v1111 = vlaneseq
    %v1112 = vshrl.u32 %v1111, 7
    %v1113 = vsub.s32 0, %v1112
    %v1114 = vrot.slane %v1109, %v1113
    %v1116 = vld [vmem:[#allocation2] sm:$0xff]
    %v1117 = vld [vmem:[#allocation2 + $0x8] sm:$0xff]
    %v1118 = vld [vmem:[#allocation2 + $0x10] sm:$0xff]
    %v1119 = vld [vmem:[#allocation2 + $0x18] sm:$0xff]
    %v1120 = vld [vmem:[#allocation2 + $0x20] sm:$0xff]
    %v1121 = vld [vmem:[#allocation2 + $0x28] sm:$0xff]
    %v1122 = vld [vmem:[#allocation2 + $0x30] sm:$0xff]
    %v1123 = vld [vmem:[#allocation2 + $0x38] sm:$0xff]
    %v1124 = vpack.c.bf16 %v1117, %v1116
    %v1125 = vpack.c.bf16 %v1119, %v1118
    %v1126 = vpack.c.bf16 %v1121, %v1120
    %v1127 = vpack.c.bf16 %v1123, %v1122
    %v1128 = vld [vmem:[#allocation3] sm:$0xff]
    %v1129 = vld [vmem:[#allocation3 + $0x8] sm:$0xff]
    %v1130 = vld [vmem:[#allocation3 + $0x10] sm:$0xff]
    %v1131 = vld [vmem:[#allocation3 + $0x18] sm:$0xff]
    %v1132 = vld [vmem:[#allocation3 + $0x20] sm:$0xff]
    %v1133 = vld [vmem:[#allocation3 + $0x28] sm:$0xff]
    %v1134 = vld [vmem:[#allocation3 + $0x30] sm:$0xff]
    %v1135 = vld [vmem:[#allocation3 + $0x38] sm:$0xff]
    %v1136 = vpack.c.bf16 %v1129, %v1128
    %v1137 = vpack.c.bf16 %v1131, %v1130
    %v1138 = vpack.c.bf16 %v1133, %v1132
    %v1139 = vpack.c.bf16 %v1135, %v1134
    %v1140 = vld [vmem:[%s7] sm:$0xff]
    %v1141 = vld [vmem:[%s7 + $0x8] sm:$0xff]
    %v1142 = vld [vmem:[%s7 + $0x10] sm:$0xff]
    %v1143 = vld [vmem:[%s7 + $0x18] sm:$0xff]
    %v1144 = vld [vmem:[%s7 + $0x20] sm:$0xff]
    %v1145 = vld [vmem:[%s7 + $0x28] sm:$0xff]
    %v1146 = vld [vmem:[%s7 + $0x30] sm:$0xff]
    %v1147 = vld [vmem:[%s7 + $0x38] sm:$0xff]
    %v1148 = vld [vmem:[%s8] sm:$0xff]
    %v1149 = vld [vmem:[%s8 + $0x8] sm:$0xff]
    %v1150 = vld [vmem:[%s8 + $0x10] sm:$0xff]
    %v1151 = vld [vmem:[%s8 + $0x18] sm:$0xff]
    %v1152 = vld [vmem:[%s8 + $0x20] sm:$0xff]
    %v1153 = vld [vmem:[%s8 + $0x28] sm:$0xff]
    %v1154 = vld [vmem:[%s8 + $0x30] sm:$0xff]
    %v1155 = vld [vmem:[%s8 + $0x38] sm:$0xff]
    %v1160 = vunpack.c.l.b16 %v1144
    %v1161 = vunpack.c.h.b16 %v1144
    %v1162 = vunpack.c.l.b16 %v1145
    %v1163 = vunpack.c.h.b16 %v1145
    %v1164 = vunpack.c.l.b16 %v1146
    %v1165 = vunpack.c.h.b16 %v1146
    %v1166 = vunpack.c.l.b16 %v1147
    %v1167 = vunpack.c.h.b16 %v1147
    %v1168 = vpack.c.b16 %v1162, %v1160
    %v1169 = vpack.c.b16 %v1163, %v1161
    %v1170 = vpack.c.b16 %v1166, %v1164
    %v1171 = vpack.c.b16 %v1167, %v1165
    %v1177 = vsel %vm260, %v1136, 0
    %v1180 = vsel %vm260, %v1137, 0
    %v1183 = vsel %vm260, %v1138, 0
    %v1186 = vsel %vm260, %v1139, 0
    %1188 = vmatprep.subr.bf16.mxu0 %v1169
    %1189 = vmatpush1.bf16.msra.mxu0 %v1168
    %1190 = vmatprep.subr.bf16.mxu0 %v1171
    %1191 = vmatpush1.bf16.msra.mxu0 %v1170
    %1192 = vmatprep.subr.bf16.mxu0 0
    %1193 = vmatpush1.bf16.msra.mxu0 0
    %1194 = vmatprep.subr.bf16.mxu0 0
    %1195 = vmatpush1.bf16.msra.mxu0 0
    %1196 = vmatprep.subr.bf16.mxu0 0
    %1197 = vmatpush1.bf16.msra.mxu0 0
    %1198 = vmatprep.subr.bf16.mxu0 0
    %1199 = vmatpush1.bf16.msra.mxu0 0
    %1200 = vmatprep.subr.bf16.mxu0 0
    %1201 = vmatpush1.bf16.msra.mxu0 0
    %1202 = vmatprep.subr.bf16.mxu0 0
    %1203 = vmatpush1.bf16.msra.mxu0 0
    %1204 = vmatprep.subr.bf16.mxu0 0
    %1205 = vmatpush1.bf16.msra.mxu0 0
    %1206 = vmatprep.subr.bf16.mxu0 0
    %1207 = vmatpush1.bf16.msra.mxu0 0
    %1208 = vmatprep.subr.bf16.mxu0 0
    %1209 = vmatpush1.bf16.msra.mxu0 0
    %1210 = vmatprep.subr.bf16.mxu0 0
    %1211 = vmatpush1.bf16.msra.mxu0 0
    %1212 = vmatprep.subr.bf16.mxu0 0
    %1213 = vmatpush1.bf16.msra.mxu0 0
    %1214 = vmatprep.subr.bf16.mxu0 0
    %1215 = vmatpush1.bf16.msra.mxu0 0
    %1216 = vmatprep.subr.bf16.mxu0 0
    %1217 = vmatpush1.bf16.msra.mxu0 0
    %1218 = vmatprep.subr.bf16.mxu0 0
    %1219 = vmatpush1.bf16.msra.mxu0 0
    %1220 = vmatprep.mubr.bf16.mxu0 0
    %1221 = vmatmul.mubr.bf16.gmra.mrb[0].mxu0 %v1177
    %v1222 = vpop.f32.mrb[0].mxu0
    %v1223 = vadd.f32 0.0, %v1222
    %v1224 = vpop.f32.mrb[0].mxu0
    %v1225 = vadd.f32 0.0, %v1224
    %v1226 = vpop.f32.mrb[0].mxu0
    %v1227 = vadd.f32 0.0, %v1226
    %v1228 = vpop.f32.mrb[0].mxu0
    %v1229 = vadd.f32 0.0, %v1228
    %1230 = vmatprep.mubr.bf16.mxu0 0
    %1231 = vmatmul.mubr.bf16.gmra.mrb[0].mxu0 %v1180
    %v1232 = vpop.f32.mrb[0].mxu0
    %v1233 = vadd.f32 0.0, %v1232
    %v1234 = vpop.f32.mrb[0].mxu0
    %v1235 = vadd.f32 0.0, %v1234
    %v1236 = vpop.f32.mrb[0].mxu0
    %v1237 = vadd.f32 0.0, %v1236
    %v1238 = vpop.f32.mrb[0].mxu0
    %v1239 = vadd.f32 0.0, %v1238
    %1240 = vmatprep.mubr.bf16.mxu0 0
    %1241 = vmatmul.mubr.bf16.gmra.mrb[0].mxu0 %v1183
    %v1242 = vpop.f32.mrb[0].mxu0
    %v1243 = vadd.f32 0.0, %v1242
    %v1244 = vpop.f32.mrb[0].mxu0
    %v1245 = vadd.f32 0.0, %v1244
    %v1246 = vpop.f32.mrb[0].mxu0
    %v1247 = vadd.f32 0.0, %v1246
    %v1248 = vpop.f32.mrb[0].mxu0
    %v1249 = vadd.f32 0.0, %v1248
    %1250 = vmatprep.mubr.bf16.mxu0 0
    %1251 = vmatmul.mubr.bf16.gmra.mrb[0].mxu0 %v1186
    %v1252 = vpop.f32.mrb[0].mxu0
    %v1253 = vadd.f32 0.0, %v1252
    %v1254 = vpop.f32.mrb[0].mxu0
    %v1255 = vadd.f32 0.0, %v1254
    %v1256 = vpop.f32.mrb[0].mxu0
    %v1257 = vadd.f32 0.0, %v1256
    %v1258 = vpop.f32.mrb[0].mxu0
    %v1259 = vadd.f32 0.0, %v1258
    %1260 = vdwg.mxu0
    %v1265 = vunpack.c.l.b16 %v1140
    %v1266 = vunpack.c.h.b16 %v1140
    %v1267 = vunpack.c.l.b16 %v1141
    %v1268 = vunpack.c.h.b16 %v1141
    %v1269 = vunpack.c.l.b16 %v1142
    %v1270 = vunpack.c.h.b16 %v1142
    %v1271 = vunpack.c.l.b16 %v1143
    %v1272 = vunpack.c.h.b16 %v1143
    %v1273 = vpack.c.b16 %v1267, %v1265
    %v1274 = vpack.c.b16 %v1268, %v1266
    %v1275 = vpack.c.b16 %v1271, %v1269
    %v1276 = vpack.c.b16 %v1272, %v1270
    %v1282 = vsel %vm260, %v1124, 0
    %v1285 = vsel %vm260, %v1125, 0
    %v1288 = vsel %vm260, %v1126, 0
    %v1291 = vsel %vm260, %v1127, 0
    %1293 = vmatprep.subr.bf16.mxu0 %v1274
    %1294 = vmatpush1.bf16.msra.mxu0 %v1273
    %1295 = vmatprep.subr.bf16.mxu0 %v1276
    %1296 = vmatpush1.bf16.msra.mxu0 %v1275
    %1297 = vmatprep.subr.bf16.mxu0 0
    %1298 = vmatpush1.bf16.msra.mxu0 0
    %1299 = vmatprep.subr.bf16.mxu0 0
    %1300 = vmatpush1.bf16.msra.mxu0 0
    %1301 = vmatprep.subr.bf16.mxu0 0
    %1302 = vmatpush1.bf16.msra.mxu0 0
    %1303 = vmatprep.subr.bf16.mxu0 0
    %1304 = vmatpush1.bf16.msra.mxu0 0
    %1305 = vmatprep.subr.bf16.mxu0 0
    %1306 = vmatpush1.bf16.msra.mxu0 0
    %1307 = vmatprep.subr.bf16.mxu0 0
    %1308 = vmatpush1.bf16.msra.mxu0 0
    %1309 = vmatprep.subr.bf16.mxu0 0
    %1310 = vmatpush1.bf16.msra.mxu0 0
    %1311 = vmatprep.subr.bf16.mxu0 0
    %1312 = vmatpush1.bf16.msra.mxu0 0
    %1313 = vmatprep.subr.bf16.mxu0 0
    %1314 = vmatpush1.bf16.msra.mxu0 0
    %1315 = vmatprep.subr.bf16.mxu0 0
    %1316 = vmatpush1.bf16.msra.mxu0 0
    %1317 = vmatprep.subr.bf16.mxu0 0
    %1318 = vmatpush1.bf16.msra.mxu0 0
    %1319 = vmatprep.subr.bf16.mxu0 0
    %1320 = vmatpush1.bf16.msra.mxu0 0
    %1321 = vmatprep.subr.bf16.mxu0 0
    %1322 = vmatpush1.bf16.msra.mxu0 0
    %1323 = vmatprep.subr.bf16.mxu0 0
    %1324 = vmatpush1.bf16.msra.mxu0 0
    %1325 = vmatprep.mubr.bf16.mxu0 0
    %1326 = vmatmul.mubr.bf16.gmra.mrb[0].mxu0 %v1282
    %v1327 = vpop.f32.mrb[0].mxu0
    %v1328 = vadd.f32 %v1223, %v1327
    %v1329 = vpop.f32.mrb[0].mxu0
    %v1330 = vadd.f32 %v1225, %v1329
    %v1331 = vpop.f32.mrb[0].mxu0
    %v1332 = vadd.f32 %v1227, %v1331
    %v1333 = vpop.f32.mrb[0].mxu0
    %v1334 = vadd.f32 %v1229, %v1333
    %1335 = vmatprep.mubr.bf16.mxu0 0
    %1336 = vmatmul.mubr.bf16.gmra.mrb[0].mxu0 %v1285
    %v1337 = vpop.f32.mrb[0].mxu0
    %v1338 = vadd.f32 %v1233, %v1337
    %v1339 = vpop.f32.mrb[0].mxu0
    %v1340 = vadd.f32 %v1235, %v1339
    %v1341 = vpop.f32.mrb[0].mxu0
    %v1342 = vadd.f32 %v1237, %v1341
    %v1343 = vpop.f32.mrb[0].mxu0
    %v1344 = vadd.f32 %v1239, %v1343
    %1345 = vmatprep.mubr.bf16.mxu0 0
    %1346 = vmatmul.mubr.bf16.gmra.mrb[0].mxu0 %v1288
    %v1347 = vpop.f32.mrb[0].mxu0
    %v1348 = vadd.f32 %v1243, %v1347
    %v1349 = vpop.f32.mrb[0].mxu0
    %v1350 = vadd.f32 %v1245, %v1349
    %v1351 = vpop.f32.mrb[0].mxu0
    %v1352 = vadd.f32 %v1247, %v1351
    %v1353 = vpop.f32.mrb[0].mxu0
    %v1354 = vadd.f32 %v1249, %v1353
    %1355 = vmatprep.mubr.bf16.mxu0 0
    %1356 = vmatmul.mubr.bf16.gmra.mrb[0].mxu0 %v1291
    %v1357 = vpop.f32.mrb[0].mxu0
    %v1358 = vadd.f32 %v1253, %v1357
    %v1359 = vpop.f32.mrb[0].mxu0
    %v1360 = vadd.f32 %v1255, %v1359
    %v1361 = vpop.f32.mrb[0].mxu0
    %v1362 = vadd.f32 %v1257, %v1361
    %v1363 = vpop.f32.mrb[0].mxu0
    %v1364 = vadd.f32 %v1259, %v1363
    %1365 = vdwg.mxu0
    %v1367 = vlaneseq
    %v1368 = vshrl.u32 %v1367, 7
    %v1369 = vsub.s32 0, %v1368
    %v1370 = vrot.slane %v1108, %v1369
    %v1371 = vlaneseq
    %v1372 = vshrl.u32 %v1371, 7
    %v1373 = vsub.s32 1, %v1372
    %v1374 = vrot.slane %v1108, %v1373
    %v1377 = vadd.f32 %v1328, %v1370
    %v1378 = vadd.f32 %v1330, %v1374
    %v1379 = vadd.f32 %v1332, %v1370
    %v1380 = vadd.f32 %v1334, %v1374
    %v1381 = vadd.f32 %v1338, %v1370
    %v1382 = vadd.f32 %v1340, %v1374
    %v1383 = vadd.f32 %v1342, %v1370
    %v1384 = vadd.f32 %v1344, %v1374
    %v1385 = vadd.f32 %v1348, %v1370
    %v1386 = vadd.f32 %v1350, %v1374
    %v1387 = vadd.f32 %v1352, %v1370
    %v1388 = vadd.f32 %v1354, %v1374
    %v1389 = vadd.f32 %v1358, %v1370
    %v1390 = vadd.f32 %v1360, %v1374
    %v1391 = vadd.f32 %v1362, %v1370
    %v1392 = vadd.f32 %v1364, %v1374
    %v1397 = vunpack.c.l.b16 %v1152
    %v1398 = vunpack.c.h.b16 %v1152
    %v1399 = vunpack.c.l.b16 %v1153
    %v1400 = vunpack.c.h.b16 %v1153
    %v1401 = vunpack.c.l.b16 %v1154
    %v1402 = vunpack.c.h.b16 %v1154
    %v1403 = vunpack.c.l.b16 %v1155
    %v1404 = vunpack.c.h.b16 %v1155
    %v1405 = vpack.c.b16 %v1399, %v1397
    %v1406 = vpack.c.b16 %v1400, %v1398
    %v1407 = vpack.c.b16 %v1403, %v1401
    %v1408 = vpack.c.b16 %v1404, %v1402
    %1413 = vmatprep.subr.bf16.mxu0 %v1406
    %1414 = vmatpush1.bf16.msra.mxu0 %v1405
    %1415 = vmatprep.subr.bf16.mxu0 %v1408
    %1416 = vmatpush1.bf16.msra.mxu0 %v1407
    %1417 = vmatprep.subr.bf16.mxu0 0
    %1418 = vmatpush1.bf16.msra.mxu0 0
    %1419 = vmatprep.subr.bf16.mxu0 0
    %1420 = vmatpush1.bf16.msra.mxu0 0
    %1421 = vmatprep.subr.bf16.mxu0 0
    %1422 = vmatpush1.bf16.msra.mxu0 0
    %1423 = vmatprep.subr.bf16.mxu0 0
    %1424 = vmatpush1.bf16.msra.mxu0 0
    %1425 = vmatprep.subr.bf16.mxu0 0
    %1426 = vmatpush1.bf16.msra.mxu0 0
    %1427 = vmatprep.subr.bf16.mxu0 0
    %1428 = vmatpush1.bf16.msra.mxu0 0
    %1429 = vmatprep.subr.bf16.mxu0 0
    %1430 = vmatpush1.bf16.msra.mxu0 0
    %1431 = vmatprep.subr.bf16.mxu0 0
    %1432 = vmatpush1.bf16.msra.mxu0 0
    %1433 = vmatprep.subr.bf16.mxu0 0
    %1434 = vmatpush1.bf16.msra.mxu0 0
    %1435 = vmatprep.subr.bf16.mxu0 0
    %1436 = vmatpush1.bf16.msra.mxu0 0
    %1437 = vmatprep.subr.bf16.mxu0 0
    %1438 = vmatpush1.bf16.msra.mxu0 0
    %1439 = vmatprep.subr.bf16.mxu0 0
    %1440 = vmatpush1.bf16.msra.mxu0 0
    %1441 = vmatprep.subr.bf16.mxu0 0
    %1442 = vmatpush1.bf16.msra.mxu0 0
    %1443 = vmatprep.subr.bf16.mxu0 0
    %1444 = vmatpush1.bf16.msra.mxu0 0
    %1445 = vmatprep.mubr.bf16.mxu0 0
    %1446 = vmatmul.mubr.bf16.gmra.mrb[0].mxu0 %v1177
    %v1447 = vpop.f32.mrb[0].mxu0
    %v1448 = vadd.f32 0.0, %v1447
    %v1449 = vpop.f32.mrb[0].mxu0
    %v1450 = vadd.f32 0.0, %v1449
    %v1451 = vpop.f32.mrb[0].mxu0
    %v1452 = vadd.f32 0.0, %v1451
    %v1453 = vpop.f32.mrb[0].mxu0
    %v1454 = vadd.f32 0.0, %v1453
    %1455 = vmatprep.mubr.bf16.mxu0 0
    %1456 = vmatmul.mubr.bf16.gmra.mrb[0].mxu0 %v1180
    %v1457 = vpop.f32.mrb[0].mxu0
    %v1458 = vadd.f32 0.0, %v1457
    %v1459 = vpop.f32.mrb[0].mxu0
    %v1460 = vadd.f32 0.0, %v1459
    %v1461 = vpop.f32.mrb[0].mxu0
    %v1462 = vadd.f32 0.0, %v1461
    %v1463 = vpop.f32.mrb[0].mxu0
    %v1464 = vadd.f32 0.0, %v1463
    %1465 = vmatprep.mubr.bf16.mxu0 0
    %1466 = vmatmul.mubr.bf16.gmra.mrb[0].mxu0 %v1183
    %v1467 = vpop.f32.mrb[0].mxu0
    %v1468 = vadd.f32 0.0, %v1467
    %v1469 = vpop.f32.mrb[0].mxu0
    %v1470 = vadd.f32 0.0, %v1469
    %v1471 = vpop.f32.mrb[0].mxu0
    %v1472 = vadd.f32 0.0, %v1471
    %v1473 = vpop.f32.mrb[0].mxu0
    %v1474 = vadd.f32 0.0, %v1473
    %1475 = vmatprep.mubr.bf16.mxu0 0
    %1476 = vmatmul.mubr.bf16.gmra.mrb[0].mxu0 %v1186
    %v1477 = vpop.f32.mrb[0].mxu0
    %v1478 = vadd.f32 0.0, %v1477
    %v1479 = vpop.f32.mrb[0].mxu0
    %v1480 = vadd.f32 0.0, %v1479
    %v1481 = vpop.f32.mrb[0].mxu0
    %v1482 = vadd.f32 0.0, %v1481
    %v1483 = vpop.f32.mrb[0].mxu0
    %v1484 = vadd.f32 0.0, %v1483
    %1485 = vdwg.mxu0
    %v1490 = vunpack.c.l.b16 %v1148
    %v1491 = vunpack.c.h.b16 %v1148
    %v1492 = vunpack.c.l.b16 %v1149
    %v1493 = vunpack.c.h.b16 %v1149
    %v1494 = vunpack.c.l.b16 %v1150
    %v1495 = vunpack.c.h.b16 %v1150
    %v1496 = vunpack.c.l.b16 %v1151
    %v1497 = vunpack.c.h.b16 %v1151
    %v1498 = vpack.c.b16 %v1492, %v1490
    %v1499 = vpack.c.b16 %v1493, %v1491
    %v1500 = vpack.c.b16 %v1496, %v1494
    %v1501 = vpack.c.b16 %v1497, %v1495
    %1506 = vmatprep.subr.bf16.mxu0 %v1499
    %1507 = vmatpush1.bf16.msra.mxu0 %v1498
    %1508 = vmatprep.subr.bf16.mxu0 %v1501
    %1509 = vmatpush1.bf16.msra.mxu0 %v1500
    %1510 = vmatprep.subr.bf16.mxu0 0
    %1511 = vmatpush1.bf16.msra.mxu0 0
    %1512 = vmatprep.subr.bf16.mxu0 0
    %1513 = vmatpush1.bf16.msra.mxu0 0
    %1514 = vmatprep.subr.bf16.mxu0 0
    %1515 = vmatpush1.bf16.msra.mxu0 0
    %1516 = vmatprep.subr.bf16.mxu0 0
    %1517 = vmatpush1.bf16.msra.mxu0 0
    %1518 = vmatprep.subr.bf16.mxu0 0
    %1519 = vmatpush1.bf16.msra.mxu0 0
    %1520 = vmatprep.subr.bf16.mxu0 0
    %1521 = vmatpush1.bf16.msra.mxu0 0
    %1522 = vmatprep.subr.bf16.mxu0 0
    %1523 = vmatpush1.bf16.msra.mxu0 0
    %1524 = vmatprep.subr.bf16.mxu0 0
    %1525 = vmatpush1.bf16.msra.mxu0 0
    %1526 = vmatprep.subr.bf16.mxu0 0
    %1527 = vmatpush1.bf16.msra.mxu0 0
    %1528 = vmatprep.subr.bf16.mxu0 0
    %1529 = vmatpush1.bf16.msra.mxu0 0
    %1530 = vmatprep.subr.bf16.mxu0 0
    %1531 = vmatpush1.bf16.msra.mxu0 0
    %1532 = vmatprep.subr.bf16.mxu0 0
    %1533 = vmatpush1.bf16.msra.mxu0 0
    %1534 = vmatprep.subr.bf16.mxu0 0
    %1535 = vmatpush1.bf16.msra.mxu0 0
    %1536 = vmatprep.subr.bf16.mxu0 0
    %1537 = vmatpush1.bf16.msra.mxu0 0
    %1538 = vmatprep.mubr.bf16.mxu0 0
    %1539 = vmatmul.mubr.bf16.gmra.mrb[0].mxu0 %v1282
    %v1540 = vpop.f32.mrb[0].mxu0
    %v1541 = vadd.f32 %v1448, %v1540
    %v1542 = vpop.f32.mrb[0].mxu0
    %v1543 = vadd.f32 %v1450, %v1542
    %v1544 = vpop.f32.mrb[0].mxu0
    %v1545 = vadd.f32 %v1452, %v1544
    %v1546 = vpop.f32.mrb[0].mxu0
    %v1547 = vadd.f32 %v1454, %v1546
    %1548 = vmatprep.mubr.bf16.mxu0 0
    %1549 = vmatmul.mubr.bf16.gmra.mrb[0].mxu0 %v1285
    %v1550 = vpop.f32.mrb[0].mxu0
    %v1551 = vadd.f32 %v1458, %v1550
    %v1552 = vpop.f32.mrb[0].mxu0
    %v1553 = vadd.f32 %v1460, %v1552
    %v1554 = vpop.f32.mrb[0].mxu0
    %v1555 = vadd.f32 %v1462, %v1554
    %v1556 = vpop.f32.mrb[0].mxu0
    %v1557 = vadd.f32 %v1464, %v1556
    %1558 = vmatprep.mubr.bf16.mxu0 0
    %1559 = vmatmul.mubr.bf16.gmra.mrb[0].mxu0 %v1288
    %v1560 = vpop.f32.mrb[0].mxu0
    %v1561 = vadd.f32 %v1468, %v1560
    %v1562 = vpop.f32.mrb[0].mxu0
    %v1563 = vadd.f32 %v1470, %v1562
    %v1564 = vpop.f32.mrb[0].mxu0
    %v1565 = vadd.f32 %v1472, %v1564
    %v1566 = vpop.f32.mrb[0].mxu0
    %v1567 = vadd.f32 %v1474, %v1566
    %1568 = vmatprep.mubr.bf16.mxu0 0
    %1569 = vmatmul.mubr.bf16.gmra.mrb[0].mxu0 %v1291
    %v1570 = vpop.f32.mrb[0].mxu0
    %v1571 = vadd.f32 %v1478, %v1570
    %v1572 = vpop.f32.mrb[0].mxu0
    %v1573 = vadd.f32 %v1480, %v1572
    %v1574 = vpop.f32.mrb[0].mxu0
    %v1575 = vadd.f32 %v1482, %v1574
    %v1576 = vpop.f32.mrb[0].mxu0
    %v1577 = vadd.f32 %v1484, %v1576
    %1578 = vdwg.mxu0
    %v1579 = vadd.f32 %v1377, %v1575
    %v1580 = vadd.f32 %v1378, %v1577
    %v1589 = vunpack.c.l.b16 %v1100
    %v1590 = vunpack.c.h.b16 %v1100
    %v1591 = vunpack.c.l.b16 %v1101
    %v1592 = vunpack.c.h.b16 %v1101
    %v1593 = vunpack.c.l.b16 %v1102
    %v1594 = vunpack.c.h.b16 %v1102
    %v1595 = vunpack.c.l.b16 %v1103
    %v1596 = vunpack.c.h.b16 %v1103
    %v1597 = vunpack.c.l.b16 %v1104
    %v1598 = vunpack.c.h.b16 %v1104
    %v1599 = vunpack.c.l.b16 %v1105
    %v1600 = vunpack.c.h.b16 %v1105
    %v1601 = vunpack.c.l.b16 %v1106
    %v1602 = vunpack.c.h.b16 %v1106
    %v1603 = vunpack.c.l.b16 %v1107
    %v1604 = vunpack.c.h.b16 %v1107
    %v1605 = vpack.c.b16 %v1591, %v1589
    %v1606 = vpack.c.b16 %v1592, %v1590
    %v1607 = vpack.c.b16 %v1595, %v1593
    %v1608 = vpack.c.b16 %v1596, %v1594
    %v1609 = vpack.c.b16 %v1599, %v1597
    %v1610 = vpack.c.b16 %v1600, %v1598
    %v1611 = vpack.c.b16 %v1603, %v1601
    %v1612 = vpack.c.b16 %v1604, %v1602
    %1621 = vmatprep.subr.bf16.mxu0 %v1606
    %1622 = vmatpush1.bf16.msra.mxu0 %v1605
    %1623 = vmatprep.subr.bf16.mxu0 %v1608
    %1624 = vmatpush1.bf16.msra.mxu0 %v1607
    %1625 = vmatprep.subr.bf16.mxu0 %v1610
    %1626 = vmatpush1.bf16.msra.mxu0 %v1609
    %1627 = vmatprep.subr.bf16.mxu0 %v1612
    %1628 = vmatpush1.bf16.msra.mxu0 %v1611
    %1629 = vmatprep.subr.bf16.mxu0 0
    %1630 = vmatpush1.bf16.msra.mxu0 0
    %1631 = vmatprep.subr.bf16.mxu0 0
    %1632 = vmatpush1.bf16.msra.mxu0 0
    %1633 = vmatprep.subr.bf16.mxu0 0
    %1634 = vmatpush1.bf16.msra.mxu0 0
    %1635 = vmatprep.subr.bf16.mxu0 0
    %1636 = vmatpush1.bf16.msra.mxu0 0
    %1637 = vmatprep.subr.bf16.mxu0 0
    %1638 = vmatpush1.bf16.msra.mxu0 0
    %1639 = vmatprep.subr.bf16.mxu0 0
    %1640 = vmatpush1.bf16.msra.mxu0 0
    %1641 = vmatprep.subr.bf16.mxu0 0
    %1642 = vmatpush1.bf16.msra.mxu0 0
    %1643 = vmatprep.subr.bf16.mxu0 0
    %1644 = vmatpush1.bf16.msra.mxu0 0
    %1645 = vmatprep.subr.bf16.mxu0 0
    %1646 = vmatpush1.bf16.msra.mxu0 0
    %1647 = vmatprep.subr.bf16.mxu0 0
    %1648 = vmatpush1.bf16.msra.mxu0 0
    %1649 = vmatprep.subr.bf16.mxu0 0
    %1650 = vmatpush1.bf16.msra.mxu0 0
    %1651 = vmatprep.subr.bf16.mxu0 0
    %1652 = vmatpush1.bf16.msra.mxu0 0
    %1653 = vmatprep.mubr.bf16.mxu0 0
    %1654 = vmatmul.mubr.bf16.gmra.mrb[0].mxu0 %v487
    %v1655 = vpop.f32.mrb[0].mxu0
    %v1656 = vadd.f32 0.0, %v1655
    %v1657 = vpop.f32.mrb[0].mxu0
    %v1658 = vadd.f32 0.0, %v1657
    %v1659 = vpop.f32.mrb[0].mxu0
    %v1660 = vpop.f32.mrb[0].mxu0
    %1661 = vdwg.mxu0
    %v1662 = vadd.f32 %v1579, %v1656
    %v1663 = vxor.u32 %v1662, 2147483648
    %v1664 = vmul.f32 %v1663, 1.442695
    %v1665 = vpow.pop %v1664
    %v1666 = vadd.f32 %v1665, 1.0
    %v1667 = vrcp.pop %v1666
    %v1668 = vmul.f32 1.0, %v1667
    %v1669 = vadd.f32 %v1658, %v1114
    %v1670 = vmul.f32 %v1668, %v1669
    %v1671 = vadd.f32 %v1580, %v1670
    %v1672 = vtanh.pop %v1671
    %v1673 = vsub.f32 0.0, %v1672
    %1675 = vrot.lane.b32.xlu0 %v1673, 64
    %v1676 = vpop.permute.xlu0 %1675
    %v1678 = vmul.f32 %v1668, %v1676
    %1680 = vrot.lane.b32.xlu0 %v1672, 64
    %v1681 = vpop.permute.xlu0 %1680
    %v1683 = vadd.f32 %v1678, %v1681
    %v1684 = vadd.f32 %v1379, %v1571
    %v1685 = vadd.f32 %v1380, %v1573
    %v1686 = vpack.c.bf16 %v1683, %v1683
    %1688 = vrot.lane.b32.xlu0 %v1686, 64
    %v1689 = vpop.permute.xlu0 %1688
    %v1691 = vsel %vm485, %v1689, 0
    %1693 = vmatprep.subr.bf16.mxu0 %v1606
    %1694 = vmatpush1.bf16.msra.mxu0 %v1605
    %1695 = vmatprep.subr.bf16.mxu0 %v1608
    %1696 = vmatpush1.bf16.msra.mxu0 %v1607
    %1697 = vmatprep.subr.bf16.mxu0 %v1610
    %1698 = vmatpush1.bf16.msra.mxu0 %v1609
    %1699 = vmatprep.subr.bf16.mxu0 %v1612
    %1700 = vmatpush1.bf16.msra.mxu0 %v1611
    %1701 = vmatprep.subr.bf16.mxu0 0
    %1702 = vmatpush1.bf16.msra.mxu0 0
    %1703 = vmatprep.subr.bf16.mxu0 0
    %1704 = vmatpush1.bf16.msra.mxu0 0
    %1705 = vmatprep.subr.bf16.mxu0 0
    %1706 = vmatpush1.bf16.msra.mxu0 0
    %1707 = vmatprep.subr.bf16.mxu0 0
    %1708 = vmatpush1.bf16.msra.mxu0 0
    %1709 = vmatprep.subr.bf16.mxu0 0
    %1710 = vmatpush1.bf16.msra.mxu0 0
    %1711 = vmatprep.subr.bf16.mxu0 0
    %1712 = vmatpush1.bf16.msra.mxu0 0
    %1713 = vmatprep.subr.bf16.mxu0 0
    %1714 = vmatpush1.bf16.msra.mxu0 0
    %1715 = vmatprep.subr.bf16.mxu0 0
    %1716 = vmatpush1.bf16.msra.mxu0 0
    %1717 = vmatprep.subr.bf16.mxu0 0
    %1718 = vmatpush1.bf16.msra.mxu0 0
    %1719 = vmatprep.subr.bf16.mxu0 0
    %1720 = vmatpush1.bf16.msra.mxu0 0
    %1721 = vmatprep.subr.bf16.mxu0 0
    %1722 = vmatpush1.bf16.msra.mxu0 0
    %1723 = vmatprep.subr.bf16.mxu0 0
    %1724 = vmatpush1.bf16.msra.mxu0 0
    %1725 = vmatprep.mubr.bf16.mxu0 0
    %1726 = vmatmul.mubr.bf16.gmra.mrb[0].mxu0 %v1691
    %v1727 = vpop.f32.mrb[0].mxu0
    %v1728 = vadd.f32 0.0, %v1727
    %v1729 = vpop.f32.mrb[0].mxu0
    %v1730 = vadd.f32 0.0, %v1729
    %v1731 = vpop.f32.mrb[0].mxu0
    %v1732 = vpop.f32.mrb[0].mxu0
    %1733 = vdwg.mxu0
    %v1734 = vadd.f32 %v1684, %v1728
    %v1735 = vxor.u32 %v1734, 2147483648
    %v1736 = vmul.f32 %v1735, 1.442695
    %v1737 = vpow.pop %v1736
    %v1738 = vadd.f32 %v1737, 1.0
    %v1739 = vrcp.pop %v1738
    %v1740 = vmul.f32 1.0, %v1739
    %v1741 = vadd.f32 %v1730, %v1114
    %v1742 = vmul.f32 %v1740, %v1741
    %v1743 = vadd.f32 %v1685, %v1742
    %v1744 = vtanh.pop %v1743
    %1746 = vrot.lane.b32.xlu0 %v1744, 64
    %v1747 = vpop.permute.xlu0 %1746
    %v1749 = vsub.f32 %v1683, %v1747
    %v1750 = vmul.f32 %v1740, %v1749
    %v1751 = vadd.f32 %v1750, %v1747
    %v1752 = vmax.f32 %v1683, %v1751
    %v1753 = vadd.f32 %v1381, %v1565
    %v1754 = vadd.f32 %v1382, %v1567
    %v1755 = vpack.c.bf16 %v1751, %v1751
    %1757 = vrot.lane.b32.xlu0 %v1755, 64
    %v1758 = vpop.permute.xlu0 %1757
    %v1760 = vsel %vm485, %v1758, 0
    %1762 = vmatprep.subr.bf16.mxu0 %v1606
    %1763 = vmatpush1.bf16.msra.mxu0 %v1605
    %1764 = vmatprep.subr.bf16.mxu0 %v1608
    %1765 = vmatpush1.bf16.msra.mxu0 %v1607
    %1766 = vmatprep.subr.bf16.mxu0 %v1610
    %1767 = vmatpush1.bf16.msra.mxu0 %v1609
    %1768 = vmatprep.subr.bf16.mxu0 %v1612
    %1769 = vmatpush1.bf16.msra.mxu0 %v1611
    %1770 = vmatprep.subr.bf16.mxu0 0
    %1771 = vmatpush1.bf16.msra.mxu0 0
    %1772 = vmatprep.subr.bf16.mxu0 0
    %1773 = vmatpush1.bf16.msra.mxu0 0
    %1774 = vmatprep.subr.bf16.mxu0 0
    %1775 = vmatpush1.bf16.msra.mxu0 0
    %1776 = vmatprep.subr.bf16.mxu0 0
    %1777 = vmatpush1.bf16.msra.mxu0 0
    %1778 = vmatprep.subr.bf16.mxu0 0
    %1779 = vmatpush1.bf16.msra.mxu0 0
    %1780 = vmatprep.subr.bf16.mxu0 0
    %1781 = vmatpush1.bf16.msra.mxu0 0
    %1782 = vmatprep.subr.bf16.mxu0 0
    %1783 = vmatpush1.bf16.msra.mxu0 0
    %1784 = vmatprep.subr.bf16.mxu0 0
    %1785 = vmatpush1.bf16.msra.mxu0 0
    %1786 = vmatprep.subr.bf16.mxu0 0
    %1787 = vmatpush1.bf16.msra.mxu0 0
    %1788 = vmatprep.subr.bf16.mxu0 0
    %1789 = vmatpush1.bf16.msra.mxu0 0
    %1790 = vmatprep.subr.bf16.mxu0 0
    %1791 = vmatpush1.bf16.msra.mxu0 0
    %1792 = vmatprep.subr.bf16.mxu0 0
    %1793 = vmatpush1.bf16.msra.mxu0 0
    %1794 = vmatprep.mubr.bf16.mxu0 0
    %1795 = vmatmul.mubr.bf16.gmra.mrb[0].mxu0 %v1760
    %v1796 = vpop.f32.mrb[0].mxu0
    %v1797 = vadd.f32 0.0, %v1796
    %v1798 = vpop.f32.mrb[0].mxu0
    %v1799 = vadd.f32 0.0, %v1798
    %v1800 = vpop.f32.mrb[0].mxu0
    %v1801 = vpop.f32.mrb[0].mxu0
    %1802 = vdwg.mxu0
    %v1803 = vadd.f32 %v1753, %v1797
    %v1804 = vxor.u32 %v1803, 2147483648
    %v1805 = vmul.f32 %v1804, 1.442695
    %v1806 = vpow.pop %v1805
    %v1807 = vadd.f32 %v1806, 1.0
    %v1808 = vrcp.pop %v1807
    %v1809 = vmul.f32 1.0, %v1808
    %v1810 = vadd.f32 %v1799, %v1114
    %v1811 = vmul.f32 %v1809, %v1810
    %v1812 = vadd.f32 %v1754, %v1811
    %v1813 = vtanh.pop %v1812
    %1815 = vrot.lane.b32.xlu0 %v1813, 64
    %v1816 = vpop.permute.xlu0 %1815
    %v1818 = vsub.f32 %v1751, %v1816
    %v1819 = vmul.f32 %v1809, %v1818
    %v1820 = vadd.f32 %v1819, %v1816
    %v1821 = vmax.f32 %v1752, %v1820
    %v1822 = vadd.f32 %v1383, %v1561
    %v1823 = vadd.f32 %v1384, %v1563
    %v1824 = vpack.c.bf16 %v1820, %v1820
    %1826 = vrot.lane.b32.xlu0 %v1824, 64
    %v1827 = vpop.permute.xlu0 %1826
    %v1829 = vsel %vm485, %v1827, 0
    %1831 = vmatprep.subr.bf16.mxu0 %v1606
    %1832 = vmatpush1.bf16.msra.mxu0 %v1605
    %1833 = vmatprep.subr.bf16.mxu0 %v1608
    %1834 = vmatpush1.bf16.msra.mxu0 %v1607
    %1835 = vmatprep.subr.bf16.mxu0 %v1610
    %1836 = vmatpush1.bf16.msra.mxu0 %v1609
    %1837 = vmatprep.subr.bf16.mxu0 %v1612
    %1838 = vmatpush1.bf16.msra.mxu0 %v1611
    %1839 = vmatprep.subr.bf16.mxu0 0
    %1840 = vmatpush1.bf16.msra.mxu0 0
    %1841 = vmatprep.subr.bf16.mxu0 0
    %1842 = vmatpush1.bf16.msra.mxu0 0
    %1843 = vmatprep.subr.bf16.mxu0 0
    %1844 = vmatpush1.bf16.msra.mxu0 0
    %1845 = vmatprep.subr.bf16.mxu0 0
    %1846 = vmatpush1.bf16.msra.mxu0 0
    %1847 = vmatprep.subr.bf16.mxu0 0
    %1848 = vmatpush1.bf16.msra.mxu0 0
    %1849 = vmatprep.subr.bf16.mxu0 0
    %1850 = vmatpush1.bf16.msra.mxu0 0
    %1851 = vmatprep.subr.bf16.mxu0 0
    %1852 = vmatpush1.bf16.msra.mxu0 0
    %1853 = vmatprep.subr.bf16.mxu0 0
    %1854 = vmatpush1.bf16.msra.mxu0 0
    %1855 = vmatprep.subr.bf16.mxu0 0
    %1856 = vmatpush1.bf16.msra.mxu0 0
    %1857 = vmatprep.subr.bf16.mxu0 0
    %1858 = vmatpush1.bf16.msra.mxu0 0
    %1859 = vmatprep.subr.bf16.mxu0 0
    %1860 = vmatpush1.bf16.msra.mxu0 0
    %1861 = vmatprep.subr.bf16.mxu0 0
    %1862 = vmatpush1.bf16.msra.mxu0 0
    %1863 = vmatprep.mubr.bf16.mxu0 0
    %1864 = vmatmul.mubr.bf16.gmra.mrb[0].mxu0 %v1829
    %v1865 = vpop.f32.mrb[0].mxu0
    %v1866 = vadd.f32 0.0, %v1865
    %v1867 = vpop.f32.mrb[0].mxu0
    %v1868 = vadd.f32 0.0, %v1867
    %v1869 = vpop.f32.mrb[0].mxu0
    %v1870 = vpop.f32.mrb[0].mxu0
    %1871 = vdwg.mxu0
    %v1872 = vadd.f32 %v1822, %v1866
    %v1873 = vxor.u32 %v1872, 2147483648
    %v1874 = vmul.f32 %v1873, 1.442695
    %v1875 = vpow.pop %v1874
    %v1876 = vadd.f32 %v1875, 1.0
    %v1877 = vrcp.pop %v1876
    %v1878 = vmul.f32 1.0, %v1877
    %v1879 = vadd.f32 %v1868, %v1114
    %v1880 = vmul.f32 %v1878, %v1879
    %v1881 = vadd.f32 %v1823, %v1880
    %v1882 = vtanh.pop %v1881
    %1884 = vrot.lane.b32.xlu0 %v1882, 64
    %v1885 = vpop.permute.xlu0 %1884
    %v1887 = vsub.f32 %v1820, %v1885
    %v1888 = vmul.f32 %v1878, %v1887
    %v1889 = vadd.f32 %v1888, %v1885
    %v1890 = vmax.f32 %v1821, %v1889
    %v1891 = vadd.f32 %v1385, %v1555
    %v1892 = vadd.f32 %v1386, %v1557
    %v1893 = vpack.c.bf16 %v1889, %v1889
    %1895 = vrot.lane.b32.xlu0 %v1893, 64
    %v1896 = vpop.permute.xlu0 %1895
    %v1898 = vsel %vm485, %v1896, 0
    %1900 = vmatprep.subr.bf16.mxu0 %v1606
    %1901 = vmatpush1.bf16.msra.mxu0 %v1605
    %1902 = vmatprep.subr.bf16.mxu0 %v1608
    %1903 = vmatpush1.bf16.msra.mxu0 %v1607
    %1904 = vmatprep.subr.bf16.mxu0 %v1610
    %1905 = vmatpush1.bf16.msra.mxu0 %v1609
    %1906 = vmatprep.subr.bf16.mxu0 %v1612
    %1907 = vmatpush1.bf16.msra.mxu0 %v1611
    %1908 = vmatprep.subr.bf16.mxu0 0
    %1909 = vmatpush1.bf16.msra.mxu0 0
    %1910 = vmatprep.subr.bf16.mxu0 0
    %1911 = vmatpush1.bf16.msra.mxu0 0
    %1912 = vmatprep.subr.bf16.mxu0 0
    %1913 = vmatpush1.bf16.msra.mxu0 0
    %1914 = vmatprep.subr.bf16.mxu0 0
    %1915 = vmatpush1.bf16.msra.mxu0 0
    %1916 = vmatprep.subr.bf16.mxu0 0
    %1917 = vmatpush1.bf16.msra.mxu0 0
    %1918 = vmatprep.subr.bf16.mxu0 0
    %1919 = vmatpush1.bf16.msra.mxu0 0
    %1920 = vmatprep.subr.bf16.mxu0 0
    %1921 = vmatpush1.bf16.msra.mxu0 0
    %1922 = vmatprep.subr.bf16.mxu0 0
    %1923 = vmatpush1.bf16.msra.mxu0 0
    %1924 = vmatprep.subr.bf16.mxu0 0
    %1925 = vmatpush1.bf16.msra.mxu0 0
    %1926 = vmatprep.subr.bf16.mxu0 0
    %1927 = vmatpush1.bf16.msra.mxu0 0
    %1928 = vmatprep.subr.bf16.mxu0 0
    %1929 = vmatpush1.bf16.msra.mxu0 0
    %1930 = vmatprep.subr.bf16.mxu0 0
    %1931 = vmatpush1.bf16.msra.mxu0 0
    %1932 = vmatprep.mubr.bf16.mxu0 0
    %1933 = vmatmul.mubr.bf16.gmra.mrb[0].mxu0 %v1898
    %v1934 = vpop.f32.mrb[0].mxu0
    %v1935 = vadd.f32 0.0, %v1934
    %v1936 = vpop.f32.mrb[0].mxu0
    %v1937 = vadd.f32 0.0, %v1936
    %v1938 = vpop.f32.mrb[0].mxu0
    %v1939 = vpop.f32.mrb[0].mxu0
    %1940 = vdwg.mxu0
    %v1941 = vadd.f32 %v1891, %v1935
    %v1942 = vxor.u32 %v1941, 2147483648
    %v1943 = vmul.f32 %v1942, 1.442695
    %v1944 = vpow.pop %v1943
    %v1945 = vadd.f32 %v1944, 1.0
    %v1946 = vrcp.pop %v1945
    %v1947 = vmul.f32 1.0, %v1946
    %v1948 = vadd.f32 %v1937, %v1114
    %v1949 = vmul.f32 %v1947, %v1948
    %v1950 = vadd.f32 %v1892, %v1949
    %v1951 = vtanh.pop %v1950
    %1953 = vrot.lane.b32.xlu0 %v1951, 64
    %v1954 = vpop.permute.xlu0 %1953
    %v1956 = vsub.f32 %v1889, %v1954
    %v1957 = vmul.f32 %v1947, %v1956
    %v1958 = vadd.f32 %v1957, %v1954
    %v1959 = vmax.f32 %v1890, %v1958
    %v1960 = vadd.f32 %v1387, %v1551
    %v1961 = vadd.f32 %v1388, %v1553
    %v1962 = vpack.c.bf16 %v1958, %v1958
    %1964 = vrot.lane.b32.xlu0 %v1962, 64
    %v1965 = vpop.permute.xlu0 %1964
    %v1967 = vsel %vm485, %v1965, 0
    %1969 = vmatprep.subr.bf16.mxu0 %v1606
    %1970 = vmatpush1.bf16.msra.mxu0 %v1605
    %1971 = vmatprep.subr.bf16.mxu0 %v1608
    %1972 = vmatpush1.bf16.msra.mxu0 %v1607
    %1973 = vmatprep.subr.bf16.mxu0 %v1610
    %1974 = vmatpush1.bf16.msra.mxu0 %v1609
    %1975 = vmatprep.subr.bf16.mxu0 %v1612
    %1976 = vmatpush1.bf16.msra.mxu0 %v1611
    %1977 = vmatprep.subr.bf16.mxu0 0
    %1978 = vmatpush1.bf16.msra.mxu0 0
    %1979 = vmatprep.subr.bf16.mxu0 0
    %1980 = vmatpush1.bf16.msra.mxu0 0
    %1981 = vmatprep.subr.bf16.mxu0 0
    %1982 = vmatpush1.bf16.msra.mxu0 0
    %1983 = vmatprep.subr.bf16.mxu0 0
    %1984 = vmatpush1.bf16.msra.mxu0 0
    %1985 = vmatprep.subr.bf16.mxu0 0
    %1986 = vmatpush1.bf16.msra.mxu0 0
    %1987 = vmatprep.subr.bf16.mxu0 0
    %1988 = vmatpush1.bf16.msra.mxu0 0
    %1989 = vmatprep.subr.bf16.mxu0 0
    %1990 = vmatpush1.bf16.msra.mxu0 0
    %1991 = vmatprep.subr.bf16.mxu0 0
    %1992 = vmatpush1.bf16.msra.mxu0 0
    %1993 = vmatprep.subr.bf16.mxu0 0
    %1994 = vmatpush1.bf16.msra.mxu0 0
    %1995 = vmatprep.subr.bf16.mxu0 0
    %1996 = vmatpush1.bf16.msra.mxu0 0
    %1997 = vmatprep.subr.bf16.mxu0 0
    %1998 = vmatpush1.bf16.msra.mxu0 0
    %1999 = vmatprep.subr.bf16.mxu0 0
    %2000 = vmatpush1.bf16.msra.mxu0 0
    %2001 = vmatprep.mubr.bf16.mxu0 0
    %2002 = vmatmul.mubr.bf16.gmra.mrb[0].mxu0 %v1967
    %v2003 = vpop.f32.mrb[0].mxu0
    %v2004 = vadd.f32 0.0, %v2003
    %v2005 = vpop.f32.mrb[0].mxu0
    %v2006 = vadd.f32 0.0, %v2005
    %v2007 = vpop.f32.mrb[0].mxu0
    %v2008 = vpop.f32.mrb[0].mxu0
    %2009 = vdwg.mxu0
    %v2010 = vadd.f32 %v1960, %v2004
    %v2011 = vxor.u32 %v2010, 2147483648
    %v2012 = vmul.f32 %v2011, 1.442695
    %v2013 = vpow.pop %v2012
    %v2014 = vadd.f32 %v2013, 1.0
    %v2015 = vrcp.pop %v2014
    %v2016 = vmul.f32 1.0, %v2015
    %v2017 = vadd.f32 %v2006, %v1114
    %v2018 = vmul.f32 %v2016, %v2017
    %v2019 = vadd.f32 %v1961, %v2018
    %v2020 = vtanh.pop %v2019
    %2022 = vrot.lane.b32.xlu0 %v2020, 64
    %v2023 = vpop.permute.xlu0 %2022
    %v2025 = vsub.f32 %v1958, %v2023
    %v2026 = vmul.f32 %v2016, %v2025
    %v2027 = vadd.f32 %v2026, %v2023
    %v2028 = vmax.f32 %v1959, %v2027
    %v2029 = vadd.f32 %v1389, %v1545
    %v2030 = vadd.f32 %v1390, %v1547
    %v2031 = vpack.c.bf16 %v2027, %v2027
    %2033 = vrot.lane.b32.xlu0 %v2031, 64
    %v2034 = vpop.permute.xlu0 %2033
    %v2036 = vsel %vm485, %v2034, 0
    %2038 = vmatprep.subr.bf16.mxu0 %v1606
    %2039 = vmatpush1.bf16.msra.mxu0 %v1605
    %2040 = vmatprep.subr.bf16.mxu0 %v1608
    %2041 = vmatpush1.bf16.msra.mxu0 %v1607
    %2042 = vmatprep.subr.bf16.mxu0 %v1610
    %2043 = vmatpush1.bf16.msra.mxu0 %v1609
    %2044 = vmatprep.subr.bf16.mxu0 %v1612
    %2045 = vmatpush1.bf16.msra.mxu0 %v1611
    %2046 = vmatprep.subr.bf16.mxu0 0
    %2047 = vmatpush1.bf16.msra.mxu0 0
    %2048 = vmatprep.subr.bf16.mxu0 0
    %2049 = vmatpush1.bf16.msra.mxu0 0
    %2050 = vmatprep.subr.bf16.mxu0 0
    %2051 = vmatpush1.bf16.msra.mxu0 0
    %2052 = vmatprep.subr.bf16.mxu0 0
    %2053 = vmatpush1.bf16.msra.mxu0 0
    %2054 = vmatprep.subr.bf16.mxu0 0
    %2055 = vmatpush1.bf16.msra.mxu0 0
    %2056 = vmatprep.subr.bf16.mxu0 0
    %2057 = vmatpush1.bf16.msra.mxu0 0
    %2058 = vmatprep.subr.bf16.mxu0 0
    %2059 = vmatpush1.bf16.msra.mxu0 0
    %2060 = vmatprep.subr.bf16.mxu0 0
    %2061 = vmatpush1.bf16.msra.mxu0 0
    %2062 = vmatprep.subr.bf16.mxu0 0
    %2063 = vmatpush1.bf16.msra.mxu0 0
    %2064 = vmatprep.subr.bf16.mxu0 0
    %2065 = vmatpush1.bf16.msra.mxu0 0
    %2066 = vmatprep.subr.bf16.mxu0 0
    %2067 = vmatpush1.bf16.msra.mxu0 0
    %2068 = vmatprep.subr.bf16.mxu0 0
    %2069 = vmatpush1.bf16.msra.mxu0 0
    %2070 = vmatprep.mubr.bf16.mxu0 0
    %2071 = vmatmul.mubr.bf16.gmra.mrb[0].mxu0 %v2036
    %v2072 = vpop.f32.mrb[0].mxu0
    %v2073 = vadd.f32 0.0, %v2072
    %v2074 = vpop.f32.mrb[0].mxu0
    %v2075 = vadd.f32 0.0, %v2074
    %v2076 = vpop.f32.mrb[0].mxu0
    %v2077 = vpop.f32.mrb[0].mxu0
    %2078 = vdwg.mxu0
    %v2079 = vadd.f32 %v2029, %v2073
    %v2080 = vxor.u32 %v2079, 2147483648
    %v2081 = vmul.f32 %v2080, 1.442695
    %v2082 = vpow.pop %v2081
    %v2083 = vadd.f32 %v2082, 1.0
    %v2084 = vrcp.pop %v2083
    %v2085 = vmul.f32 1.0, %v2084
    %v2086 = vadd.f32 %v2075, %v1114
    %v2087 = vmul.f32 %v2085, %v2086
    %v2088 = vadd.f32 %v2030, %v2087
    %v2089 = vtanh.pop %v2088
    %2091 = vrot.lane.b32.xlu0 %v2089, 64
    %v2092 = vpop.permute.xlu0 %2091
    %v2094 = vsub.f32 %v2027, %v2092
    %v2095 = vmul.f32 %v2085, %v2094
    %v2096 = vadd.f32 %v2095, %v2092
    %v2097 = vmax.f32 %v2028, %v2096
    %v2098 = vadd.f32 %v1391, %v1541
    %v2099 = vadd.f32 %v1392, %v1543
    %v2100 = vpack.c.bf16 %v2096, %v2096
    %2102 = vrot.lane.b32.xlu0 %v2100, 64
    %v2103 = vpop.permute.xlu0 %2102
    %v2105 = vsel %vm485, %v2103, 0
    %2107 = vmatprep.subr.bf16.mxu0 %v1606
    %2108 = vmatpush1.bf16.msra.mxu0 %v1605
    %2109 = vmatprep.subr.bf16.mxu0 %v1608
    %2110 = vmatpush1.bf16.msra.mxu0 %v1607
    %2111 = vmatprep.subr.bf16.mxu0 %v1610
    %2112 = vmatpush1.bf16.msra.mxu0 %v1609
    %2113 = vmatprep.subr.bf16.mxu0 %v1612
    %2114 = vmatpush1.bf16.msra.mxu0 %v1611
    %2115 = vmatprep.subr.bf16.mxu0 0
    %2116 = vmatpush1.bf16.msra.mxu0 0
    %2117 = vmatprep.subr.bf16.mxu0 0
    %2118 = vmatpush1.bf16.msra.mxu0 0
    %2119 = vmatprep.subr.bf16.mxu0 0
    %2120 = vmatpush1.bf16.msra.mxu0 0
    %2121 = vmatprep.subr.bf16.mxu0 0
    %2122 = vmatpush1.bf16.msra.mxu0 0
    %2123 = vmatprep.subr.bf16.mxu0 0
    %2124 = vmatpush1.bf16.msra.mxu0 0
    %2125 = vmatprep.subr.bf16.mxu0 0
    %2126 = vmatpush1.bf16.msra.mxu0 0
    %2127 = vmatprep.subr.bf16.mxu0 0
    %2128 = vmatpush1.bf16.msra.mxu0 0
    %2129 = vmatprep.subr.bf16.mxu0 0
    %2130 = vmatpush1.bf16.msra.mxu0 0
    %2131 = vmatprep.subr.bf16.mxu0 0
    %2132 = vmatpush1.bf16.msra.mxu0 0
    %2133 = vmatprep.subr.bf16.mxu0 0
    %2134 = vmatpush1.bf16.msra.mxu0 0
    %2135 = vmatprep.subr.bf16.mxu0 0
    %2136 = vmatpush1.bf16.msra.mxu0 0
    %2137 = vmatprep.subr.bf16.mxu0 0
    %2138 = vmatpush1.bf16.msra.mxu0 0
    %2139 = vmatprep.mubr.bf16.mxu0 0
    %2140 = vmatmul.mubr.bf16.gmra.mrb[0].mxu0 %v2105
    %v2141 = vpop.f32.mrb[0].mxu0
    %v2142 = vadd.f32 0.0, %v2141
    %v2143 = vpop.f32.mrb[0].mxu0
    %v2144 = vadd.f32 0.0, %v2143
    %v2145 = vpop.f32.mrb[0].mxu0
    %v2146 = vpop.f32.mrb[0].mxu0
    %2147 = vdwg.mxu0
    %v2148 = vadd.f32 %v2098, %v2142
    %v2149 = vxor.u32 %v2148, 2147483648
    %v2150 = vmul.f32 %v2149, 1.442695
    %v2151 = vpow.pop %v2150
    %v2152 = vadd.f32 %v2151, 1.0
    %v2153 = vrcp.pop %v2152
    %v2154 = vmul.f32 1.0, %v2153
    %v2155 = vadd.f32 %v2144, %v1114
    %v2156 = vmul.f32 %v2154, %v2155
    %v2157 = vadd.f32 %v2099, %v2156
    %v2158 = vtanh.pop %v2157
    %2160 = vrot.lane.b32.xlu0 %v2158, 64
    %v2161 = vpop.permute.xlu0 %2160
    %v2163 = vsub.f32 %v2096, %v2161
    %v2164 = vmul.f32 %v2154, %v2163
    %v2165 = vadd.f32 %v2164, %v2161
    %v2166 = vmax.f32 %v2097, %v2165
    %v2167 = vtanh.pop %v2166
    %v2168 = vpack.c.bf16 %v2167, %v2167
    %v2169 = vld [vmem:[#allocation14] sm:$0xff]
    %v2170 = vld [vmem:[#allocation14 + $0x8] sm:$0xff]
    %v2171 = vld [vmem:[#allocation14 + $0x10] sm:$0xff]
    %v2172 = vld [vmem:[#allocation14 + $0x18] sm:$0xff]
    %v2173 = vld [vmem:[#allocation14 + $0x20] sm:$0xff]
    %v2174 = vld [vmem:[#allocation14 + $0x28] sm:$0xff]
    %v2175 = vld [vmem:[#allocation14 + $0x30] sm:$0xff]
    %v2176 = vld [vmem:[#allocation14 + $0x38] sm:$0xff]
    %v2177 = vld [vmem:[%s13] sm:$0x3]
    %v2179 = vlaneseq
    %v2180 = vshrl.u32 %v2179, 7
    %v2181 = vsub.s32 0, %v2180
    %v2182 = vrot.slane %v2177, %v2181
    %v2183 = vlaneseq
    %v2184 = vshrl.u32 %v2183, 7
    %v2185 = vsub.s32 1, %v2184
    %v2186 = vrot.slane %v2177, %v2185
    %2190 = vrot.lane.b32.xlu0 %v2168, 64
    %v2191 = vpop.permute.xlu0 %2190
    %v2200 = vunpack.c.l.b16 %v2169
    %v2201 = vunpack.c.h.b16 %v2169
    %v2202 = vunpack.c.l.b16 %v2170
    %v2203 = vunpack.c.h.b16 %v2170
    %v2204 = vunpack.c.l.b16 %v2171
    %v2205 = vunpack.c.h.b16 %v2171
    %v2206 = vunpack.c.l.b16 %v2172
    %v2207 = vunpack.c.h.b16 %v2172
    %v2208 = vunpack.c.l.b16 %v2173
    %v2209 = vunpack.c.h.b16 %v2173
    %v2210 = vunpack.c.l.b16 %v2174
    %v2211 = vunpack.c.h.b16 %v2174
    %v2212 = vunpack.c.l.b16 %v2175
    %v2213 = vunpack.c.h.b16 %v2175
    %v2214 = vunpack.c.l.b16 %v2176
    %v2215 = vunpack.c.h.b16 %v2176
    %v2216 = vpack.c.b16 %v2202, %v2200
    %v2217 = vpack.c.b16 %v2203, %v2201
    %v2218 = vpack.c.b16 %v2206, %v2204
    %v2219 = vpack.c.b16 %v2207, %v2205
    %v2220 = vpack.c.b16 %v2210, %v2208
    %v2221 = vpack.c.b16 %v2211, %v2209
    %v2222 = vpack.c.b16 %v2214, %v2212
    %v2223 = vpack.c.b16 %v2215, %v2213
    %v2233 = vsel %vm485, %v2191, 0
    %2235 = vmatprep.subr.bf16.mxu0 %v2217
    %2236 = vmatpush1.bf16.msra.mxu0 %v2216
    %2237 = vmatprep.subr.bf16.mxu0 %v2219
    %2238 = vmatpush1.bf16.msra.mxu0 %v2218
    %2239 = vmatprep.subr.bf16.mxu0 %v2221
    %2240 = vmatpush1.bf16.msra.mxu0 %v2220
    %2241 = vmatprep.subr.bf16.mxu0 %v2223
    %2242 = vmatpush1.bf16.msra.mxu0 %v2222
    %2243 = vmatprep.subr.bf16.mxu0 0
    %2244 = vmatpush1.bf16.msra.mxu0 0
    %2245 = vmatprep.subr.bf16.mxu0 0
    %2246 = vmatpush1.bf16.msra.mxu0 0
    %2247 = vmatprep.subr.bf16.mxu0 0
    %2248 = vmatpush1.bf16.msra.mxu0 0
    %2249 = vmatprep.subr.bf16.mxu0 0
    %2250 = vmatpush1.bf16.msra.mxu0 0
    %2251 = vmatprep.subr.bf16.mxu0 0
    %2252 = vmatpush1.bf16.msra.mxu0 0
    %2253 = vmatprep.subr.bf16.mxu0 0
    %2254 = vmatpush1.bf16.msra.mxu0 0
    %2255 = vmatprep.subr.bf16.mxu0 0
    %2256 = vmatpush1.bf16.msra.mxu0 0
    %2257 = vmatprep.subr.bf16.mxu0 0
    %2258 = vmatpush1.bf16.msra.mxu0 0
    %2259 = vmatprep.subr.bf16.mxu0 0
    %2260 = vmatpush1.bf16.msra.mxu0 0
    %2261 = vmatprep.subr.bf16.mxu0 0
    %2262 = vmatpush1.bf16.msra.mxu0 0
    %2263 = vmatprep.subr.bf16.mxu0 0
    %2264 = vmatpush1.bf16.msra.mxu0 0
    %2265 = vmatprep.subr.bf16.mxu0 0
    %2266 = vmatpush1.bf16.msra.mxu0 0
    %2267 = vmatprep.mubr.bf16.mxu0 0
    %2268 = vmatmul.mubr.bf16.gmra.mrb[0].mxu0 %v2233
    %v2269 = vpop.f32.mrb[0].mxu0
    %v2270 = vadd.f32 %v2182, %v2269
    %v2271 = vpop.f32.mrb[0].mxu0
    %v2272 = vadd.f32 %v2186, %v2271
    %v2273 = vpop.f32.mrb[0].mxu0
    %v2274 = vpop.f32.mrb[0].mxu0
    %2275 = vdwg.mxu0
    %v2276 = vld [vmem:[#allocation4] sm:$0xff]
    %v2277 = vld [vmem:[#allocation4 + $0x8] sm:$0xff]
    %v2278 = vld [vmem:[#allocation4 + $0x10] sm:$0xff]
    %v2279 = vld [vmem:[#allocation4 + $0x18] sm:$0xff]
    %v2280 = vld [vmem:[#allocation4 + $0x20] sm:$0xff]
    %v2281 = vld [vmem:[#allocation4 + $0x28] sm:$0xff]
    %v2282 = vpack.c.bf16 %v2276, %v2276
    %v2283 = vpack.c.bf16 %v2277, %v2277
    %v2284 = vpack.c.bf16 %v2278, %v2278
    %v2285 = vpack.c.bf16 %v2279, %v2279
    %v2286 = vpack.c.bf16 %v2280, %v2280
    %v2287 = vpack.c.bf16 %v2281, %v2281
    %v2288 = vld [vmem:[#allocation15] sm:$0xff]
    %v2289 = vld [vmem:[#allocation15 + $0x8] sm:$0xff]
    %v2290 = vld [vmem:[#allocation15 + $0x10] sm:$0xff]
    %v2291 = vld [vmem:[#allocation15 + $0x18] sm:$0xff]
    %v2292 = vld [vmem:[#allocation15 + $0x20] sm:$0xff]
    %v2293 = vld [vmem:[#allocation15 + $0x28] sm:$0xff]
    %v2294 = vld [vmem:[#allocation15 + $0x30] sm:$0xff]
    %v2295 = vld [vmem:[#allocation15 + $0x38] sm:$0xff]
    %v2296 = vld [vmem:[#allocation15 + $0x40] sm:$0xff]
    %v2297 = vld [vmem:[#allocation15 + $0x48] sm:$0xff]
    %v2298 = vld [vmem:[#allocation15 + $0x50] sm:$0xff]
    %v2299 = vld [vmem:[#allocation15 + $0x58] sm:$0xff]
    %v2300 = vld [vmem:[#allocation15 + $0x60] sm:$0xff]
    %v2301 = vld [vmem:[#allocation15 + $0x68] sm:$0xff]
    %v2302 = vld [vmem:[#allocation15 + $0x70] sm:$0xff]
    %v2303 = vld [vmem:[#allocation15 + $0x78] sm:$0xff]
    %v2304 = vld [vmem:[#allocation15 + $0x80] sm:$0xff]
    %v2305 = vld [vmem:[#allocation15 + $0x88] sm:$0xff]
    %v2306 = vld [vmem:[#allocation15 + $0x90] sm:$0xff]
    %v2307 = vld [vmem:[#allocation15 + $0x98] sm:$0xff]
    %v2308 = vld [vmem:[#allocation15 + $0xa0] sm:$0xff]
    %v2309 = vld [vmem:[#allocation15 + $0xa8] sm:$0xff]
    %v2310 = vld [vmem:[#allocation15 + $0xb0] sm:$0xff]
    %v2311 = vld [vmem:[#allocation15 + $0xb8] sm:$0xff]
    %v2312 = vld [vmem:[#allocation15 + $0xc0] sm:$0xff]
    %v2313 = vld [vmem:[#allocation15 + $0xc8] sm:$0xff]
    %v2314 = vld [vmem:[#allocation15 + $0xd0] sm:$0xff]
    %v2315 = vld [vmem:[#allocation15 + $0xd8] sm:$0xff]
    %v2316 = vld [vmem:[#allocation15 + $0xe0] sm:$0xff]
    %v2317 = vld [vmem:[#allocation15 + $0xe8] sm:$0xff]
    %v2318 = vld [vmem:[#allocation15 + $0xf0] sm:$0xff]
    %v2319 = vld [vmem:[#allocation15 + $0xf8] sm:$0xff]
    %v2320 = vld [vmem:[#allocation15 + $0x100] sm:$0xff]
    %v2321 = vld [vmem:[#allocation15 + $0x108] sm:$0xff]
    %v2322 = vld [vmem:[#allocation15 + $0x110] sm:$0xff]
    %v2323 = vld [vmem:[#allocation15 + $0x118] sm:$0xff]
    %v2324 = vld [vmem:[#allocation15 + $0x120] sm:$0xff]
    %v2325 = vld [vmem:[#allocation15 + $0x128] sm:$0xff]
    %v2326 = vld [vmem:[#allocation15 + $0x130] sm:$0xff]
    %v2327 = vld [vmem:[#allocation15 + $0x138] sm:$0xff]
    %v2328 = vld [vmem:[#allocation15 + $0x140] sm:$0xff]
    %v2329 = vld [vmem:[#allocation15 + $0x148] sm:$0xff]
    %v2330 = vld [vmem:[#allocation15 + $0x150] sm:$0xff]
    %v2331 = vld [vmem:[#allocation15 + $0x158] sm:$0xff]
    %v2332 = vld [vmem:[#allocation15 + $0x160] sm:$0xff]
    %v2333 = vld [vmem:[#allocation15 + $0x168] sm:$0xff]
    %v2334 = vld [vmem:[#allocation15 + $0x170] sm:$0xff]
    %v2335 = vld [vmem:[#allocation15 + $0x178] sm:$0xff]
    %v2336 = vld [vmem:[#allocation15 + $0x180] sm:$0xff]
    %v2337 = vld [vmem:[#allocation15 + $0x188] sm:$0xff]
    %v2338 = vld [vmem:[#allocation15 + $0x190] sm:$0xff]
    %v2339 = vld [vmem:[#allocation15 + $0x198] sm:$0xff]
    %v2340 = vld [vmem:[#allocation15 + $0x1a0] sm:$0xff]
    %v2341 = vld [vmem:[#allocation15 + $0x1a8] sm:$0xff]
    %v2342 = vld [vmem:[#allocation15 + $0x1b0] sm:$0xff]
    %v2343 = vld [vmem:[#allocation15 + $0x1b8] sm:$0xff]
    %v2344 = vld [vmem:[#allocation15 + $0x1c0] sm:$0xff]
    %v2345 = vld [vmem:[#allocation15 + $0x1c8] sm:$0xff]
    %v2346 = vld [vmem:[#allocation15 + $0x1d0] sm:$0xff]
    %v2347 = vld [vmem:[#allocation15 + $0x1d8] sm:$0xff]
    %v2348 = vld [vmem:[#allocation15 + $0x1e0] sm:$0xff]
    %v2349 = vld [vmem:[#allocation15 + $0x1e8] sm:$0xff]
    %v2350 = vld [vmem:[#allocation15 + $0x1f0] sm:$0xff]
    %v2351 = vld [vmem:[#allocation15 + $0x1f8] sm:$0xff]
    %v2352 = vld [vmem:[#allocation15 + $0x200] sm:$0xff]
    %v2353 = vld [vmem:[#allocation15 + $0x208] sm:$0xff]
    %v2354 = vld [vmem:[#allocation15 + $0x210] sm:$0xff]
    %v2355 = vld [vmem:[#allocation15 + $0x218] sm:$0xff]
    %v2356 = vld [vmem:[#allocation15 + $0x220] sm:$0xff]
    %v2357 = vld [vmem:[#allocation15 + $0x228] sm:$0xff]
    %v2358 = vld [vmem:[#allocation15 + $0x230] sm:$0xff]
    %v2359 = vld [vmem:[#allocation15 + $0x238] sm:$0xff]
    %v2360 = vld [vmem:[#allocation15 + $0x240] sm:$0xff]
    %v2361 = vld [vmem:[#allocation15 + $0x248] sm:$0xff]
    %v2362 = vld [vmem:[#allocation15 + $0x250] sm:$0xff]
    %v2363 = vld [vmem:[#allocation15 + $0x258] sm:$0xff]
    %v2364 = vld [vmem:[#allocation15 + $0x260] sm:$0xff]
    %v2365 = vld [vmem:[#allocation15 + $0x268] sm:$0xff]
    %v2366 = vld [vmem:[#allocation15 + $0x270] sm:$0xff]
    %v2367 = vld [vmem:[#allocation15 + $0x278] sm:$0xff]
    %v2368 = vld [vmem:[#allocation15 + $0x280] sm:$0xff]
    %v2369 = vld [vmem:[#allocation15 + $0x288] sm:$0xff]
    %v2370 = vld [vmem:[#allocation15 + $0x290] sm:$0xff]
    %v2371 = vld [vmem:[#allocation15 + $0x298] sm:$0xff]
    %v2372 = vld [vmem:[#allocation15 + $0x2a0] sm:$0xff]
    %v2373 = vld [vmem:[#allocation15 + $0x2a8] sm:$0xff]
    %v2374 = vld [vmem:[#allocation15 + $0x2b0] sm:$0xff]
    %v2375 = vld [vmem:[#allocation15 + $0x2b8] sm:$0xff]
    %v2376 = vld [vmem:[#allocation15 + $0x2c0] sm:$0xff]
    %v2377 = vld [vmem:[#allocation15 + $0x2c8] sm:$0xff]
    %v2378 = vld [vmem:[#allocation15 + $0x2d0] sm:$0xff]
    %v2379 = vld [vmem:[#allocation15 + $0x2d8] sm:$0xff]
    %v2380 = vld [vmem:[#allocation15 + $0x2e0] sm:$0xff]
    %v2381 = vld [vmem:[#allocation15 + $0x2e8] sm:$0xff]
    %v2382 = vld [vmem:[#allocation15 + $0x2f0] sm:$0xff]
    %v2383 = vld [vmem:[#allocation15 + $0x2f8] sm:$0xff]
    %v2384 = vld [vmem:[#allocation15 + $0x300] sm:$0xff]
    %v2385 = vld [vmem:[#allocation15 + $0x308] sm:$0xff]
    %v2386 = vld [vmem:[#allocation15 + $0x310] sm:$0xff]
    %v2387 = vld [vmem:[#allocation15 + $0x318] sm:$0xff]
    %v2388 = vld [vmem:[#allocation15 + $0x320] sm:$0xff]
    %v2389 = vld [vmem:[#allocation15 + $0x328] sm:$0xff]
    %v2390 = vld [vmem:[#allocation15 + $0x330] sm:$0xff]
    %v2391 = vld [vmem:[#allocation15 + $0x338] sm:$0xff]
    %v2392 = vld [vmem:[#allocation15 + $0x340] sm:$0xff]
    %v2393 = vld [vmem:[#allocation15 + $0x348] sm:$0xff]
    %v2394 = vld [vmem:[#allocation15 + $0x350] sm:$0xff]
    %v2395 = vld [vmem:[#allocation15 + $0x358] sm:$0xff]
    %v2396 = vld [vmem:[#allocation15 + $0x360] sm:$0xff]
    %v2397 = vld [vmem:[#allocation15 + $0x368] sm:$0xff]
    %v2398 = vld [vmem:[#allocation15 + $0x370] sm:$0xff]
    %v2399 = vld [vmem:[#allocation15 + $0x378] sm:$0xff]
    %v2400 = vld [vmem:[#allocation15 + $0x380] sm:$0xff]
    %v2401 = vld [vmem:[#allocation15 + $0x388] sm:$0xff]
    %v2402 = vld [vmem:[#allocation15 + $0x390] sm:$0xff]
    %v2403 = vld [vmem:[#allocation15 + $0x398] sm:$0xff]
    %v2404 = vld [vmem:[#allocation15 + $0x3a0] sm:$0xff]
    %v2405 = vld [vmem:[#allocation15 + $0x3a8] sm:$0xff]
    %v2406 = vld [vmem:[#allocation15 + $0x3b0] sm:$0xff]
    %v2407 = vld [vmem:[#allocation15 + $0x3b8] sm:$0xff]
    %v2408 = vld [vmem:[#allocation15 + $0x3c0] sm:$0xff]
    %v2409 = vld [vmem:[#allocation15 + $0x3c8] sm:$0xff]
    %v2410 = vld [vmem:[#allocation15 + $0x3d0] sm:$0xff]
    %v2411 = vld [vmem:[#allocation15 + $0x3d8] sm:$0xff]
    %v2412 = vld [vmem:[#allocation15 + $0x3e0] sm:$0xff]
    %v2413 = vld [vmem:[#allocation15 + $0x3e8] sm:$0xff]
    %v2414 = vld [vmem:[#allocation15 + $0x3f0] sm:$0xff]
    %v2415 = vld [vmem:[#allocation15 + $0x3f8] sm:$0xff]
    %v2416 = vld [vmem:[#allocation15 + $0x400] sm:$0xff]
    %v2417 = vld [vmem:[#allocation15 + $0x408] sm:$0xff]
    %v2418 = vld [vmem:[#allocation15 + $0x410] sm:$0xff]
    %v2419 = vld [vmem:[#allocation15 + $0x418] sm:$0xff]
    %v2420 = vld [vmem:[#allocation15 + $0x420] sm:$0xff]
    %v2421 = vld [vmem:[#allocation15 + $0x428] sm:$0xff]
    %v2422 = vld [vmem:[#allocation15 + $0x430] sm:$0xff]
    %v2423 = vld [vmem:[#allocation15 + $0x438] sm:$0xff]
    %v2424 = vld [vmem:[#allocation15 + $0x440] sm:$0xff]
    %v2425 = vld [vmem:[#allocation15 + $0x448] sm:$0xff]
    %v2426 = vld [vmem:[#allocation15 + $0x450] sm:$0xff]
    %v2427 = vld [vmem:[#allocation15 + $0x458] sm:$0xff]
    %v2428 = vld [vmem:[#allocation15 + $0x460] sm:$0xff]
    %v2429 = vld [vmem:[#allocation15 + $0x468] sm:$0xff]
    %v2430 = vld [vmem:[#allocation15 + $0x470] sm:$0xff]
    %v2431 = vld [vmem:[#allocation15 + $0x478] sm:$0xff]
    %v2432 = vld [vmem:[#allocation15 + $0x480] sm:$0xff]
    %v2433 = vld [vmem:[#allocation15 + $0x488] sm:$0xff]
    %v2434 = vld [vmem:[#allocation15 + $0x490] sm:$0xff]
    %v2435 = vld [vmem:[#allocation15 + $0x498] sm:$0xff]
    %v2436 = vld [vmem:[#allocation15 + $0x4a0] sm:$0xff]
    %v2437 = vld [vmem:[#allocation15 + $0x4a8] sm:$0xff]
    %v2438 = vld [vmem:[#allocation15 + $0x4b0] sm:$0xff]
    %v2439 = vld [vmem:[#allocation15 + $0x4b8] sm:$0xff]
    %v2440 = vld [vmem:[#allocation15 + $0x4c0] sm:$0xff]
    %v2441 = vld [vmem:[#allocation15 + $0x4c8] sm:$0xff]
    %v2442 = vld [vmem:[#allocation15 + $0x4d0] sm:$0xff]
    %v2443 = vld [vmem:[#allocation15 + $0x4d8] sm:$0xff]
    %v2444 = vld [vmem:[#allocation15 + $0x4e0] sm:$0xff]
    %v2445 = vld [vmem:[#allocation15 + $0x4e8] sm:$0xff]
    %v2446 = vld [vmem:[#allocation15 + $0x4f0] sm:$0xff]
    %v2447 = vld [vmem:[#allocation15 + $0x4f8] sm:$0xff]
    %v2448 = vld [vmem:[#allocation15 + $0x500] sm:$0xff]
    %v2449 = vld [vmem:[#allocation15 + $0x508] sm:$0xff]
    %v2450 = vld [vmem:[#allocation15 + $0x510] sm:$0xff]
    %v2451 = vld [vmem:[#allocation15 + $0x518] sm:$0xff]
    %v2452 = vld [vmem:[#allocation15 + $0x520] sm:$0xff]
    %v2453 = vld [vmem:[#allocation15 + $0x528] sm:$0xff]
    %v2454 = vld [vmem:[#allocation15 + $0x530] sm:$0xff]
    %v2455 = vld [vmem:[#allocation15 + $0x538] sm:$0xff]
    %v2456 = vld [vmem:[#allocation15 + $0x540] sm:$0xff]
    %v2457 = vld [vmem:[#allocation15 + $0x548] sm:$0xff]
    %v2458 = vld [vmem:[#allocation15 + $0x550] sm:$0xff]
    %v2459 = vld [vmem:[#allocation15 + $0x558] sm:$0xff]
    %v2460 = vld [vmem:[#allocation15 + $0x560] sm:$0xff]
    %v2461 = vld [vmem:[#allocation15 + $0x568] sm:$0xff]
    %v2462 = vld [vmem:[#allocation15 + $0x570] sm:$0xff]
    %v2463 = vld [vmem:[#allocation15 + $0x578] sm:$0xff]
    %v2464 = vld [vmem:[#allocation15 + $0x580] sm:$0xff]
    %v2465 = vld [vmem:[#allocation15 + $0x588] sm:$0xff]
    %v2466 = vld [vmem:[#allocation15 + $0x590] sm:$0xff]
    %v2467 = vld [vmem:[#allocation15 + $0x598] sm:$0xff]
    %v2468 = vld [vmem:[#allocation15 + $0x5a0] sm:$0xff]
    %v2469 = vld [vmem:[#allocation15 + $0x5a8] sm:$0xff]
    %v2470 = vld [vmem:[#allocation15 + $0x5b0] sm:$0xff]
    %v2471 = vld [vmem:[#allocation15 + $0x5b8] sm:$0xff]
    %v2472 = vld [vmem:[#allocation15 + $0x5c0] sm:$0xff]
    %v2473 = vld [vmem:[#allocation15 + $0x5c8] sm:$0xff]
    %v2474 = vld [vmem:[#allocation15 + $0x5d0] sm:$0xff]
    %v2475 = vld [vmem:[#allocation15 + $0x5d8] sm:$0xff]
    %v2476 = vld [vmem:[#allocation15 + $0x5e0] sm:$0xff]
    %v2477 = vld [vmem:[#allocation15 + $0x5e8] sm:$0xff]
    %v2478 = vld [vmem:[#allocation15 + $0x5f0] sm:$0xff]
    %v2479 = vld [vmem:[#allocation15 + $0x5f8] sm:$0xff]
    %v2480 = vpack.c.bf16 %v2270, %v2270
    %v2481 = vpack.c.bf16 %v2272, %v2272
    %v2482 = vld [vmem:[#allocation17] sm:$0xff]
    %v2483 = vld [vmem:[#allocation17 + $0x8] sm:$0xff]
    %v2484 = vld [vmem:[#allocation17 + $0x10] sm:$0xff]
    %v2485 = vld [vmem:[#allocation17 + $0x18] sm:$0xff]
    %v2486 = vld [vmem:[#allocation17 + $0x20] sm:$0xff]
    %v2487 = vld [vmem:[#allocation17 + $0x28] sm:$0xff]
    %v2488 = vld [vmem:[#allocation17 + $0x30] sm:$0xff]
    %v2489 = vld [vmem:[#allocation17 + $0x38] sm:$0xff]
    %v2490 = vld [vmem:[#allocation17 + $0x40] sm:$0xff]
    %v2491 = vld [vmem:[#allocation17 + $0x48] sm:$0xff]
    %v2492 = vld [vmem:[#allocation17 + $0x50] sm:$0xff]
    %v2493 = vld [vmem:[#allocation17 + $0x58] sm:$0xff]
    %v2494 = vld [vmem:[#allocation17 + $0x60] sm:$0xff]
    %v2495 = vld [vmem:[#allocation17 + $0x68] sm:$0xff]
    %v2496 = vld [vmem:[#allocation17 + $0x70] sm:$0xff]
    %v2497 = vld [vmem:[#allocation17 + $0x78] sm:$0xff]
    %v2498 = vld [vmem:[#allocation17 + $0x80] sm:$0xff]
    %v2499 = vld [vmem:[#allocation17 + $0x88] sm:$0xff]
    %v2500 = vld [vmem:[#allocation17 + $0x90] sm:$0xff]
    %v2501 = vld [vmem:[#allocation17 + $0x98] sm:$0xff]
    %v2502 = vld [vmem:[#allocation17 + $0xa0] sm:$0xff]
    %v2503 = vld [vmem:[#allocation17 + $0xa8] sm:$0xff]
    %v2504 = vld [vmem:[#allocation17 + $0xb0] sm:$0xff]
    %v2505 = vld [vmem:[#allocation17 + $0xb8] sm:$0xff]
    %v2506 = vld [vmem:[#allocation17 + $0xc0] sm:$0xff]
    %v2507 = vld [vmem:[#allocation17 + $0xc8] sm:$0xff]
    %v2508 = vld [vmem:[#allocation17 + $0xd0] sm:$0xff]
    %v2509 = vld [vmem:[#allocation17 + $0xd8] sm:$0xff]
    %v2510 = vld [vmem:[#allocation17 + $0xe0] sm:$0xff]
    %v2511 = vld [vmem:[#allocation17 + $0xe8] sm:$0xff]
    %v2512 = vld [vmem:[#allocation17 + $0xf0] sm:$0xff]
    %v2513 = vld [vmem:[#allocation17 + $0xf8] sm:$0xff]
    %v2514 = vld [vmem:[#allocation17 + $0x100] sm:$0xff]
    %v2515 = vld [vmem:[#allocation17 + $0x108] sm:$0xff]
    %v2516 = vld [vmem:[#allocation17 + $0x110] sm:$0xff]
    %v2517 = vld [vmem:[#allocation17 + $0x118] sm:$0xff]
    %v2518 = vld [vmem:[#allocation17 + $0x120] sm:$0xff]
    %v2519 = vld [vmem:[#allocation17 + $0x128] sm:$0xff]
    %v2520 = vld [vmem:[#allocation17 + $0x130] sm:$0xff]
    %v2521 = vld [vmem:[#allocation17 + $0x138] sm:$0xff]
    %v2522 = vld [vmem:[#allocation17 + $0x140] sm:$0xff]
    %v2523 = vld [vmem:[#allocation17 + $0x148] sm:$0xff]
    %v2524 = vld [vmem:[#allocation17 + $0x150] sm:$0xff]
    %v2525 = vld [vmem:[#allocation17 + $0x158] sm:$0xff]
    %v2526 = vld [vmem:[#allocation17 + $0x160] sm:$0xff]
    %v2527 = vld [vmem:[#allocation17 + $0x168] sm:$0xff]
    %v2528 = vld [vmem:[#allocation17 + $0x170] sm:$0xff]
    %v2529 = vld [vmem:[#allocation17 + $0x178] sm:$0xff]
    %v2530 = vld [vmem:[#allocation17 + $0x180] sm:$0xff]
    %v2531 = vld [vmem:[#allocation17 + $0x188] sm:$0xff]
    %v2532 = vld [vmem:[#allocation17 + $0x190] sm:$0xff]
    %v2533 = vld [vmem:[#allocation17 + $0x198] sm:$0xff]
    %v2534 = vld [vmem:[#allocation17 + $0x1a0] sm:$0xff]
    %v2535 = vld [vmem:[#allocation17 + $0x1a8] sm:$0xff]
    %v2536 = vld [vmem:[#allocation17 + $0x1b0] sm:$0xff]
    %v2537 = vld [vmem:[#allocation17 + $0x1b8] sm:$0xff]
    %v2538 = vld [vmem:[#allocation17 + $0x1c0] sm:$0xff]
    %v2539 = vld [vmem:[#allocation17 + $0x1c8] sm:$0xff]
    %v2540 = vld [vmem:[#allocation17 + $0x1d0] sm:$0xff]
    %v2541 = vld [vmem:[#allocation17 + $0x1d8] sm:$0xff]
    %v2542 = vld [vmem:[#allocation17 + $0x1e0] sm:$0xff]
    %v2543 = vld [vmem:[#allocation17 + $0x1e8] sm:$0xff]
    %v2544 = vld [vmem:[#allocation17 + $0x1f0] sm:$0xff]
    %v2545 = vld [vmem:[#allocation17 + $0x1f8] sm:$0xff]
    %v2610 = vunpack.c.l.b16 %v2482
    %v2611 = vunpack.c.h.b16 %v2482
    %v2612 = vunpack.c.l.b16 %v2483
    %v2613 = vunpack.c.h.b16 %v2483
    %v2614 = vunpack.c.l.b16 %v2484
    %v2615 = vunpack.c.h.b16 %v2484
    %v2616 = vunpack.c.l.b16 %v2485
    %v2617 = vunpack.c.h.b16 %v2485
    %v2618 = vunpack.c.l.b16 %v2486
    %v2619 = vunpack.c.h.b16 %v2486
    %v2620 = vunpack.c.l.b16 %v2487
    %v2621 = vunpack.c.h.b16 %v2487
    %v2622 = vunpack.c.l.b16 %v2488
    %v2623 = vunpack.c.h.b16 %v2488
    %v2624 = vunpack.c.l.b16 %v2489
    %v2625 = vunpack.c.h.b16 %v2489
    %v2626 = vunpack.c.l.b16 %v2490
    %v2627 = vunpack.c.h.b16 %v2490
    %v2628 = vunpack.c.l.b16 %v2491
    %v2629 = vunpack.c.h.b16 %v2491
    %v2630 = vunpack.c.l.b16 %v2492
    %v2631 = vunpack.c.h.b16 %v2492
    %v2632 = vunpack.c.l.b16 %v2493
    %v2633 = vunpack.c.h.b16 %v2493
    %v2634 = vunpack.c.l.b16 %v2494
    %v2635 = vunpack.c.h.b16 %v2494
    %v2636 = vunpack.c.l.b16 %v2495
    %v2637 = vunpack.c.h.b16 %v2495
    %v2638 = vunpack.c.l.b16 %v2496
    %v2639 = vunpack.c.h.b16 %v2496
    %v2640 = vunpack.c.l.b16 %v2497
    %v2641 = vunpack.c.h.b16 %v2497
    %v2642 = vunpack.c.l.b16 %v2498
    %v2643 = vunpack.c.h.b16 %v2498
    %v2644 = vunpack.c.l.b16 %v2499
    %v2645 = vunpack.c.h.b16 %v2499
    %v2646 = vunpack.c.l.b16 %v2500
    %v2647 = vunpack.c.h.b16 %v2500
    %v2648 = vunpack.c.l.b16 %v2501
    %v2649 = vunpack.c.h.b16 %v2501
    %v2650 = vunpack.c.l.b16 %v2502
    %v2651 = vunpack.c.h.b16 %v2502
    %v2652 = vunpack.c.l.b16 %v2503
    %v2653 = vunpack.c.h.b16 %v2503
    %v2654 = vunpack.c.l.b16 %v2504
    %v2655 = vunpack.c.h.b16 %v2504
    %v2656 = vunpack.c.l.b16 %v2505
    %v2657 = vunpack.c.h.b16 %v2505
    %v2658 = vunpack.c.l.b16 %v2506
    %v2659 = vunpack.c.h.b16 %v2506
    %v2660 = vunpack.c.l.b16 %v2507
    %v2661 = vunpack.c.h.b16 %v2507
    %v2662 = vunpack.c.l.b16 %v2508
    %v2663 = vunpack.c.h.b16 %v2508
    %v2664 = vunpack.c.l.b16 %v2509
    %v2665 = vunpack.c.h.b16 %v2509
    %v2666 = vunpack.c.l.b16 %v2510
    %v2667 = vunpack.c.h.b16 %v2510
    %v2668 = vunpack.c.l.b16 %v2511
    %v2669 = vunpack.c.h.b16 %v2511
    %v2670 = vunpack.c.l.b16 %v2512
    %v2671 = vunpack.c.h.b16 %v2512
    %v2672 = vunpack.c.l.b16 %v2513
    %v2673 = vunpack.c.h.b16 %v2513
    %v2674 = vunpack.c.l.b16 %v2514
    %v2675 = vunpack.c.h.b16 %v2514
    %v2676 = vunpack.c.l.b16 %v2515
    %v2677 = vunpack.c.h.b16 %v2515
    %v2678 = vunpack.c.l.b16 %v2516
    %v2679 = vunpack.c.h.b16 %v2516
    %v2680 = vunpack.c.l.b16 %v2517
    %v2681 = vunpack.c.h.b16 %v2517
    %v2682 = vunpack.c.l.b16 %v2518
    %v2683 = vunpack.c.h.b16 %v2518
    %v2684 = vunpack.c.l.b16 %v2519
    %v2685 = vunpack.c.h.b16 %v2519
    %v2686 = vunpack.c.l.b16 %v2520
    %v2687 = vunpack.c.h.b16 %v2520
    %v2688 = vunpack.c.l.b16 %v2521
    %v2689 = vunpack.c.h.b16 %v2521
    %v2690 = vunpack.c.l.b16 %v2522
    %v2691 = vunpack.c.h.b16 %v2522
    %v2692 = vunpack.c.l.b16 %v2523
    %v2693 = vunpack.c.h.b16 %v2523
    %v2694 = vunpack.c.l.b16 %v2524
    %v2695 = vunpack.c.h.b16 %v2524
    %v2696 = vunpack.c.l.b16 %v2525
    %v2697 = vunpack.c.h.b16 %v2525
    %v2698 = vunpack.c.l.b16 %v2526
    %v2699 = vunpack.c.h.b16 %v2526
    %v2700 = vunpack.c.l.b16 %v2527
    %v2701 = vunpack.c.h.b16 %v2527
    %v2702 = vunpack.c.l.b16 %v2528
    %v2703 = vunpack.c.h.b16 %v2528
    %v2704 = vunpack.c.l.b16 %v2529
    %v2705 = vunpack.c.h.b16 %v2529
    %v2706 = vunpack.c.l.b16 %v2530
    %v2707 = vunpack.c.h.b16 %v2530
    %v2708 = vunpack.c.l.b16 %v2531
    %v2709 = vunpack.c.h.b16 %v2531
    %v2710 = vunpack.c.l.b16 %v2532
    %v2711 = vunpack.c.h.b16 %v2532
    %v2712 = vunpack.c.l.b16 %v2533
    %v2713 = vunpack.c.h.b16 %v2533
    %v2714 = vunpack.c.l.b16 %v2534
    %v2715 = vunpack.c.h.b16 %v2534
    %v2716 = vunpack.c.l.b16 %v2535
    %v2717 = vunpack.c.h.b16 %v2535
    %v2718 = vunpack.c.l.b16 %v2536
    %v2719 = vunpack.c.h.b16 %v2536
    %v2720 = vunpack.c.l.b16 %v2537
    %v2721 = vunpack.c.h.b16 %v2537
    %v2722 = vunpack.c.l.b16 %v2538
    %v2723 = vunpack.c.h.b16 %v2538
    %v2724 = vunpack.c.l.b16 %v2539
    %v2725 = vunpack.c.h.b16 %v2539
    %v2726 = vunpack.c.l.b16 %v2540
    %v2727 = vunpack.c.h.b16 %v2540
    %v2728 = vunpack.c.l.b16 %v2541
    %v2729 = vunpack.c.h.b16 %v2541
    %v2730 = vunpack.c.l.b16 %v2542
    %v2731 = vunpack.c.h.b16 %v2542
    %v2732 = vunpack.c.l.b16 %v2543
    %v2733 = vunpack.c.h.b16 %v2543
    %v2734 = vunpack.c.l.b16 %v2544
    %v2735 = vunpack.c.h.b16 %v2544
    %v2736 = vunpack.c.l.b16 %v2545
    %v2737 = vunpack.c.h.b16 %v2545
    %v2738 = vpack.c.b16 %v2614, %v2610
    %v2739 = vpack.c.b16 %v2615, %v2611
    %v2740 = vpack.c.b16 %v2616, %v2612
    %v2741 = vpack.c.b16 %v2617, %v2613
    %v2742 = vpack.c.b16 %v2622, %v2618
    %v2743 = vpack.c.b16 %v2623, %v2619
    %v2744 = vpack.c.b16 %v2624, %v2620
    %v2745 = vpack.c.b16 %v2625, %v2621
    %v2746 = vpack.c.b16 %v2630, %v2626
    %v2747 = vpack.c.b16 %v2631, %v2627
    %v2748 = vpack.c.b16 %v2632, %v2628
    %v2749 = vpack.c.b16 %v2633, %v2629
    %v2750 = vpack.c.b16 %v2638, %v2634
    %v2751 = vpack.c.b16 %v2639, %v2635
    %v2752 = vpack.c.b16 %v2640, %v2636
    %v2753 = vpack.c.b16 %v2641, %v2637
    %v2754 = vpack.c.b16 %v2646, %v2642
    %v2755 = vpack.c.b16 %v2647, %v2643
    %v2756 = vpack.c.b16 %v2648, %v2644
    %v2757 = vpack.c.b16 %v2649, %v2645
    %v2758 = vpack.c.b16 %v2654, %v2650
    %v2759 = vpack.c.b16 %v2655, %v2651
    %v2760 = vpack.c.b16 %v2656, %v2652
    %v2761 = vpack.c.b16 %v2657, %v2653
    %v2762 = vpack.c.b16 %v2662, %v2658
    %v2763 = vpack.c.b16 %v2663, %v2659
    %v2764 = vpack.c.b16 %v2664, %v2660
    %v2765 = vpack.c.b16 %v2665, %v2661
    %v2766 = vpack.c.b16 %v2670, %v2666
    %v2767 = vpack.c.b16 %v2671, %v2667
    %v2768 = vpack.c.b16 %v2672, %v2668
    %v2769 = vpack.c.b16 %v2673, %v2669
    %v2770 = vpack.c.b16 %v2678, %v2674
    %v2771 = vpack.c.b16 %v2679, %v2675
    %v2772 = vpack.c.b16 %v2680, %v2676
    %v2773 = vpack.c.b16 %v2681, %v2677
    %v2774 = vpack.c.b16 %v2686, %v2682
    %v2775 = vpack.c.b16 %v2687, %v2683
    %v2776 = vpack.c.b16 %v2688, %v2684
    %v2777 = vpack.c.b16 %v2689, %v2685
    %v2778 = vpack.c.b16 %v2694, %v2690
    %v2779 = vpack.c.b16 %v2695, %v2691
    %v2780 = vpack.c.b16 %v2696, %v2692
    %v2781 = vpack.c.b16 %v2697, %v2693
    %v2782 = vpack.c.b16 %v2702, %v2698
    %v2783 = vpack.c.b16 %v2703, %v2699
    %v2784 = vpack.c.b16 %v2704, %v2700
    %v2785 = vpack.c.b16 %v2705, %v2701
    %v2786 = vpack.c.b16 %v2710, %v2706
    %v2787 = vpack.c.b16 %v2711, %v2707
    %v2788 = vpack.c.b16 %v2712, %v2708
    %v2789 = vpack.c.b16 %v2713, %v2709
    %v2790 = vpack.c.b16 %v2718, %v2714
    %v2791 = vpack.c.b16 %v2719, %v2715
    %v2792 = vpack.c.b16 %v2720, %v2716
    %v2793 = vpack.c.b16 %v2721, %v2717
    %v2794 = vpack.c.b16 %v2726, %v2722
    %v2795 = vpack.c.b16 %v2727, %v2723
    %v2796 = vpack.c.b16 %v2728, %v2724
    %v2797 = vpack.c.b16 %v2729, %v2725
    %v2798 = vpack.c.b16 %v2734, %v2730
    %v2799 = vpack.c.b16 %v2735, %v2731
    %v2800 = vpack.c.b16 %v2736, %v2732
    %v2801 = vpack.c.b16 %v2737, %v2733
    %2866 = vmatprep.subr.bf16.mxu0 %v2739
    %2867 = vmatpush1.bf16.msra.mxu0 %v2738
    %2868 = vmatprep.subr.bf16.mxu0 %v2743
    %2869 = vmatpush1.bf16.msra.mxu0 %v2742
    %2870 = vmatprep.subr.bf16.mxu0 %v2747
    %2871 = vmatpush1.bf16.msra.mxu0 %v2746
    %2872 = vmatprep.subr.bf16.mxu0 %v2751
    %2873 = vmatpush1.bf16.msra.mxu0 %v2750
    %2874 = vmatprep.subr.bf16.mxu0 %v2755
    %2875 = vmatpush1.bf16.msra.mxu0 %v2754
    %2876 = vmatprep.subr.bf16.mxu0 %v2759
    %2877 = vmatpush1.bf16.msra.mxu0 %v2758
    %2878 = vmatprep.subr.bf16.mxu0 %v2763
    %2879 = vmatpush1.bf16.msra.mxu0 %v2762
    %2880 = vmatprep.subr.bf16.mxu0 %v2767
    %2881 = vmatpush1.bf16.msra.mxu0 %v2766
    %2882 = vmatprep.subr.bf16.mxu0 %v2771
    %2883 = vmatpush1.bf16.msra.mxu0 %v2770
    %2884 = vmatprep.subr.bf16.mxu0 %v2775
    %2885 = vmatpush1.bf16.msra.mxu0 %v2774
    %2886 = vmatprep.subr.bf16.mxu0 %v2779
    %2887 = vmatpush1.bf16.msra.mxu0 %v2778
    %2888 = vmatprep.subr.bf16.mxu0 %v2783
    %2889 = vmatpush1.bf16.msra.mxu0 %v2782
    %2890 = vmatprep.subr.bf16.mxu0 %v2787
    %2891 = vmatpush1.bf16.msra.mxu0 %v2786
    %2892 = vmatprep.subr.bf16.mxu0 %v2791
    %2893 = vmatpush1.bf16.msra.mxu0 %v2790
    %2894 = vmatprep.subr.bf16.mxu0 %v2795
    %2895 = vmatpush1.bf16.msra.mxu0 %v2794
    %2896 = vmatprep.subr.bf16.mxu0 %v2799
    %2897 = vmatpush1.bf16.msra.mxu0 %v2798
    %2898 = vmatprep.mubr.bf16.mxu0 %v2481
    %2899 = vmatmul.mubr.bf16.gmra.mrb[0].mxu0 %v2480
    %v2900 = vpop.f32.mrb[0].mxu0
    %v2901 = vadd.f32 0.0, %v2900
    %v2902 = vpop.f32.mrb[0].mxu0
    %v2903 = vadd.f32 0.0, %v2902
    %v2904 = vpop.f32.mrb[0].mxu0
    %v2905 = vpop.f32.mrb[0].mxu0
    %2906 = vdwg.mxu0
    %2907 = vmatprep.subr.bf16.mxu0 %v2741
    %2908 = vmatpush1.bf16.msra.mxu0 %v2740
    %2909 = vmatprep.subr.bf16.mxu0 %v2745
    %2910 = vmatpush1.bf16.msra.mxu0 %v2744
    %2911 = vmatprep.subr.bf16.mxu0 %v2749
    %2912 = vmatpush1.bf16.msra.mxu0 %v2748
    %2913 = vmatprep.subr.bf16.mxu0 %v2753
    %2914 = vmatpush1.bf16.msra.mxu0 %v2752
    %2915 = vmatprep.subr.bf16.mxu0 %v2757
    %2916 = vmatpush1.bf16.msra.mxu0 %v2756
    %2917 = vmatprep.subr.bf16.mxu0 %v2761
    %2918 = vmatpush1.bf16.msra.mxu0 %v2760
    %2919 = vmatprep.subr.bf16.mxu0 %v2765
    %2920 = vmatpush1.bf16.msra.mxu0 %v2764
    %2921 = vmatprep.subr.bf16.mxu0 %v2769
    %2922 = vmatpush1.bf16.msra.mxu0 %v2768
    %2923 = vmatprep.subr.bf16.mxu0 %v2773
    %2924 = vmatpush1.bf16.msra.mxu0 %v2772
    %2925 = vmatprep.subr.bf16.mxu0 %v2777
    %2926 = vmatpush1.bf16.msra.mxu0 %v2776
    %2927 = vmatprep.subr.bf16.mxu0 %v2781
    %2928 = vmatpush1.bf16.msra.mxu0 %v2780
    %2929 = vmatprep.subr.bf16.mxu0 %v2785
    %2930 = vmatpush1.bf16.msra.mxu0 %v2784
    %2931 = vmatprep.subr.bf16.mxu0 %v2789
    %2932 = vmatpush1.bf16.msra.mxu0 %v2788
    %2933 = vmatprep.subr.bf16.mxu0 %v2793
    %2934 = vmatpush1.bf16.msra.mxu0 %v2792
    %2935 = vmatprep.subr.bf16.mxu0 %v2797
    %2936 = vmatpush1.bf16.msra.mxu0 %v2796
    %2937 = vmatprep.subr.bf16.mxu0 %v2801
    %2938 = vmatpush1.bf16.msra.mxu0 %v2800
    %2939 = vmatprep.mubr.bf16.mxu0 %v2481
    %2940 = vmatmul.mubr.bf16.gmra.mrb[0].mxu0 %v2480
    %v2941 = vpop.f32.mrb[0].mxu0
    %v2942 = vadd.f32 0.0, %v2941
    %v2943 = vpop.f32.mrb[0].mxu0
    %v2944 = vadd.f32 0.0, %v2943
    %v2945 = vpop.f32.mrb[0].mxu0
    %v2946 = vpop.f32.mrb[0].mxu0
    %2947 = vdwg.mxu0
    %v3140 = vunpack.c.l.b16 %v2288
    %v3141 = vunpack.c.h.b16 %v2288
    %v3142 = vunpack.c.l.b16 %v2289
    %v3143 = vunpack.c.h.b16 %v2289
    %v3144 = vunpack.c.l.b16 %v2290
    %v3145 = vunpack.c.h.b16 %v2290
    %v3146 = vunpack.c.l.b16 %v2291
    %v3147 = vunpack.c.h.b16 %v2291
    %v3148 = vunpack.c.l.b16 %v2292
    %v3149 = vunpack.c.h.b16 %v2292
    %v3150 = vunpack.c.l.b16 %v2293
    %v3151 = vunpack.c.h.b16 %v2293
    %v3152 = vunpack.c.l.b16 %v2294
    %v3153 = vunpack.c.h.b16 %v2294
    %v3154 = vunpack.c.l.b16 %v2295
    %v3155 = vunpack.c.h.b16 %v2295
    %v3156 = vunpack.c.l.b16 %v2296
    %v3157 = vunpack.c.h.b16 %v2296
    %v3158 = vunpack.c.l.b16 %v2297
    %v3159 = vunpack.c.h.b16 %v2297
    %v3160 = vunpack.c.l.b16 %v2298
    %v3161 = vunpack.c.h.b16 %v2298
    %v3162 = vunpack.c.l.b16 %v2299
    %v3163 = vunpack.c.h.b16 %v2299
    %v3164 = vunpack.c.l.b16 %v2300
    %v3165 = vunpack.c.h.b16 %v2300
    %v3166 = vunpack.c.l.b16 %v2301
    %v3167 = vunpack.c.h.b16 %v2301
    %v3168 = vunpack.c.l.b16 %v2302
    %v3169 = vunpack.c.h.b16 %v2302
    %v3170 = vunpack.c.l.b16 %v2303
    %v3171 = vunpack.c.h.b16 %v2303
    %v3172 = vunpack.c.l.b16 %v2304
    %v3173 = vunpack.c.h.b16 %v2304
    %v3174 = vunpack.c.l.b16 %v2305
    %v3175 = vunpack.c.h.b16 %v2305
    %v3176 = vunpack.c.l.b16 %v2306
    %v3177 = vunpack.c.h.b16 %v2306
    %v3178 = vunpack.c.l.b16 %v2307
    %v3179 = vunpack.c.h.b16 %v2307
    %v3180 = vunpack.c.l.b16 %v2308
    %v3181 = vunpack.c.h.b16 %v2308
    %v3182 = vunpack.c.l.b16 %v2309
    %v3183 = vunpack.c.h.b16 %v2309
    %v3184 = vunpack.c.l.b16 %v2310
    %v3185 = vunpack.c.h.b16 %v2310
    %v3186 = vunpack.c.l.b16 %v2311
    %v3187 = vunpack.c.h.b16 %v2311
    %v3188 = vunpack.c.l.b16 %v2312
    %v3189 = vunpack.c.h.b16 %v2312
    %v3190 = vunpack.c.l.b16 %v2313
    %v3191 = vunpack.c.h.b16 %v2313
    %v3192 = vunpack.c.l.b16 %v2314
    %v3193 = vunpack.c.h.b16 %v2314
    %v3194 = vunpack.c.l.b16 %v2315
    %v3195 = vunpack.c.h.b16 %v2315
    %v3196 = vunpack.c.l.b16 %v2316
    %v3197 = vunpack.c.h.b16 %v2316
    %v3198 = vunpack.c.l.b16 %v2317
    %v3199 = vunpack.c.h.b16 %v2317
    %v3200 = vunpack.c.l.b16 %v2318
    %v3201 = vunpack.c.h.b16 %v2318
    %v3202 = vunpack.c.l.b16 %v2319
    %v3203 = vunpack.c.h.b16 %v2319
    %v3204 = vunpack.c.l.b16 %v2320
    %v3205 = vunpack.c.h.b16 %v2320
    %v3206 = vunpack.c.l.b16 %v2321
    %v3207 = vunpack.c.h.b16 %v2321
    %v3208 = vunpack.c.l.b16 %v2322
    %v3209 = vunpack.c.h.b16 %v2322
    %v3210 = vunpack.c.l.b16 %v2323
    %v3211 = vunpack.c.h.b16 %v2323
    %v3212 = vunpack.c.l.b16 %v2324
    %v3213 = vunpack.c.h.b16 %v2324
    %v3214 = vunpack.c.l.b16 %v2325
    %v3215 = vunpack.c.h.b16 %v2325
    %v3216 = vunpack.c.l.b16 %v2326
    %v3217 = vunpack.c.h.b16 %v2326
    %v3218 = vunpack.c.l.b16 %v2327
    %v3219 = vunpack.c.h.b16 %v2327
    %v3220 = vunpack.c.l.b16 %v2328
    %v3221 = vunpack.c.h.b16 %v2328
    %v3222 = vunpack.c.l.b16 %v2329
    %v3223 = vunpack.c.h.b16 %v2329
    %v3224 = vunpack.c.l.b16 %v2330
    %v3225 = vunpack.c.h.b16 %v2330
    %v3226 = vunpack.c.l.b16 %v2331
    %v3227 = vunpack.c.h.b16 %v2331
    %v3228 = vunpack.c.l.b16 %v2332
    %v3229 = vunpack.c.h.b16 %v2332
    %v3230 = vunpack.c.l.b16 %v2333
    %v3231 = vunpack.c.h.b16 %v2333
    %v3232 = vunpack.c.l.b16 %v2334
    %v3233 = vunpack.c.h.b16 %v2334
    %v3234 = vunpack.c.l.b16 %v2335
    %v3235 = vunpack.c.h.b16 %v2335
    %v3236 = vunpack.c.l.b16 %v2336
    %v3237 = vunpack.c.h.b16 %v2336
    %v3238 = vunpack.c.l.b16 %v2337
    %v3239 = vunpack.c.h.b16 %v2337
    %v3240 = vunpack.c.l.b16 %v2338
    %v3241 = vunpack.c.h.b16 %v2338
    %v3242 = vunpack.c.l.b16 %v2339
    %v3243 = vunpack.c.h.b16 %v2339
    %v3244 = vunpack.c.l.b16 %v2340
    %v3245 = vunpack.c.h.b16 %v2340
    %v3246 = vunpack.c.l.b16 %v2341
    %v3247 = vunpack.c.h.b16 %v2341
    %v3248 = vunpack.c.l.b16 %v2342
    %v3249 = vunpack.c.h.b16 %v2342
    %v3250 = vunpack.c.l.b16 %v2343
    %v3251 = vunpack.c.h.b16 %v2343
    %v3252 = vunpack.c.l.b16 %v2344
    %v3253 = vunpack.c.h.b16 %v2344
    %v3254 = vunpack.c.l.b16 %v2345
    %v3255 = vunpack.c.h.b16 %v2345
    %v3256 = vunpack.c.l.b16 %v2346
    %v3257 = vunpack.c.h.b16 %v2346
    %v3258 = vunpack.c.l.b16 %v2347
    %v3259 = vunpack.c.h.b16 %v2347
    %v3260 = vunpack.c.l.b16 %v2348
    %v3261 = vunpack.c.h.b16 %v2348
    %v3262 = vunpack.c.l.b16 %v2349
    %v3263 = vunpack.c.h.b16 %v2349
    %v3264 = vunpack.c.l.b16 %v2350
    %v3265 = vunpack.c.h.b16 %v2350
    %v3266 = vunpack.c.l.b16 %v2351
    %v3267 = vunpack.c.h.b16 %v2351
    %v3268 = vunpack.c.l.b16 %v2352
    %v3269 = vunpack.c.h.b16 %v2352
    %v3270 = vunpack.c.l.b16 %v2353
    %v3271 = vunpack.c.h.b16 %v2353
    %v3272 = vunpack.c.l.b16 %v2354
    %v3273 = vunpack.c.h.b16 %v2354
    %v3274 = vunpack.c.l.b16 %v2355
    %v3275 = vunpack.c.h.b16 %v2355
    %v3276 = vunpack.c.l.b16 %v2356
    %v3277 = vunpack.c.h.b16 %v2356
    %v3278 = vunpack.c.l.b16 %v2357
    %v3279 = vunpack.c.h.b16 %v2357
    %v3280 = vunpack.c.l.b16 %v2358
    %v3281 = vunpack.c.h.b16 %v2358
    %v3282 = vunpack.c.l.b16 %v2359
    %v3283 = vunpack.c.h.b16 %v2359
    %v3284 = vunpack.c.l.b16 %v2360
    %v3285 = vunpack.c.h.b16 %v2360
    %v3286 = vunpack.c.l.b16 %v2361
    %v3287 = vunpack.c.h.b16 %v2361
    %v3288 = vunpack.c.l.b16 %v2362
    %v3289 = vunpack.c.h.b16 %v2362
    %v3290 = vunpack.c.l.b16 %v2363
    %v3291 = vunpack.c.h.b16 %v2363
    %v3292 = vunpack.c.l.b16 %v2364
    %v3293 = vunpack.c.h.b16 %v2364
    %v3294 = vunpack.c.l.b16 %v2365
    %v3295 = vunpack.c.h.b16 %v2365
    %v3296 = vunpack.c.l.b16 %v2366
    %v3297 = vunpack.c.h.b16 %v2366
    %v3298 = vunpack.c.l.b16 %v2367
    %v3299 = vunpack.c.h.b16 %v2367
    %v3300 = vunpack.c.l.b16 %v2368
    %v3301 = vunpack.c.h.b16 %v2368
    %v3302 = vunpack.c.l.b16 %v2369
    %v3303 = vunpack.c.h.b16 %v2369
    %v3304 = vunpack.c.l.b16 %v2370
    %v3305 = vunpack.c.h.b16 %v2370
    %v3306 = vunpack.c.l.b16 %v2371
    %v3307 = vunpack.c.h.b16 %v2371
    %v3308 = vunpack.c.l.b16 %v2372
    %v3309 = vunpack.c.h.b16 %v2372
    %v3310 = vunpack.c.l.b16 %v2373
    %v3311 = vunpack.c.h.b16 %v2373
    %v3312 = vunpack.c.l.b16 %v2374
    %v3313 = vunpack.c.h.b16 %v2374
    %v3314 = vunpack.c.l.b16 %v2375
    %v3315 = vunpack.c.h.b16 %v2375
    %v3316 = vunpack.c.l.b16 %v2376
    %v3317 = vunpack.c.h.b16 %v2376
    %v3318 = vunpack.c.l.b16 %v2377
    %v3319 = vunpack.c.h.b16 %v2377
    %v3320 = vunpack.c.l.b16 %v2378
    %v3321 = vunpack.c.h.b16 %v2378
    %v3322 = vunpack.c.l.b16 %v2379
    %v3323 = vunpack.c.h.b16 %v2379
    %v3324 = vunpack.c.l.b16 %v2380
    %v3325 = vunpack.c.h.b16 %v2380
    %v3326 = vunpack.c.l.b16 %v2381
    %v3327 = vunpack.c.h.b16 %v2381
    %v3328 = vunpack.c.l.b16 %v2382
    %v3329 = vunpack.c.h.b16 %v2382
    %v3330 = vunpack.c.l.b16 %v2383
    %v3331 = vunpack.c.h.b16 %v2383
    %v3332 = vunpack.c.l.b16 %v2384
    %v3333 = vunpack.c.h.b16 %v2384
    %v3334 = vunpack.c.l.b16 %v2385
    %v3335 = vunpack.c.h.b16 %v2385
    %v3336 = vunpack.c.l.b16 %v2386
    %v3337 = vunpack.c.h.b16 %v2386
    %v3338 = vunpack.c.l.b16 %v2387
    %v3339 = vunpack.c.h.b16 %v2387
    %v3340 = vunpack.c.l.b16 %v2388
    %v3341 = vunpack.c.h.b16 %v2388
    %v3342 = vunpack.c.l.b16 %v2389
    %v3343 = vunpack.c.h.b16 %v2389
    %v3344 = vunpack.c.l.b16 %v2390
    %v3345 = vunpack.c.h.b16 %v2390
    %v3346 = vunpack.c.l.b16 %v2391
    %v3347 = vunpack.c.h.b16 %v2391
    %v3348 = vunpack.c.l.b16 %v2392
    %v3349 = vunpack.c.h.b16 %v2392
    %v3350 = vunpack.c.l.b16 %v2393
    %v3351 = vunpack.c.h.b16 %v2393
    %v3352 = vunpack.c.l.b16 %v2394
    %v3353 = vunpack.c.h.b16 %v2394
    %v3354 = vunpack.c.l.b16 %v2395
    %v3355 = vunpack.c.h.b16 %v2395
    %v3356 = vunpack.c.l.b16 %v2396
    %v3357 = vunpack.c.h.b16 %v2396
    %v3358 = vunpack.c.l.b16 %v2397
    %v3359 = vunpack.c.h.b16 %v2397
    %v3360 = vunpack.c.l.b16 %v2398
    %v3361 = vunpack.c.h.b16 %v2398
    %v3362 = vunpack.c.l.b16 %v2399
    %v3363 = vunpack.c.h.b16 %v2399
    %v3364 = vunpack.c.l.b16 %v2400
    %v3365 = vunpack.c.h.b16 %v2400
    %v3366 = vunpack.c.l.b16 %v2401
    %v3367 = vunpack.c.h.b16 %v2401
    %v3368 = vunpack.c.l.b16 %v2402
    %v3369 = vunpack.c.h.b16 %v2402
    %v3370 = vunpack.c.l.b16 %v2403
    %v3371 = vunpack.c.h.b16 %v2403
    %v3372 = vunpack.c.l.b16 %v2404
    %v3373 = vunpack.c.h.b16 %v2404
    %v3374 = vunpack.c.l.b16 %v2405
    %v3375 = vunpack.c.h.b16 %v2405
    %v3376 = vunpack.c.l.b16 %v2406
    %v3377 = vunpack.c.h.b16 %v2406
    %v3378 = vunpack.c.l.b16 %v2407
    %v3379 = vunpack.c.h.b16 %v2407
    %v3380 = vunpack.c.l.b16 %v2408
    %v3381 = vunpack.c.h.b16 %v2408
    %v3382 = vunpack.c.l.b16 %v2409
    %v3383 = vunpack.c.h.b16 %v2409
    %v3384 = vunpack.c.l.b16 %v2410
    %v3385 = vunpack.c.h.b16 %v2410
    %v3386 = vunpack.c.l.b16 %v2411
    %v3387 = vunpack.c.h.b16 %v2411
    %v3388 = vunpack.c.l.b16 %v2412
    %v3389 = vunpack.c.h.b16 %v2412
    %v3390 = vunpack.c.l.b16 %v2413
    %v3391 = vunpack.c.h.b16 %v2413
    %v3392 = vunpack.c.l.b16 %v2414
    %v3393 = vunpack.c.h.b16 %v2414
    %v3394 = vunpack.c.l.b16 %v2415
    %v3395 = vunpack.c.h.b16 %v2415
    %v3396 = vunpack.c.l.b16 %v2416
    %v3397 = vunpack.c.h.b16 %v2416
    %v3398 = vunpack.c.l.b16 %v2417
    %v3399 = vunpack.c.h.b16 %v2417
    %v3400 = vunpack.c.l.b16 %v2418
    %v3401 = vunpack.c.h.b16 %v2418
    %v3402 = vunpack.c.l.b16 %v2419
    %v3403 = vunpack.c.h.b16 %v2419
    %v3404 = vunpack.c.l.b16 %v2420
    %v3405 = vunpack.c.h.b16 %v2420
    %v3406 = vunpack.c.l.b16 %v2421
    %v3407 = vunpack.c.h.b16 %v2421
    %v3408 = vunpack.c.l.b16 %v2422
    %v3409 = vunpack.c.h.b16 %v2422
    %v3410 = vunpack.c.l.b16 %v2423
    %v3411 = vunpack.c.h.b16 %v2423
    %v3412 = vunpack.c.l.b16 %v2424
    %v3413 = vunpack.c.h.b16 %v2424
    %v3414 = vunpack.c.l.b16 %v2425
    %v3415 = vunpack.c.h.b16 %v2425
    %v3416 = vunpack.c.l.b16 %v2426
    %v3417 = vunpack.c.h.b16 %v2426
    %v3418 = vunpack.c.l.b16 %v2427
    %v3419 = vunpack.c.h.b16 %v2427
    %v3420 = vunpack.c.l.b16 %v2428
    %v3421 = vunpack.c.h.b16 %v2428
    %v3422 = vunpack.c.l.b16 %v2429
    %v3423 = vunpack.c.h.b16 %v2429
    %v3424 = vunpack.c.l.b16 %v2430
    %v3425 = vunpack.c.h.b16 %v2430
    %v3426 = vunpack.c.l.b16 %v2431
    %v3427 = vunpack.c.h.b16 %v2431
    %v3428 = vunpack.c.l.b16 %v2432
    %v3429 = vunpack.c.h.b16 %v2432
    %v3430 = vunpack.c.l.b16 %v2433
    %v3431 = vunpack.c.h.b16 %v2433
    %v3432 = vunpack.c.l.b16 %v2434
    %v3433 = vunpack.c.h.b16 %v2434
    %v3434 = vunpack.c.l.b16 %v2435
    %v3435 = vunpack.c.h.b16 %v2435
    %v3436 = vunpack.c.l.b16 %v2436
    %v3437 = vunpack.c.h.b16 %v2436
    %v3438 = vunpack.c.l.b16 %v2437
    %v3439 = vunpack.c.h.b16 %v2437
    %v3440 = vunpack.c.l.b16 %v2438
    %v3441 = vunpack.c.h.b16 %v2438
    %v3442 = vunpack.c.l.b16 %v2439
    %v3443 = vunpack.c.h.b16 %v2439
    %v3444 = vunpack.c.l.b16 %v2440
    %v3445 = vunpack.c.h.b16 %v2440
    %v3446 = vunpack.c.l.b16 %v2441
    %v3447 = vunpack.c.h.b16 %v2441
    %v3448 = vunpack.c.l.b16 %v2442
    %v3449 = vunpack.c.h.b16 %v2442
    %v3450 = vunpack.c.l.b16 %v2443
    %v3451 = vunpack.c.h.b16 %v2443
    %v3452 = vunpack.c.l.b16 %v2444
    %v3453 = vunpack.c.h.b16 %v2444
    %v3454 = vunpack.c.l.b16 %v2445
    %v3455 = vunpack.c.h.b16 %v2445
    %v3456 = vunpack.c.l.b16 %v2446
    %v3457 = vunpack.c.h.b16 %v2446
    %v3458 = vunpack.c.l.b16 %v2447
    %v3459 = vunpack.c.h.b16 %v2447
    %v3460 = vunpack.c.l.b16 %v2448
    %v3461 = vunpack.c.h.b16 %v2448
    %v3462 = vunpack.c.l.b16 %v2449
    %v3463 = vunpack.c.h.b16 %v2449
    %v3464 = vunpack.c.l.b16 %v2450
    %v3465 = vunpack.c.h.b16 %v2450
    %v3466 = vunpack.c.l.b16 %v2451
    %v3467 = vunpack.c.h.b16 %v2451
    %v3468 = vunpack.c.l.b16 %v2452
    %v3469 = vunpack.c.h.b16 %v2452
    %v3470 = vunpack.c.l.b16 %v2453
    %v3471 = vunpack.c.h.b16 %v2453
    %v3472 = vunpack.c.l.b16 %v2454
    %v3473 = vunpack.c.h.b16 %v2454
    %v3474 = vunpack.c.l.b16 %v2455
    %v3475 = vunpack.c.h.b16 %v2455
    %v3476 = vunpack.c.l.b16 %v2456
    %v3477 = vunpack.c.h.b16 %v2456
    %v3478 = vunpack.c.l.b16 %v2457
    %v3479 = vunpack.c.h.b16 %v2457
    %v3480 = vunpack.c.l.b16 %v2458
    %v3481 = vunpack.c.h.b16 %v2458
    %v3482 = vunpack.c.l.b16 %v2459
    %v3483 = vunpack.c.h.b16 %v2459
    %v3484 = vunpack.c.l.b16 %v2460
    %v3485 = vunpack.c.h.b16 %v2460
    %v3486 = vunpack.c.l.b16 %v2461
    %v3487 = vunpack.c.h.b16 %v2461
    %v3488 = vunpack.c.l.b16 %v2462
    %v3489 = vunpack.c.h.b16 %v2462
    %v3490 = vunpack.c.l.b16 %v2463
    %v3491 = vunpack.c.h.b16 %v2463
    %v3492 = vunpack.c.l.b16 %v2464
    %v3493 = vunpack.c.h.b16 %v2464
    %v3494 = vunpack.c.l.b16 %v2465
    %v3495 = vunpack.c.h.b16 %v2465
    %v3496 = vunpack.c.l.b16 %v2466
    %v3497 = vunpack.c.h.b16 %v2466
    %v3498 = vunpack.c.l.b16 %v2467
    %v3499 = vunpack.c.h.b16 %v2467
    %v3500 = vunpack.c.l.b16 %v2468
    %v3501 = vunpack.c.h.b16 %v2468
    %v3502 = vunpack.c.l.b16 %v2469
    %v3503 = vunpack.c.h.b16 %v2469
    %v3504 = vunpack.c.l.b16 %v2470
    %v3505 = vunpack.c.h.b16 %v2470
    %v3506 = vunpack.c.l.b16 %v2471
    %v3507 = vunpack.c.h.b16 %v2471
    %v3508 = vunpack.c.l.b16 %v2472
    %v3509 = vunpack.c.h.b16 %v2472
    %v3510 = vunpack.c.l.b16 %v2473
    %v3511 = vunpack.c.h.b16 %v2473
    %v3512 = vunpack.c.l.b16 %v2474
    %v3513 = vunpack.c.h.b16 %v2474
    %v3514 = vunpack.c.l.b16 %v2475
    %v3515 = vunpack.c.h.b16 %v2475
    %v3516 = vunpack.c.l.b16 %v2476
    %v3517 = vunpack.c.h.b16 %v2476
    %v3518 = vunpack.c.l.b16 %v2477
    %v3519 = vunpack.c.h.b16 %v2477
    %v3520 = vunpack.c.l.b16 %v2478
    %v3521 = vunpack.c.h.b16 %v2478
    %v3522 = vunpack.c.l.b16 %v2479
    %v3523 = vunpack.c.h.b16 %v2479
    %v3524 = vpack.c.b16 %v3144, %v3140
    %v3525 = vpack.c.b16 %v3145, %v3141
    %v3526 = vpack.c.b16 %v3146, %v3142
    %v3527 = vpack.c.b16 %v3147, %v3143
    %v3528 = vpack.c.b16 %v3152, %v3148
    %v3529 = vpack.c.b16 %v3153, %v3149
    %v3530 = vpack.c.b16 %v3154, %v3150
    %v3531 = vpack.c.b16 %v3155, %v3151
    %v3532 = vpack.c.b16 %v3160, %v3156
    %v3533 = vpack.c.b16 %v3161, %v3157
    %v3534 = vpack.c.b16 %v3162, %v3158
    %v3535 = vpack.c.b16 %v3163, %v3159
    %v3536 = vpack.c.b16 %v3168, %v3164
    %v3537 = vpack.c.b16 %v3169, %v3165
    %v3538 = vpack.c.b16 %v3170, %v3166
    %v3539 = vpack.c.b16 %v3171, %v3167
    %v3540 = vpack.c.b16 %v3176, %v3172
    %v3541 = vpack.c.b16 %v3177, %v3173
    %v3542 = vpack.c.b16 %v3178, %v3174
    %v3543 = vpack.c.b16 %v3179, %v3175
    %v3544 = vpack.c.b16 %v3184, %v3180
    %v3545 = vpack.c.b16 %v3185, %v3181
    %v3546 = vpack.c.b16 %v3186, %v3182
    %v3547 = vpack.c.b16 %v3187, %v3183
    %v3548 = vpack.c.b16 %v3192, %v3188
    %v3549 = vpack.c.b16 %v3193, %v3189
    %v3550 = vpack.c.b16 %v3194, %v3190
    %v3551 = vpack.c.b16 %v3195, %v3191
    %v3552 = vpack.c.b16 %v3200, %v3196
    %v3553 = vpack.c.b16 %v3201, %v3197
    %v3554 = vpack.c.b16 %v3202, %v3198
    %v3555 = vpack.c.b16 %v3203, %v3199
    %v3556 = vpack.c.b16 %v3208, %v3204
    %v3557 = vpack.c.b16 %v3209, %v3205
    %v3558 = vpack.c.b16 %v3210, %v3206
    %v3559 = vpack.c.b16 %v3211, %v3207
    %v3560 = vpack.c.b16 %v3216, %v3212
    %v3561 = vpack.c.b16 %v3217, %v3213
    %v3562 = vpack.c.b16 %v3218, %v3214
    %v3563 = vpack.c.b16 %v3219, %v3215
    %v3564 = vpack.c.b16 %v3224, %v3220
    %v3565 = vpack.c.b16 %v3225, %v3221
    %v3566 = vpack.c.b16 %v3226, %v3222
    %v3567 = vpack.c.b16 %v3227, %v3223
    %v3568 = vpack.c.b16 %v3232, %v3228
    %v3569 = vpack.c.b16 %v3233, %v3229
    %v3570 = vpack.c.b16 %v3234, %v3230
    %v3571 = vpack.c.b16 %v3235, %v3231
    %v3572 = vpack.c.b16 %v3240, %v3236
    %v3573 = vpack.c.b16 %v3241, %v3237
    %v3574 = vpack.c.b16 %v3242, %v3238
    %v3575 = vpack.c.b16 %v3243, %v3239
    %v3576 = vpack.c.b16 %v3248, %v3244
    %v3577 = vpack.c.b16 %v3249, %v3245
    %v3578 = vpack.c.b16 %v3250, %v3246
    %v3579 = vpack.c.b16 %v3251, %v3247
    %v3580 = vpack.c.b16 %v3256, %v3252
    %v3581 = vpack.c.b16 %v3257, %v3253
    %v3582 = vpack.c.b16 %v3258, %v3254
    %v3583 = vpack.c.b16 %v3259, %v3255
    %v3584 = vpack.c.b16 %v3264, %v3260
    %v3585 = vpack.c.b16 %v3265, %v3261
    %v3586 = vpack.c.b16 %v3266, %v3262
    %v3587 = vpack.c.b16 %v3267, %v3263
    %v3588 = vpack.c.b16 %v3272, %v3268
    %v3589 = vpack.c.b16 %v3273, %v3269
    %v3590 = vpack.c.b16 %v3274, %v3270
    %v3591 = vpack.c.b16 %v3275, %v3271
    %v3592 = vpack.c.b16 %v3280, %v3276
    %v3593 = vpack.c.b16 %v3281, %v3277
    %v3594 = vpack.c.b16 %v3282, %v3278
    %v3595 = vpack.c.b16 %v3283, %v3279
    %v3596 = vpack.c.b16 %v3288, %v3284
    %v3597 = vpack.c.b16 %v3289, %v3285
    %v3598 = vpack.c.b16 %v3290, %v3286
    %v3599 = vpack.c.b16 %v3291, %v3287
    %v3600 = vpack.c.b16 %v3296, %v3292
    %v3601 = vpack.c.b16 %v3297, %v3293
    %v3602 = vpack.c.b16 %v3298, %v3294
    %v3603 = vpack.c.b16 %v3299, %v3295
    %v3604 = vpack.c.b16 %v3304, %v3300
    %v3605 = vpack.c.b16 %v3305, %v3301
    %v3606 = vpack.c.b16 %v3306, %v3302
    %v3607 = vpack.c.b16 %v3307, %v3303
    %v3608 = vpack.c.b16 %v3312, %v3308
    %v3609 = vpack.c.b16 %v3313, %v3309
    %v3610 = vpack.c.b16 %v3314, %v3310
    %v3611 = vpack.c.b16 %v3315, %v3311
    %v3612 = vpack.c.b16 %v3320, %v3316
    %v3613 = vpack.c.b16 %v3321, %v3317
    %v3614 = vpack.c.b16 %v3322, %v3318
    %v3615 = vpack.c.b16 %v3323, %v3319
    %v3616 = vpack.c.b16 %v3328, %v3324
    %v3617 = vpack.c.b16 %v3329, %v3325
    %v3618 = vpack.c.b16 %v3330, %v3326
    %v3619 = vpack.c.b16 %v3331, %v3327
    %v3620 = vpack.c.b16 %v3336, %v3332
    %v3621 = vpack.c.b16 %v3337, %v3333
    %v3622 = vpack.c.b16 %v3338, %v3334
    %v3623 = vpack.c.b16 %v3339, %v3335
    %v3624 = vpack.c.b16 %v3344, %v3340
    %v3625 = vpack.c.b16 %v3345, %v3341
    %v3626 = vpack.c.b16 %v3346, %v3342
    %v3627 = vpack.c.b16 %v3347, %v3343
    %v3628 = vpack.c.b16 %v3352, %v3348
    %v3629 = vpack.c.b16 %v3353, %v3349
    %v3630 = vpack.c.b16 %v3354, %v3350
    %v3631 = vpack.c.b16 %v3355, %v3351
    %v3632 = vpack.c.b16 %v3360, %v3356
    %v3633 = vpack.c.b16 %v3361, %v3357
    %v3634 = vpack.c.b16 %v3362, %v3358
    %v3635 = vpack.c.b16 %v3363, %v3359
    %v3636 = vpack.c.b16 %v3368, %v3364
    %v3637 = vpack.c.b16 %v3369, %v3365
    %v3638 = vpack.c.b16 %v3370, %v3366
    %v3639 = vpack.c.b16 %v3371, %v3367
    %v3640 = vpack.c.b16 %v3376, %v3372
    %v3641 = vpack.c.b16 %v3377, %v3373
    %v3642 = vpack.c.b16 %v3378, %v3374
    %v3643 = vpack.c.b16 %v3379, %v3375
    %v3644 = vpack.c.b16 %v3384, %v3380
    %v3645 = vpack.c.b16 %v3385, %v3381
    %v3646 = vpack.c.b16 %v3386, %v3382
    %v3647 = vpack.c.b16 %v3387, %v3383
    %v3648 = vpack.c.b16 %v3392, %v3388
    %v3649 = vpack.c.b16 %v3393, %v3389
    %v3650 = vpack.c.b16 %v3394, %v3390
    %v3651 = vpack.c.b16 %v3395, %v3391
    %v3652 = vpack.c.b16 %v3400, %v3396
    %v3653 = vpack.c.b16 %v3401, %v3397
    %v3654 = vpack.c.b16 %v3402, %v3398
    %v3655 = vpack.c.b16 %v3403, %v3399
    %v3656 = vpack.c.b16 %v3408, %v3404
    %v3657 = vpack.c.b16 %v3409, %v3405
    %v3658 = vpack.c.b16 %v3410, %v3406
    %v3659 = vpack.c.b16 %v3411, %v3407
    %v3660 = vpack.c.b16 %v3416, %v3412
    %v3661 = vpack.c.b16 %v3417, %v3413
    %v3662 = vpack.c.b16 %v3418, %v3414
    %v3663 = vpack.c.b16 %v3419, %v3415
    %v3664 = vpack.c.b16 %v3424, %v3420
    %v3665 = vpack.c.b16 %v3425, %v3421
    %v3666 = vpack.c.b16 %v3426, %v3422
    %v3667 = vpack.c.b16 %v3427, %v3423
    %v3668 = vpack.c.b16 %v3432, %v3428
    %v3669 = vpack.c.b16 %v3433, %v3429
    %v3670 = vpack.c.b16 %v3434, %v3430
    %v3671 = vpack.c.b16 %v3435, %v3431
    %v3672 = vpack.c.b16 %v3440, %v3436
    %v3673 = vpack.c.b16 %v3441, %v3437
    %v3674 = vpack.c.b16 %v3442, %v3438
    %v3675 = vpack.c.b16 %v3443, %v3439
    %v3676 = vpack.c.b16 %v3448, %v3444
    %v3677 = vpack.c.b16 %v3449, %v3445
    %v3678 = vpack.c.b16 %v3450, %v3446
    %v3679 = vpack.c.b16 %v3451, %v3447
    %v3680 = vpack.c.b16 %v3456, %v3452
    %v3681 = vpack.c.b16 %v3457, %v3453
    %v3682 = vpack.c.b16 %v3458, %v3454
    %v3683 = vpack.c.b16 %v3459, %v3455
    %v3684 = vpack.c.b16 %v3464, %v3460
    %v3685 = vpack.c.b16 %v3465, %v3461
    %v3686 = vpack.c.b16 %v3466, %v3462
    %v3687 = vpack.c.b16 %v3467, %v3463
    %v3688 = vpack.c.b16 %v3472, %v3468
    %v3689 = vpack.c.b16 %v3473, %v3469
    %v3690 = vpack.c.b16 %v3474, %v3470
    %v3691 = vpack.c.b16 %v3475, %v3471
    %v3692 = vpack.c.b16 %v3480, %v3476
    %v3693 = vpack.c.b16 %v3481, %v3477
    %v3694 = vpack.c.b16 %v3482, %v3478
    %v3695 = vpack.c.b16 %v3483, %v3479
    %v3696 = vpack.c.b16 %v3488, %v3484
    %v3697 = vpack.c.b16 %v3489, %v3485
    %v3698 = vpack.c.b16 %v3490, %v3486
    %v3699 = vpack.c.b16 %v3491, %v3487
    %v3700 = vpack.c.b16 %v3496, %v3492
    %v3701 = vpack.c.b16 %v3497, %v3493
    %v3702 = vpack.c.b16 %v3498, %v3494
    %v3703 = vpack.c.b16 %v3499, %v3495
    %v3704 = vpack.c.b16 %v3504, %v3500
    %v3705 = vpack.c.b16 %v3505, %v3501
    %v3706 = vpack.c.b16 %v3506, %v3502
    %v3707 = vpack.c.b16 %v3507, %v3503
    %v3708 = vpack.c.b16 %v3512, %v3508
    %v3709 = vpack.c.b16 %v3513, %v3509
    %v3710 = vpack.c.b16 %v3514, %v3510
    %v3711 = vpack.c.b16 %v3515, %v3511
    %v3712 = vpack.c.b16 %v3520, %v3516
    %v3713 = vpack.c.b16 %v3521, %v3517
    %v3714 = vpack.c.b16 %v3522, %v3518
    %v3715 = vpack.c.b16 %v3523, %v3519
    %3908 = vmatprep.subr.bf16.mxu0 %v3525
    %3909 = vmatpush1.bf16.msra.mxu0 %v3524
    %3910 = vmatprep.subr.bf16.mxu0 %v3529
    %3911 = vmatpush1.bf16.msra.mxu0 %v3528
    %3912 = vmatprep.subr.bf16.mxu0 %v3533
    %3913 = vmatpush1.bf16.msra.mxu0 %v3532
    %3914 = vmatprep.subr.bf16.mxu0 %v3537
    %3915 = vmatpush1.bf16.msra.mxu0 %v3536
    %3916 = vmatprep.subr.bf16.mxu0 %v3541
    %3917 = vmatpush1.bf16.msra.mxu0 %v3540
    %3918 = vmatprep.subr.bf16.mxu0 %v3545
    %3919 = vmatpush1.bf16.msra.mxu0 %v3544
    %3920 = vmatprep.subr.bf16.mxu0 %v3549
    %3921 = vmatpush1.bf16.msra.mxu0 %v3548
    %3922 = vmatprep.subr.bf16.mxu0 %v3553
    %3923 = vmatpush1.bf16.msra.mxu0 %v3552
    %3924 = vmatprep.subr.bf16.mxu0 %v3557
    %3925 = vmatpush1.bf16.msra.mxu0 %v3556
    %3926 = vmatprep.subr.bf16.mxu0 %v3561
    %3927 = vmatpush1.bf16.msra.mxu0 %v3560
    %3928 = vmatprep.subr.bf16.mxu0 %v3565
    %3929 = vmatpush1.bf16.msra.mxu0 %v3564
    %3930 = vmatprep.subr.bf16.mxu0 %v3569
    %3931 = vmatpush1.bf16.msra.mxu0 %v3568
    %3932 = vmatprep.subr.bf16.mxu0 %v3573
    %3933 = vmatpush1.bf16.msra.mxu0 %v3572
    %3934 = vmatprep.subr.bf16.mxu0 %v3577
    %3935 = vmatpush1.bf16.msra.mxu0 %v3576
    %3936 = vmatprep.subr.bf16.mxu0 %v3581
    %3937 = vmatpush1.bf16.msra.mxu0 %v3580
    %3938 = vmatprep.subr.bf16.mxu0 %v3585
    %3939 = vmatpush1.bf16.msra.mxu0 %v3584
    %3940 = vmatprep.mubr.bf16.mxu0 %v2283
    %3941 = vmatmul.mubr.bf16.gmra.mrb[0].mxu0 %v2282
    %v3942 = vpop.f32.mrb[0].mxu0
    %v3943 = vadd.f32 %v2901, %v3942
    %v3944 = vpop.f32.mrb[0].mxu0
    %v3945 = vadd.f32 %v2903, %v3944
    %v3946 = vpop.f32.mrb[0].mxu0
    %v3947 = vpop.f32.mrb[0].mxu0
    %3948 = vdwg.mxu0
    %3949 = vmatprep.subr.bf16.mxu0 %v3589
    %3950 = vmatpush1.bf16.msra.mxu0 %v3588
    %3951 = vmatprep.subr.bf16.mxu0 %v3593
    %3952 = vmatpush1.bf16.msra.mxu0 %v3592
    %3953 = vmatprep.subr.bf16.mxu0 %v3597
    %3954 = vmatpush1.bf16.msra.mxu0 %v3596
    %3955 = vmatprep.subr.bf16.mxu0 %v3601
    %3956 = vmatpush1.bf16.msra.mxu0 %v3600
    %3957 = vmatprep.subr.bf16.mxu0 %v3605
    %3958 = vmatpush1.bf16.msra.mxu0 %v3604
    %3959 = vmatprep.subr.bf16.mxu0 %v3609
    %3960 = vmatpush1.bf16.msra.mxu0 %v3608
    %3961 = vmatprep.subr.bf16.mxu0 %v3613
    %3962 = vmatpush1.bf16.msra.mxu0 %v3612
    %3963 = vmatprep.subr.bf16.mxu0 %v3617
    %3964 = vmatpush1.bf16.msra.mxu0 %v3616
    %3965 = vmatprep.subr.bf16.mxu0 %v3621
    %3966 = vmatpush1.bf16.msra.mxu0 %v3620
    %3967 = vmatprep.subr.bf16.mxu0 %v3625
    %3968 = vmatpush1.bf16.msra.mxu0 %v3624
    %3969 = vmatprep.subr.bf16.mxu0 %v3629
    %3970 = vmatpush1.bf16.msra.mxu0 %v3628
    %3971 = vmatprep.subr.bf16.mxu0 %v3633
    %3972 = vmatpush1.bf16.msra.mxu0 %v3632
    %3973 = vmatprep.subr.bf16.mxu0 %v3637
    %3974 = vmatpush1.bf16.msra.mxu0 %v3636
    %3975 = vmatprep.subr.bf16.mxu0 %v3641
    %3976 = vmatpush1.bf16.msra.mxu0 %v3640
    %3977 = vmatprep.subr.bf16.mxu0 %v3645
    %3978 = vmatpush1.bf16.msra.mxu0 %v3644
    %3979 = vmatprep.subr.bf16.mxu0 %v3649
    %3980 = vmatpush1.bf16.msra.mxu0 %v3648
    %3981 = vmatprep.mubr.bf16.mxu0 %v2285
    %3982 = vmatmul.mubr.bf16.gmra.mrb[0].mxu0 %v2284
    %v3983 = vpop.f32.mrb[0].mxu0
    %v3984 = vadd.f32 %v3943, %v3983
    %v3985 = vpop.f32.mrb[0].mxu0
    %v3986 = vadd.f32 %v3945, %v3985
    %v3987 = vpop.f32.mrb[0].mxu0
    %v3988 = vpop.f32.mrb[0].mxu0
    %3989 = vdwg.mxu0
    %3990 = vmatprep.subr.bf16.mxu0 %v3653
    %3991 = vmatpush1.bf16.msra.mxu0 %v3652
    %3992 = vmatprep.subr.bf16.mxu0 %v3657
    %3993 = vmatpush1.bf16.msra.mxu0 %v3656
    %3994 = vmatprep.subr.bf16.mxu0 %v3661
    %3995 = vmatpush1.bf16.msra.mxu0 %v3660
    %3996 = vmatprep.subr.bf16.mxu0 %v3665
    %3997 = vmatpush1.bf16.msra.mxu0 %v3664
    %3998 = vmatprep.subr.bf16.mxu0 %v3669
    %3999 = vmatpush1.bf16.msra.mxu0 %v3668
    %4000 = vmatprep.subr.bf16.mxu0 %v3673
    %4001 = vmatpush1.bf16.msra.mxu0 %v3672
    %4002 = vmatprep.subr.bf16.mxu0 %v3677
    %4003 = vmatpush1.bf16.msra.mxu0 %v3676
    %4004 = vmatprep.subr.bf16.mxu0 %v3681
    %4005 = vmatpush1.bf16.msra.mxu0 %v3680
    %4006 = vmatprep.subr.bf16.mxu0 %v3685
    %4007 = vmatpush1.bf16.msra.mxu0 %v3684
    %4008 = vmatprep.subr.bf16.mxu0 %v3689
    %4009 = vmatpush1.bf16.msra.mxu0 %v3688
    %4010 = vmatprep.subr.bf16.mxu0 %v3693
    %4011 = vmatpush1.bf16.msra.mxu0 %v3692
    %4012 = vmatprep.subr.bf16.mxu0 %v3697
    %4013 = vmatpush1.bf16.msra.mxu0 %v3696
    %4014 = vmatprep.subr.bf16.mxu0 %v3701
    %4015 = vmatpush1.bf16.msra.mxu0 %v3700
    %4016 = vmatprep.subr.bf16.mxu0 %v3705
    %4017 = vmatpush1.bf16.msra.mxu0 %v3704
    %4018 = vmatprep.subr.bf16.mxu0 %v3709
    %4019 = vmatpush1.bf16.msra.mxu0 %v3708
    %4020 = vmatprep.subr.bf16.mxu0 %v3713
    %4021 = vmatpush1.bf16.msra.mxu0 %v3712
    %4022 = vmatprep.mubr.bf16.mxu0 %v2287
    %4023 = vmatmul.mubr.bf16.gmra.mrb[0].mxu0 %v2286
    %v4024 = vpop.f32.mrb[0].mxu0
    %v4025 = vadd.f32 %v3984, %v4024
    %v4026 = vpop.f32.mrb[0].mxu0
    %v4027 = vadd.f32 %v3986, %v4026
    %v4028 = vpop.f32.mrb[0].mxu0
    %v4029 = vpop.f32.mrb[0].mxu0
    %4030 = vdwg.mxu0
    %4031 = vmatprep.subr.bf16.mxu0 %v3527
    %4032 = vmatpush1.bf16.msra.mxu0 %v3526
    %4033 = vmatprep.subr.bf16.mxu0 %v3531
    %4034 = vmatpush1.bf16.msra.mxu0 %v3530
    %4035 = vmatprep.subr.bf16.mxu0 %v3535
    %4036 = vmatpush1.bf16.msra.mxu0 %v3534
    %4037 = vmatprep.subr.bf16.mxu0 %v3539
    %4038 = vmatpush1.bf16.msra.mxu0 %v3538
    %4039 = vmatprep.subr.bf16.mxu0 %v3543
    %4040 = vmatpush1.bf16.msra.mxu0 %v3542
    %4041 = vmatprep.subr.bf16.mxu0 %v3547
    %4042 = vmatpush1.bf16.msra.mxu0 %v3546
    %4043 = vmatprep.subr.bf16.mxu0 %v3551
    %4044 = vmatpush1.bf16.msra.mxu0 %v3550
    %4045 = vmatprep.subr.bf16.mxu0 %v3555
    %4046 = vmatpush1.bf16.msra.mxu0 %v3554
    %4047 = vmatprep.subr.bf16.mxu0 %v3559
    %4048 = vmatpush1.bf16.msra.mxu0 %v3558
    %4049 = vmatprep.subr.bf16.mxu0 %v3563
    %4050 = vmatpush1.bf16.msra.mxu0 %v3562
    %4051 = vmatprep.subr.bf16.mxu0 %v3567
    %4052 = vmatpush1.bf16.msra.mxu0 %v3566
    %4053 = vmatprep.subr.bf16.mxu0 %v3571
    %4054 = vmatpush1.bf16.msra.mxu0 %v3570
    %4055 = vmatprep.subr.bf16.mxu0 %v3575
    %4056 = vmatpush1.bf16.msra.mxu0 %v3574
    %4057 = vmatprep.subr.bf16.mxu0 %v3579
    %4058 = vmatpush1.bf16.msra.mxu0 %v3578
    %4059 = vmatprep.subr.bf16.mxu0 %v3583
    %4060 = vmatpush1.bf16.msra.mxu0 %v3582
    %4061 = vmatprep.subr.bf16.mxu0 %v3587
    %4062 = vmatpush1.bf16.msra.mxu0 %v3586
    %4063 = vmatprep.mubr.bf16.mxu0 %v2283
    %4064 = vmatmul.mubr.bf16.gmra.mrb[0].mxu0 %v2282
    %v4065 = vpop.f32.mrb[0].mxu0
    %v4066 = vadd.f32 %v2942, %v4065
    %v4067 = vpop.f32.mrb[0].mxu0
    %v4068 = vadd.f32 %v2944, %v4067
    %v4069 = vpop.f32.mrb[0].mxu0
    %v4070 = vpop.f32.mrb[0].mxu0
    %4071 = vdwg.mxu0
    %4072 = vmatprep.subr.bf16.mxu0 %v3591
    %4073 = vmatpush1.bf16.msra.mxu0 %v3590
    %4074 = vmatprep.subr.bf16.mxu0 %v3595
    %4075 = vmatpush1.bf16.msra.mxu0 %v3594
    %4076 = vmatprep.subr.bf16.mxu0 %v3599
    %4077 = vmatpush1.bf16.msra.mxu0 %v3598
    %4078 = vmatprep.subr.bf16.mxu0 %v3603
    %4079 = vmatpush1.bf16.msra.mxu0 %v3602
    %4080 = vmatprep.subr.bf16.mxu0 %v3607
    %4081 = vmatpush1.bf16.msra.mxu0 %v3606
    %4082 = vmatprep.subr.bf16.mxu0 %v3611
    %4083 = vmatpush1.bf16.msra.mxu0 %v3610
    %4084 = vmatprep.subr.bf16.mxu0 %v3615
    %4085 = vmatpush1.bf16.msra.mxu0 %v3614
    %4086 = vmatprep.subr.bf16.mxu0 %v3619
    %4087 = vmatpush1.bf16.msra.mxu0 %v3618
    %4088 = vmatprep.subr.bf16.mxu0 %v3623
    %4089 = vmatpush1.bf16.msra.mxu0 %v3622
    %4090 = vmatprep.subr.bf16.mxu0 %v3627
    %4091 = vmatpush1.bf16.msra.mxu0 %v3626
    %4092 = vmatprep.subr.bf16.mxu0 %v3631
    %4093 = vmatpush1.bf16.msra.mxu0 %v3630
    %4094 = vmatprep.subr.bf16.mxu0 %v3635
    %4095 = vmatpush1.bf16.msra.mxu0 %v3634
    %4096 = vmatprep.subr.bf16.mxu0 %v3639
    %4097 = vmatpush1.bf16.msra.mxu0 %v3638
    %4098 = vmatprep.subr.bf16.mxu0 %v3643
    %4099 = vmatpush1.bf16.msra.mxu0 %v3642
    %4100 = vmatprep.subr.bf16.mxu0 %v3647
    %4101 = vmatpush1.bf16.msra.mxu0 %v3646
    %4102 = vmatprep.subr.bf16.mxu0 %v3651
    %4103 = vmatpush1.bf16.msra.mxu0 %v3650
    %4104 = vmatprep.mubr.bf16.mxu0 %v2285
    %4105 = vmatmul.mubr.bf16.gmra.mrb[0].mxu0 %v2284
    %v4106 = vpop.f32.mrb[0].mxu0
    %v4107 = vadd.f32 %v4066, %v4106
    %v4108 = vpop.f32.mrb[0].mxu0
    %v4109 = vadd.f32 %v4068, %v4108
    %v4110 = vpop.f32.mrb[0].mxu0
    %v4111 = vpop.f32.mrb[0].mxu0
    %4112 = vdwg.mxu0
    %4113 = vmatprep.subr.bf16.mxu0 %v3655
    %4114 = vmatpush1.bf16.msra.mxu0 %v3654
    %4115 = vmatprep.subr.bf16.mxu0 %v3659
    %4116 = vmatpush1.bf16.msra.mxu0 %v3658
    %4117 = vmatprep.subr.bf16.mxu0 %v3663
    %4118 = vmatpush1.bf16.msra.mxu0 %v3662
    %4119 = vmatprep.subr.bf16.mxu0 %v3667
    %4120 = vmatpush1.bf16.msra.mxu0 %v3666
    %4121 = vmatprep.subr.bf16.mxu0 %v3671
    %4122 = vmatpush1.bf16.msra.mxu0 %v3670
    %4123 = vmatprep.subr.bf16.mxu0 %v3675
    %4124 = vmatpush1.bf16.msra.mxu0 %v3674
    %4125 = vmatprep.subr.bf16.mxu0 %v3679
    %4126 = vmatpush1.bf16.msra.mxu0 %v3678
    %4127 = vmatprep.subr.bf16.mxu0 %v3683
    %4128 = vmatpush1.bf16.msra.mxu0 %v3682
    %4129 = vmatprep.subr.bf16.mxu0 %v3687
    %4130 = vmatpush1.bf16.msra.mxu0 %v3686
    %4131 = vmatprep.subr.bf16.mxu0 %v3691
    %4132 = vmatpush1.bf16.msra.mxu0 %v3690
    %4133 = vmatprep.subr.bf16.mxu0 %v3695
    %4134 = vmatpush1.bf16.msra.mxu0 %v3694
    %4135 = vmatprep.subr.bf16.mxu0 %v3699
    %4136 = vmatpush1.bf16.msra.mxu0 %v3698
    %4137 = vmatprep.subr.bf16.mxu0 %v3703
    %4138 = vmatpush1.bf16.msra.mxu0 %v3702
    %4139 = vmatprep.subr.bf16.mxu0 %v3707
    %4140 = vmatpush1.bf16.msra.mxu0 %v3706
    %4141 = vmatprep.subr.bf16.mxu0 %v3711
    %4142 = vmatpush1.bf16.msra.mxu0 %v3710
    %4143 = vmatprep.subr.bf16.mxu0 %v3715
    %4144 = vmatpush1.bf16.msra.mxu0 %v3714
    %4145 = vmatprep.mubr.bf16.mxu0 %v2287
    %4146 = vmatmul.mubr.bf16.gmra.mrb[0].mxu0 %v2286
    %v4147 = vpop.f32.mrb[0].mxu0
    %v4148 = vadd.f32 %v4107, %v4147
    %v4149 = vpop.f32.mrb[0].mxu0
    %v4150 = vadd.f32 %v4109, %v4149
    %v4151 = vpop.f32.mrb[0].mxu0
    %v4152 = vpop.f32.mrb[0].mxu0
    %4153 = vdwg.mxu0
    %v4154 = vld [vmem:[%s16] sm:$0xf]
    %v4156 = vlaneseq
    %v4157 = vshrl.u32 %v4156, 7
    %v4158 = vsub.s32 0, %v4157
    %v4159 = vrot.slane %v4154, %v4158
    %v4160 = vlaneseq
    %v4161 = vshrl.u32 %v4160, 7
    %v4162 = vsub.s32 1, %v4161
    %v4163 = vrot.slane %v4154, %v4162
    %v4164 = vlaneseq
    %v4165 = vshrl.u32 %v4164, 7
    %v4166 = vsub.s32 2, %v4165
    %v4167 = vrot.slane %v4154, %v4166
    %v4168 = vlaneseq
    %v4169 = vshrl.u32 %v4168, 7
    %v4170 = vsub.s32 3, %v4169
    %v4171 = vrot.slane %v4154, %v4170
    %v4176 = vadd.f32 %v4025, %v4159
    %v4177 = vadd.f32 %v4027, %v4163
    %v4178 = vadd.f32 %v4148, %v4167
    %v4179 = vadd.f32 %v4150, %v4171
    %v4180 = vpack.c.bf16 %v4176, %v4176
    %v4181 = vpack.c.bf16 %v4177, %v4177
    %v4182 = vpack.c.bf16 %v4178, %v4178
    %v4183 = vpack.c.bf16 %v4179, %v4179
    %v4184 = vld [vmem:[#allocation18] sm:$0xff]
    %v4185 = vld [vmem:[#allocation18 + $0x8] sm:$0xff]
    %v4186 = vld [vmem:[#allocation18 + $0x10] sm:$0xff]
    %v4187 = vld [vmem:[#allocation18 + $0x18] sm:$0xff]
    %v4188 = vld [vmem:[#allocation18 + $0x20] sm:$0xff]
    %v4189 = vld [vmem:[#allocation18 + $0x28] sm:$0xff]
    %v4190 = vld [vmem:[#allocation18 + $0x30] sm:$0xff]
    %v4191 = vld [vmem:[#allocation18 + $0x38] sm:$0xff]
    %v4192 = vld [vmem:[#allocation18 + $0x40] sm:$0xff]
    %v4193 = vld [vmem:[#allocation18 + $0x48] sm:$0xff]
    %v4194 = vld [vmem:[#allocation18 + $0x50] sm:$0xff]
    %v4195 = vld [vmem:[#allocation18 + $0x58] sm:$0xff]
    %v4196 = vld [vmem:[#allocation18 + $0x60] sm:$0xff]
    %v4197 = vld [vmem:[#allocation18 + $0x68] sm:$0xff]
    %v4198 = vld [vmem:[#allocation18 + $0x70] sm:$0xff]
    %v4199 = vld [vmem:[#allocation18 + $0x78] sm:$0xff]
    %v4200 = vld [vmem:[#allocation18 + $0x80] sm:$0xff]
    %v4201 = vld [vmem:[#allocation18 + $0x88] sm:$0xff]
    %v4202 = vld [vmem:[#allocation18 + $0x90] sm:$0xff]
    %v4203 = vld [vmem:[#allocation18 + $0x98] sm:$0xff]
    %v4204 = vld [vmem:[#allocation18 + $0xa0] sm:$0xff]
    %v4205 = vld [vmem:[#allocation18 + $0xa8] sm:$0xff]
    %v4206 = vld [vmem:[#allocation18 + $0xb0] sm:$0xff]
    %v4207 = vld [vmem:[#allocation18 + $0xb8] sm:$0xff]
    %v4208 = vld [vmem:[#allocation18 + $0xc0] sm:$0xff]
    %v4209 = vld [vmem:[#allocation18 + $0xc8] sm:$0xff]
    %v4210 = vld [vmem:[#allocation18 + $0xd0] sm:$0xff]
    %v4211 = vld [vmem:[#allocation18 + $0xd8] sm:$0xff]
    %v4212 = vld [vmem:[#allocation18 + $0xe0] sm:$0xff]
    %v4213 = vld [vmem:[#allocation18 + $0xe8] sm:$0xff]
    %v4214 = vld [vmem:[#allocation18 + $0xf0] sm:$0xff]
    %v4215 = vld [vmem:[#allocation18 + $0xf8] sm:$0xff]
    %v4216 = vld [vmem:[#allocation18 + $0x100] sm:$0xff]
    %v4217 = vld [vmem:[#allocation18 + $0x108] sm:$0xff]
    %v4218 = vld [vmem:[#allocation18 + $0x110] sm:$0xff]
    %v4219 = vld [vmem:[#allocation18 + $0x118] sm:$0xff]
    %v4220 = vld [vmem:[#allocation18 + $0x120] sm:$0xff]
    %v4221 = vld [vmem:[#allocation18 + $0x128] sm:$0xff]
    %v4222 = vld [vmem:[#allocation18 + $0x130] sm:$0xff]
    %v4223 = vld [vmem:[#allocation18 + $0x138] sm:$0xff]
    %v4224 = vld [vmem:[#allocation18 + $0x140] sm:$0xff]
    %v4225 = vld [vmem:[#allocation18 + $0x148] sm:$0xff]
    %v4226 = vld [vmem:[#allocation18 + $0x150] sm:$0xff]
    %v4227 = vld [vmem:[#allocation18 + $0x158] sm:$0xff]
    %v4228 = vld [vmem:[#allocation18 + $0x160] sm:$0xff]
    %v4229 = vld [vmem:[#allocation18 + $0x168] sm:$0xff]
    %v4230 = vld [vmem:[#allocation18 + $0x170] sm:$0xff]
    %v4231 = vld [vmem:[#allocation18 + $0x178] sm:$0xff]
    %v4232 = vld [vmem:[#allocation18 + $0x180] sm:$0xff]
    %v4233 = vld [vmem:[#allocation18 + $0x188] sm:$0xff]
    %v4234 = vld [vmem:[#allocation18 + $0x190] sm:$0xff]
    %v4235 = vld [vmem:[#allocation18 + $0x198] sm:$0xff]
    %v4236 = vld [vmem:[#allocation18 + $0x1a0] sm:$0xff]
    %v4237 = vld [vmem:[#allocation18 + $0x1a8] sm:$0xff]
    %v4238 = vld [vmem:[#allocation18 + $0x1b0] sm:$0xff]
    %v4239 = vld [vmem:[#allocation18 + $0x1b8] sm:$0xff]
    %v4240 = vld [vmem:[#allocation18 + $0x1c0] sm:$0xff]
    %v4241 = vld [vmem:[#allocation18 + $0x1c8] sm:$0xff]
    %v4242 = vld [vmem:[#allocation18 + $0x1d0] sm:$0xff]
    %v4243 = vld [vmem:[#allocation18 + $0x1d8] sm:$0xff]
    %v4244 = vld [vmem:[#allocation18 + $0x1e0] sm:$0xff]
    %v4245 = vld [vmem:[#allocation18 + $0x1e8] sm:$0xff]
    %v4246 = vld [vmem:[#allocation18 + $0x1f0] sm:$0xff]
    %v4247 = vld [vmem:[#allocation18 + $0x1f8] sm:$0xff]
    %v4248 = vld [vmem:[%s18] sm:$0x3]
    %v4250 = vlaneseq
    %v4251 = vshrl.u32 %v4250, 7
    %v4252 = vsub.s32 0, %v4251
    %v4253 = vrot.slane %v4248, %v4252
    %v4254 = vlaneseq
    %v4255 = vshrl.u32 %v4254, 7
    %v4256 = vsub.s32 1, %v4255
    %v4257 = vrot.slane %v4248, %v4256
    %v4324 = vunpack.c.l.b16 %v4184
    %v4325 = vunpack.c.h.b16 %v4184
    %v4326 = vunpack.c.l.b16 %v4185
    %v4327 = vunpack.c.h.b16 %v4185
    %v4328 = vunpack.c.l.b16 %v4186
    %v4329 = vunpack.c.h.b16 %v4186
    %v4330 = vunpack.c.l.b16 %v4187
    %v4331 = vunpack.c.h.b16 %v4187
    %v4332 = vunpack.c.l.b16 %v4188
    %v4333 = vunpack.c.h.b16 %v4188
    %v4334 = vunpack.c.l.b16 %v4189
    %v4335 = vunpack.c.h.b16 %v4189
    %v4336 = vunpack.c.l.b16 %v4190
    %v4337 = vunpack.c.h.b16 %v4190
    %v4338 = vunpack.c.l.b16 %v4191
    %v4339 = vunpack.c.h.b16 %v4191
    %v4340 = vunpack.c.l.b16 %v4192
    %v4341 = vunpack.c.h.b16 %v4192
    %v4342 = vunpack.c.l.b16 %v4193
    %v4343 = vunpack.c.h.b16 %v4193
    %v4344 = vunpack.c.l.b16 %v4194
    %v4345 = vunpack.c.h.b16 %v4194
    %v4346 = vunpack.c.l.b16 %v4195
    %v4347 = vunpack.c.h.b16 %v4195
    %v4348 = vunpack.c.l.b16 %v4196
    %v4349 = vunpack.c.h.b16 %v4196
    %v4350 = vunpack.c.l.b16 %v4197
    %v4351 = vunpack.c.h.b16 %v4197
    %v4352 = vunpack.c.l.b16 %v4198
    %v4353 = vunpack.c.h.b16 %v4198
    %v4354 = vunpack.c.l.b16 %v4199
    %v4355 = vunpack.c.h.b16 %v4199
    %v4356 = vunpack.c.l.b16 %v4200
    %v4357 = vunpack.c.h.b16 %v4200
    %v4358 = vunpack.c.l.b16 %v4201
    %v4359 = vunpack.c.h.b16 %v4201
    %v4360 = vunpack.c.l.b16 %v4202
    %v4361 = vunpack.c.h.b16 %v4202
    %v4362 = vunpack.c.l.b16 %v4203
    %v4363 = vunpack.c.h.b16 %v4203
    %v4364 = vunpack.c.l.b16 %v4204
    %v4365 = vunpack.c.h.b16 %v4204
    %v4366 = vunpack.c.l.b16 %v4205
    %v4367 = vunpack.c.h.b16 %v4205
    %v4368 = vunpack.c.l.b16 %v4206
    %v4369 = vunpack.c.h.b16 %v4206
    %v4370 = vunpack.c.l.b16 %v4207
    %v4371 = vunpack.c.h.b16 %v4207
    %v4372 = vunpack.c.l.b16 %v4208
    %v4373 = vunpack.c.h.b16 %v4208
    %v4374 = vunpack.c.l.b16 %v4209
    %v4375 = vunpack.c.h.b16 %v4209
    %v4376 = vunpack.c.l.b16 %v4210
    %v4377 = vunpack.c.h.b16 %v4210
    %v4378 = vunpack.c.l.b16 %v4211
    %v4379 = vunpack.c.h.b16 %v4211
    %v4380 = vunpack.c.l.b16 %v4212
    %v4381 = vunpack.c.h.b16 %v4212
    %v4382 = vunpack.c.l.b16 %v4213
    %v4383 = vunpack.c.h.b16 %v4213
    %v4384 = vunpack.c.l.b16 %v4214
    %v4385 = vunpack.c.h.b16 %v4214
    %v4386 = vunpack.c.l.b16 %v4215
    %v4387 = vunpack.c.h.b16 %v4215
    %v4388 = vunpack.c.l.b16 %v4216
    %v4389 = vunpack.c.h.b16 %v4216
    %v4390 = vunpack.c.l.b16 %v4217
    %v4391 = vunpack.c.h.b16 %v4217
    %v4392 = vunpack.c.l.b16 %v4218
    %v4393 = vunpack.c.h.b16 %v4218
    %v4394 = vunpack.c.l.b16 %v4219
    %v4395 = vunpack.c.h.b16 %v4219
    %v4396 = vunpack.c.l.b16 %v4220
    %v4397 = vunpack.c.h.b16 %v4220
    %v4398 = vunpack.c.l.b16 %v4221
    %v4399 = vunpack.c.h.b16 %v4221
    %v4400 = vunpack.c.l.b16 %v4222
    %v4401 = vunpack.c.h.b16 %v4222
    %v4402 = vunpack.c.l.b16 %v4223
    %v4403 = vunpack.c.h.b16 %v4223
    %v4404 = vunpack.c.l.b16 %v4224
    %v4405 = vunpack.c.h.b16 %v4224
    %v4406 = vunpack.c.l.b16 %v4225
    %v4407 = vunpack.c.h.b16 %v4225
    %v4408 = vunpack.c.l.b16 %v4226
    %v4409 = vunpack.c.h.b16 %v4226
    %v4410 = vunpack.c.l.b16 %v4227
    %v4411 = vunpack.c.h.b16 %v4227
    %v4412 = vunpack.c.l.b16 %v4228
    %v4413 = vunpack.c.h.b16 %v4228
    %v4414 = vunpack.c.l.b16 %v4229
    %v4415 = vunpack.c.h.b16 %v4229
    %v4416 = vunpack.c.l.b16 %v4230
    %v4417 = vunpack.c.h.b16 %v4230
    %v4418 = vunpack.c.l.b16 %v4231
    %v4419 = vunpack.c.h.b16 %v4231
    %v4420 = vunpack.c.l.b16 %v4232
    %v4421 = vunpack.c.h.b16 %v4232
    %v4422 = vunpack.c.l.b16 %v4233
    %v4423 = vunpack.c.h.b16 %v4233
    %v4424 = vunpack.c.l.b16 %v4234
    %v4425 = vunpack.c.h.b16 %v4234
    %v4426 = vunpack.c.l.b16 %v4235
    %v4427 = vunpack.c.h.b16 %v4235
    %v4428 = vunpack.c.l.b16 %v4236
    %v4429 = vunpack.c.h.b16 %v4236
    %v4430 = vunpack.c.l.b16 %v4237
    %v4431 = vunpack.c.h.b16 %v4237
    %v4432 = vunpack.c.l.b16 %v4238
    %v4433 = vunpack.c.h.b16 %v4238
    %v4434 = vunpack.c.l.b16 %v4239
    %v4435 = vunpack.c.h.b16 %v4239
    %v4436 = vunpack.c.l.b16 %v4240
    %v4437 = vunpack.c.h.b16 %v4240
    %v4438 = vunpack.c.l.b16 %v4241
    %v4439 = vunpack.c.h.b16 %v4241
    %v4440 = vunpack.c.l.b16 %v4242
    %v4441 = vunpack.c.h.b16 %v4242
    %v4442 = vunpack.c.l.b16 %v4243
    %v4443 = vunpack.c.h.b16 %v4243
    %v4444 = vunpack.c.l.b16 %v4244
    %v4445 = vunpack.c.h.b16 %v4244
    %v4446 = vunpack.c.l.b16 %v4245
    %v4447 = vunpack.c.h.b16 %v4245
    %v4448 = vunpack.c.l.b16 %v4246
    %v4449 = vunpack.c.h.b16 %v4246
    %v4450 = vunpack.c.l.b16 %v4247
    %v4451 = vunpack.c.h.b16 %v4247
    %v4452 = vpack.c.b16 %v4326, %v4324
    %v4453 = vpack.c.b16 %v4327, %v4325
    %v4454 = vpack.c.b16 %v4330, %v4328
    %v4455 = vpack.c.b16 %v4331, %v4329
    %v4456 = vpack.c.b16 %v4334, %v4332
    %v4457 = vpack.c.b16 %v4335, %v4333
    %v4458 = vpack.c.b16 %v4338, %v4336
    %v4459 = vpack.c.b16 %v4339, %v4337
    %v4460 = vpack.c.b16 %v4342, %v4340
    %v4461 = vpack.c.b16 %v4343, %v4341
    %v4462 = vpack.c.b16 %v4346, %v4344
    %v4463 = vpack.c.b16 %v4347, %v4345
    %v4464 = vpack.c.b16 %v4350, %v4348
    %v4465 = vpack.c.b16 %v4351, %v4349
    %v4466 = vpack.c.b16 %v4354, %v4352
    %v4467 = vpack.c.b16 %v4355, %v4353
    %v4468 = vpack.c.b16 %v4358, %v4356
    %v4469 = vpack.c.b16 %v4359, %v4357
    %v4470 = vpack.c.b16 %v4362, %v4360
    %v4471 = vpack.c.b16 %v4363, %v4361
    %v4472 = vpack.c.b16 %v4366, %v4364
    %v4473 = vpack.c.b16 %v4367, %v4365
    %v4474 = vpack.c.b16 %v4370, %v4368
    %v4475 = vpack.c.b16 %v4371, %v4369
    %v4476 = vpack.c.b16 %v4374, %v4372
    %v4477 = vpack.c.b16 %v4375, %v4373
    %v4478 = vpack.c.b16 %v4378, %v4376
    %v4479 = vpack.c.b16 %v4379, %v4377
    %v4480 = vpack.c.b16 %v4382, %v4380
    %v4481 = vpack.c.b16 %v4383, %v4381
    %v4482 = vpack.c.b16 %v4386, %v4384
    %v4483 = vpack.c.b16 %v4387, %v4385
    %v4484 = vpack.c.b16 %v4390, %v4388
    %v4485 = vpack.c.b16 %v4391, %v4389
    %v4486 = vpack.c.b16 %v4394, %v4392
    %v4487 = vpack.c.b16 %v4395, %v4393
    %v4488 = vpack.c.b16 %v4398, %v4396
    %v4489 = vpack.c.b16 %v4399, %v4397
    %v4490 = vpack.c.b16 %v4402, %v4400
    %v4491 = vpack.c.b16 %v4403, %v4401
    %v4492 = vpack.c.b16 %v4406, %v4404
    %v4493 = vpack.c.b16 %v4407, %v4405
    %v4494 = vpack.c.b16 %v4410, %v4408
    %v4495 = vpack.c.b16 %v4411, %v4409
    %v4496 = vpack.c.b16 %v4414, %v4412
    %v4497 = vpack.c.b16 %v4415, %v4413
    %v4498 = vpack.c.b16 %v4418, %v4416
    %v4499 = vpack.c.b16 %v4419, %v4417
    %v4500 = vpack.c.b16 %v4422, %v4420
    %v4501 = vpack.c.b16 %v4423, %v4421
    %v4502 = vpack.c.b16 %v4426, %v4424
    %v4503 = vpack.c.b16 %v4427, %v4425
    %v4504 = vpack.c.b16 %v4430, %v4428
    %v4505 = vpack.c.b16 %v4431, %v4429
    %v4506 = vpack.c.b16 %v4434, %v4432
    %v4507 = vpack.c.b16 %v4435, %v4433
    %v4508 = vpack.c.b16 %v4438, %v4436
    %v4509 = vpack.c.b16 %v4439, %v4437
    %v4510 = vpack.c.b16 %v4442, %v4440
    %v4511 = vpack.c.b16 %v4443, %v4441
    %v4512 = vpack.c.b16 %v4446, %v4444
    %v4513 = vpack.c.b16 %v4447, %v4445
    %v4514 = vpack.c.b16 %v4450, %v4448
    %v4515 = vpack.c.b16 %v4451, %v4449
    %4580 = vmatprep.subr.bf16.mxu0 %v4453
    %4581 = vmatpush1.bf16.msra.mxu0 %v4452
    %4582 = vmatprep.subr.bf16.mxu0 %v4455
    %4583 = vmatpush1.bf16.msra.mxu0 %v4454
    %4584 = vmatprep.subr.bf16.mxu0 %v4457
    %4585 = vmatpush1.bf16.msra.mxu0 %v4456
    %4586 = vmatprep.subr.bf16.mxu0 %v4459
    %4587 = vmatpush1.bf16.msra.mxu0 %v4458
    %4588 = vmatprep.subr.bf16.mxu0 %v4461
    %4589 = vmatpush1.bf16.msra.mxu0 %v4460
    %4590 = vmatprep.subr.bf16.mxu0 %v4463
    %4591 = vmatpush1.bf16.msra.mxu0 %v4462
    %4592 = vmatprep.subr.bf16.mxu0 %v4465
    %4593 = vmatpush1.bf16.msra.mxu0 %v4464
    %4594 = vmatprep.subr.bf16.mxu0 %v4467
    %4595 = vmatpush1.bf16.msra.mxu0 %v4466
    %4596 = vmatprep.subr.bf16.mxu0 %v4469
    %4597 = vmatpush1.bf16.msra.mxu0 %v4468
    %4598 = vmatprep.subr.bf16.mxu0 %v4471
    %4599 = vmatpush1.bf16.msra.mxu0 %v4470
    %4600 = vmatprep.subr.bf16.mxu0 %v4473
    %4601 = vmatpush1.bf16.msra.mxu0 %v4472
    %4602 = vmatprep.subr.bf16.mxu0 %v4475
    %4603 = vmatpush1.bf16.msra.mxu0 %v4474
    %4604 = vmatprep.subr.bf16.mxu0 %v4477
    %4605 = vmatpush1.bf16.msra.mxu0 %v4476
    %4606 = vmatprep.subr.bf16.mxu0 %v4479
    %4607 = vmatpush1.bf16.msra.mxu0 %v4478
    %4608 = vmatprep.subr.bf16.mxu0 %v4481
    %4609 = vmatpush1.bf16.msra.mxu0 %v4480
    %4610 = vmatprep.subr.bf16.mxu0 %v4483
    %4611 = vmatpush1.bf16.msra.mxu0 %v4482
    %4612 = vmatprep.mubr.bf16.mxu0 %v4181
    %4613 = vmatmul.mubr.bf16.gmra.mrb[0].mxu0 %v4180
    %v4614 = vpop.f32.mrb[0].mxu0
    %v4615 = vadd.f32 %v4253, %v4614
    %v4616 = vpop.f32.mrb[0].mxu0
    %v4617 = vadd.f32 %v4257, %v4616
    %v4618 = vpop.f32.mrb[0].mxu0
    %v4619 = vpop.f32.mrb[0].mxu0
    %4620 = vdwg.mxu0
    %4621 = vmatprep.subr.bf16.mxu0 %v4485
    %4622 = vmatpush1.bf16.msra.mxu0 %v4484
    %4623 = vmatprep.subr.bf16.mxu0 %v4487
    %4624 = vmatpush1.bf16.msra.mxu0 %v4486
    %4625 = vmatprep.subr.bf16.mxu0 %v4489
    %4626 = vmatpush1.bf16.msra.mxu0 %v4488
    %4627 = vmatprep.subr.bf16.mxu0 %v4491
    %4628 = vmatpush1.bf16.msra.mxu0 %v4490
    %4629 = vmatprep.subr.bf16.mxu0 %v4493
    %4630 = vmatpush1.bf16.msra.mxu0 %v4492
    %4631 = vmatprep.subr.bf16.mxu0 %v4495
    %4632 = vmatpush1.bf16.msra.mxu0 %v4494
    %4633 = vmatprep.subr.bf16.mxu0 %v4497
    %4634 = vmatpush1.bf16.msra.mxu0 %v4496
    %4635 = vmatprep.subr.bf16.mxu0 %v4499
    %4636 = vmatpush1.bf16.msra.mxu0 %v4498
    %4637 = vmatprep.subr.bf16.mxu0 %v4501
    %4638 = vmatpush1.bf16.msra.mxu0 %v4500
    %4639 = vmatprep.subr.bf16.mxu0 %v4503
    %4640 = vmatpush1.bf16.msra.mxu0 %v4502
    %4641 = vmatprep.subr.bf16.mxu0 %v4505
    %4642 = vmatpush1.bf16.msra.mxu0 %v4504
    %4643 = vmatprep.subr.bf16.mxu0 %v4507
    %4644 = vmatpush1.bf16.msra.mxu0 %v4506
    %4645 = vmatprep.subr.bf16.mxu0 %v4509
    %4646 = vmatpush1.bf16.msra.mxu0 %v4508
    %4647 = vmatprep.subr.bf16.mxu0 %v4511
    %4648 = vmatpush1.bf16.msra.mxu0 %v4510
    %4649 = vmatprep.subr.bf16.mxu0 %v4513
    %4650 = vmatpush1.bf16.msra.mxu0 %v4512
    %4651 = vmatprep.subr.bf16.mxu0 %v4515
    %4652 = vmatpush1.bf16.msra.mxu0 %v4514
    %4653 = vmatprep.mubr.bf16.mxu0 %v4183
    %4654 = vmatmul.mubr.bf16.gmra.mrb[0].mxu0 %v4182
    %v4655 = vpop.f32.mrb[0].mxu0
    %v4656 = vadd.f32 %v4615, %v4655
    %v4657 = vpop.f32.mrb[0].mxu0
    %v4658 = vadd.f32 %v4617, %v4657
    %v4659 = vpop.f32.mrb[0].mxu0
    %v4660 = vpop.f32.mrb[0].mxu0
    %4661 = vdwg.mxu0
    %v4662 = vpack.c.bf16 %v4656, %v4656
    %v4663 = vpack.c.bf16 %v4658, %v4658
    %v4664 = vld [vmem:[%s19] sm:$0xf]
    %v4665 = vld [vmem:[%s19 + $0x4] sm:$0xf]
    %v4666 = vld [vmem:[%s19 + $0x8] sm:$0xf]
    %v4667 = vld [vmem:[%s19 + $0xc] sm:$0xf]
    %v4668 = vld [vmem:[%s19 + $0x10] sm:$0xf]
    %v4669 = vld [vmem:[%s19 + $0x14] sm:$0xf]
    %v4670 = vld [vmem:[%s19 + $0x18] sm:$0xf]
    %v4671 = vld [vmem:[%s19 + $0x1c] sm:$0xf]
    %v4672 = vld [vmem:[%s19 + $0x20] sm:$0xf]
    %v4673 = vld [vmem:[%s19 + $0x24] sm:$0xf]
    %v4674 = vld [vmem:[%s19 + $0x28] sm:$0xf]
    %v4675 = vld [vmem:[%s19 + $0x2c] sm:$0xf]
    %v4676 = vld [vmem:[%s19 + $0x30] sm:$0xf]
    %v4677 = vld [vmem:[%s19 + $0x34] sm:$0xf]
    %v4678 = vld [vmem:[%s19 + $0x38] sm:$0xf]
    %v4679 = vld [vmem:[%s19 + $0x3c] sm:$0xf]
    %v4680 = vld [vmem:[%s19 + $0x40] sm:$0xf]
    %v4681 = vld [vmem:[%s19 + $0x44] sm:$0xf]
    %v4682 = vld [vmem:[%s19 + $0x48] sm:$0xf]
    %v4683 = vld [vmem:[%s19 + $0x4c] sm:$0xf]
    %v4684 = vld [vmem:[%s19 + $0x50] sm:$0xf]
    %v4685 = vld [vmem:[%s19 + $0x54] sm:$0xf]
    %v4686 = vld [vmem:[%s19 + $0x58] sm:$0xf]
    %v4687 = vld [vmem:[%s19 + $0x5c] sm:$0xf]
    %v4688 = vld [vmem:[%s19 + $0x60] sm:$0xf]
    %v4689 = vld [vmem:[%s19 + $0x64] sm:$0xf]
    %v4690 = vld [vmem:[%s19 + $0x68] sm:$0xf]
    %v4691 = vld [vmem:[%s19 + $0x6c] sm:$0xf]
    %v4692 = vld [vmem:[%s19 + $0x70] sm:$0xf]
    %v4693 = vld [vmem:[%s19 + $0x74] sm:$0xf]
    %v4694 = vld [vmem:[%s19 + $0x78] sm:$0xf]
    %v4695 = vld [vmem:[%s19 + $0x7c] sm:$0xf]
    %v4696 = vld [vmem:[%s20] sm:$0x1]
    %v4698 = vlaneseq
    %v4699 = vshrl.u32 %v4698, 7
    %v4700 = vsub.s32 0, %v4699
    %v4701 = vrot.slane %v4696, %v4700
    %v4735 = vunpack.c.l.b16 %v4664
    %v4736 = vunpack.c.l.b16 %v4665
    %v4737 = vunpack.c.l.b16 %v4666
    %v4738 = vunpack.c.l.b16 %v4667
    %v4739 = vunpack.c.l.b16 %v4668
    %v4740 = vunpack.c.l.b16 %v4669
    %v4741 = vunpack.c.l.b16 %v4670
    %v4742 = vunpack.c.l.b16 %v4671
    %v4743 = vunpack.c.l.b16 %v4672
    %v4744 = vunpack.c.l.b16 %v4673
    %v4745 = vunpack.c.l.b16 %v4674
    %v4746 = vunpack.c.l.b16 %v4675
    %v4747 = vunpack.c.l.b16 %v4676
    %v4748 = vunpack.c.l.b16 %v4677
    %v4749 = vunpack.c.l.b16 %v4678
    %v4750 = vunpack.c.l.b16 %v4679
    %v4751 = vunpack.c.l.b16 %v4680
    %v4752 = vunpack.c.l.b16 %v4681
    %v4753 = vunpack.c.l.b16 %v4682
    %v4754 = vunpack.c.l.b16 %v4683
    %v4755 = vunpack.c.l.b16 %v4684
    %v4756 = vunpack.c.l.b16 %v4685
    %v4757 = vunpack.c.l.b16 %v4686
    %v4758 = vunpack.c.l.b16 %v4687
    %v4759 = vunpack.c.l.b16 %v4688
    %v4760 = vunpack.c.l.b16 %v4689
    %v4761 = vunpack.c.l.b16 %v4690
    %v4762 = vunpack.c.l.b16 %v4691
    %v4763 = vunpack.c.l.b16 %v4692
    %v4764 = vunpack.c.l.b16 %v4693
    %v4765 = vunpack.c.l.b16 %v4694
    %v4766 = vunpack.c.l.b16 %v4695
    %v4767 = vpack.c.b16 %v4736, %v4735
    %v4768 = vpack.c.b16 %v4738, %v4737
    %v4769 = vpack.c.b16 %v4740, %v4739
    %v4770 = vpack.c.b16 %v4742, %v4741
    %v4771 = vpack.c.b16 %v4744, %v4743
    %v4772 = vpack.c.b16 %v4746, %v4745
    %v4773 = vpack.c.b16 %v4748, %v4747
    %v4774 = vpack.c.b16 %v4750, %v4749
    %v4775 = vpack.c.b16 %v4752, %v4751
    %v4776 = vpack.c.b16 %v4754, %v4753
    %v4777 = vpack.c.b16 %v4756, %v4755
    %v4778 = vpack.c.b16 %v4758, %v4757
    %v4779 = vpack.c.b16 %v4760, %v4759
    %v4780 = vpack.c.b16 %v4762, %v4761
    %v4781 = vpack.c.b16 %v4764, %v4763
    %v4782 = vpack.c.b16 %v4766, %v4765
    %4799 = vmatprep.subr.bf16.mxu0 0
    %4800 = vmatpush1.bf16.msra.mxu0 %v4767
    %4801 = vmatprep.subr.bf16.mxu0 0
    %4802 = vmatpush1.bf16.msra.mxu0 %v4768
    %4803 = vmatprep.subr.bf16.mxu0 0
    %4804 = vmatpush1.bf16.msra.mxu0 %v4769
    %4805 = vmatprep.subr.bf16.mxu0 0
    %4806 = vmatpush1.bf16.msra.mxu0 %v4770
    %4807 = vmatprep.subr.bf16.mxu0 0
    %4808 = vmatpush1.bf16.msra.mxu0 %v4771
    %4809 = vmatprep.subr.bf16.mxu0 0
    %4810 = vmatpush1.bf16.msra.mxu0 %v4772
    %4811 = vmatprep.subr.bf16.mxu0 0
    %4812 = vmatpush1.bf16.msra.mxu0 %v4773
    %4813 = vmatprep.subr.bf16.mxu0 0
    %4814 = vmatpush1.bf16.msra.mxu0 %v4774
    %4815 = vmatprep.subr.bf16.mxu0 0
    %4816 = vmatpush1.bf16.msra.mxu0 %v4775
    %4817 = vmatprep.subr.bf16.mxu0 0
    %4818 = vmatpush1.bf16.msra.mxu0 %v4776
    %4819 = vmatprep.subr.bf16.mxu0 0
    %4820 = vmatpush1.bf16.msra.mxu0 %v4777
    %4821 = vmatprep.subr.bf16.mxu0 0
    %4822 = vmatpush1.bf16.msra.mxu0 %v4778
    %4823 = vmatprep.subr.bf16.mxu0 0
    %4824 = vmatpush1.bf16.msra.mxu0 %v4779
    %4825 = vmatprep.subr.bf16.mxu0 0
    %4826 = vmatpush1.bf16.msra.mxu0 %v4780
    %4827 = vmatprep.subr.bf16.mxu0 0
    %4828 = vmatpush1.bf16.msra.mxu0 %v4781
    %4829 = vmatprep.subr.bf16.mxu0 0
    %4830 = vmatpush1.bf16.msra.mxu0 %v4782
    %4831 = vmatprep.mubr.bf16.mxu0 %v4663
    %4832 = vmatmul.mubr.bf16.gmra.mrb[0].mxu0 %v4662
    %v4833 = vpop.f32.mrb[0].mxu0
    %v4834 = vadd.f32 %v4701, %v4833
    %v4835 = vpop.f32.mrb[0].mxu0
    %v4836 = vpop.f32.mrb[0].mxu0
    %v4837 = vpop.f32.mrb[0].mxu0
    %4838 = vdwg.mxu0
    %vm4839 = vcmask 31744
    %4840 = vst.msk [vmem:[%s21] sm:$0xff] %vm4839, %v4834
    // Predicated region
    $region126: #{tpu_custom_call.1} parent=1 // pred_check
      _
    $region127: #{tpu_custom_call.1} parent=1 // pred_check_branch
      %4842 = sbr.rel (0) target = $region129
    $region128: #{tpu_custom_call.1} parent=1 // pred_region
      _
    $region129: #{tpu_custom_call.1} parent=1 // pred_fallthru
      _
    // Predicated region
    $region130: #{tpu_custom_call.1} parent=1 // pred_check
      _
    $region131: #{tpu_custom_call.1} parent=1 // pred_check_branch
      %4844 = sbr.rel (0) target = $region133
    $region132: #{tpu_custom_call.1} parent=1 // pred_region
      _
    $region133: #{tpu_custom_call.1} parent=1 // pred_fallthru
      _
    %4845 = vsyncpa [#allocation5], 1
    %4846 = vsyncpa [#allocation7], 1
    %4847 = vsyncpa [#allocation10], 1
    %4848 = vsyncpa [#allocation13], 1
    %4849 = vsyncpa [#allocation16], 1
    %4850 = vsyncpa [#allocation19], 1

</llo_original>
